<compile_context>
chip_gen: v7x
topology: tpu7x:2x2x1
jax: 0.10.0
libtpu: 0.0.40
codegen_flags: <defaults>
</compile_context>

<pallas_src>
import functools

import jax
import jax.numpy as jnp
import numpy as np
from jax.experimental import pallas as pl
from jax.experimental.pallas import tpu as pltpu

# Make the pure-JAX reference matmuls full precision so the f32 parity check
# against the MXU kernel is meaningful.
jax.config.update("jax_default_matmul_precision", "highest")

_LANE = 128            # output feature dim padded to a multiple of the lane width
_SUBLANE = 8           # row tiles are multiples of the sublane width
_MAX_BLOCK_ROWS = 2048  # upper bound on the row tile (subject to VMEM budget)
_ROW_BUCKET = 128      # token counts bucketed to this to bound compiled shapes
USE_BF16_MXU = False   # optional bf16 MXU path (f32 accumulation); off for parity


def _round_up(x, m):
    return (x + m - 1) // m * m


@functools.lru_cache(maxsize=None)
def _hw_info():
    """(TensorCores per chip, physical VMEM bytes) with conservative fallbacks."""
    cores, vmem = 1, 64 * 2**20  # v7x-safe defaults if the query is unavailable
    try:
        info = pltpu.get_tpu_info()
        v = getattr(info, "vmem_capacity_bytes", None)
        if v:
            vmem = int(v)
        for name in ("num_cores", "core_count", "num_tensorcores",
                     "tensorcore_count"):
            c = getattr(info, name, None)
            if c:
                cores = int(c)
                break
    except Exception:
        pass
    return cores, vmem


def _dyn_feats_mlp_kernel(x_ref, wf_ref, w1_ref, w2_ref, bias_ref, o_ref):
    """Fused 3-matmul MLP on one row tile. Biases/tanh stay in-kernel (VPU/EUP
    filler under MXU slack). bias_ref rows 0..2 hold bf, b1, b2 (f32)."""
    wdt = wf_ref.dtype
    b = bias_ref[...]                                    # (8, dim_pad) f32
    # features: Linear(in_dim -> dim)
    h = jnp.dot(x_ref[...].astype(wdt), wf_ref[...],
                preferred_element_type=jnp.float32) + b[0:1]
    # torch_layers: Linear(dim -> dim) -> Tanh() -> Linear(dim -> dim)
    h = jnp.dot(h.astype(wdt), w1_ref[...],
                preferred_element_type=jnp.float32) + b[1:2]
    h = jnp.tanh(h)
    out = jnp.dot(h.astype(wdt), w2_ref[...],
                  preferred_element_type=jnp.float32) + b[2:3]
    o_ref[...] = out.astype(o_ref.dtype)


def _resident_spec(shape):
    """Grid-invariant input: constant index_map, single-buffered (the default
    2-deep pipelining would only duplicate it in VMEM)."""
    try:
        return pl.BlockSpec(shape, lambda i: (0, 0), pipeline_mode=pl.Buffered(1))
    except TypeError:  # older Pallas without pipeline_mode kwarg
        return pl.BlockSpec(shape, lambda i: (0, 0))


def _choose_block_rows(n_rows, in_dim, dim_pad, num_cores, vmem_cap,
                       x_item, w_item):
    rows_aligned = _round_up(max(n_rows, _SUBLANE), _SUBLANE)
    # Single-buffered resident weights + packed biases.
    weight_bytes = (in_dim * dim_pad + 2 * dim_pad * dim_pad) * w_item \
        + 8 * dim_pad * 4
    budget = int(0.70 * vmem_cap) - weight_bytes
    # Per-row bytes: double-buffered x and out tiles + live f32 intermediates.
    per_row = 2 * (in_dim * x_item + dim_pad * 4) + 3 * dim_pad * 4
    max_rows = max(_SUBLANE, (budget // per_row) // _SUBLANE * _SUBLANE)
    block = max(_SUBLANE, min(_MAX_BLOCK_ROWS, rows_aligned, max_rows))
    # Generation-aware split: only on multi-TensorCore parts (v7x), target
    # >= 2 grid steps per core so both cores stay pipelined, and never shrink
    # the tile below 256 rows for it. On 1-TC chips the grid is a serial loop,
    # so splitting would only add per-step overhead.
    if num_cores > 1:
        target_steps = 2 * num_cores
        while block > 256 and pl.cdiv(rows_aligned, block) < target_steps:
            block = max(256, _round_up(block // 2, _SUBLANE))
    return block


@jax.jit
def _mlp_rows_padded(x, wf, w1, w2, bias):
    """x: (rows, in_dim) (rows bucketed by the caller); wf: (in_dim, dim_pad);
    w1/w2: (dim_pad, dim_pad); bias: (8, dim_pad). Returns (rows, dim_pad) f32
    lane-padded features (de-padding is fused into the callers' gather/slice)."""
    n_rows, in_dim = x.shape
    dim_pad = wf.shape[1]
    cores, vmem_cap = _hw_info()
    x_item = x.dtype.itemsize
    w_item = wf.dtype.itemsize

    block_rows = _choose_block_rows(n_rows, in_dim, dim_pad, cores, vmem_cap,
                                    x_item, w_item)
    grid = (pl.cdiv(n_rows, block_rows),)

    # VMEM footprint: double-buffered x/out tiles, single-buffered weights,
    # packed biases, headroom for live f32 intermediates.
    need = (2 * block_rows * (in_dim * x_item + dim_pad * 4)
            + (in_dim * dim_pad + 2 * dim_pad * dim_pad) * w_item
            + 8 * dim_pad * 4
            + 3 * block_rows * dim_pad * 4)
    vmem_limit = int(min(max(need * 3 // 2, 32 * 2**20), (vmem_cap * 3) // 4))

    return pl.pallas_call(
        _dyn_feats_mlp_kernel,
        out_shape=jax.ShapeDtypeStruct((n_rows, dim_pad), jnp.float32),
        grid=grid,
        in_specs=[
            # x tile: last dim equals the full array dim -> legal without
            # padding; no wrapper-side padded copy of the input.
            pl.BlockSpec((block_rows, in_dim), lambda i: (i, 0)),
            _resident_spec((in_dim, dim_pad)),    # wf
            _resident_spec((dim_pad, dim_pad)),   # w1
            _resident_spec((dim_pad, dim_pad)),   # w2
            _resident_spec((8, dim_pad)),         # packed biases (bf, b1, b2)
        ],
        out_specs=pl.BlockSpec((block_rows, dim_pad), lambda i: (i, 0)),
        compiler_params=pltpu.CompilerParams(
            dimension_semantics=("parallel",),
            vmem_limit_bytes=vmem_limit,
        ),
    )(x, wf, w1, w2, bias)


def prepare_params(wf, bf, w1, b1, w2, b2, use_bf16=False):
    """Pad/pack parameters ONCE (hoisted out of the per-call path).

    Zero padding preserves the valid columns exactly: padded weight rows/cols
    contribute 0, padded biases are 0, and tanh(0)=0, so padded feature
    columns stay 0 through every layer (they are dropped in the wrappers)."""
    in_dim, dim = wf.shape
    dim_pad = _round_up(dim, _LANE)
    wdt = jnp.bfloat16 if use_bf16 else jnp.float32
    wf_p = jnp.zeros((in_dim, dim_pad), wdt).at[:, :dim].set(wf.astype(wdt))
    w1_p = jnp.zeros((dim_pad, dim_pad), wdt).at[:dim, :dim].set(w1.astype(wdt))
    w2_p = jnp.zeros((dim_pad, dim_pad), wdt).at[:dim, :dim].set(w2.astype(wdt))
    bias = (jnp.zeros((8, dim_pad), jnp.float32)
            .at[0, :dim].set(bf.astype(jnp.float32))
            .at[1, :dim].set(b1.astype(jnp.float32))
            .at[2, :dim].set(b2.astype(jnp.float32)))
    return {"wf": wf_p, "w1": w1_p, "w2": w2_p, "bias": bias,
            "in_dim": int(in_dim), "dim": int(dim), "dim_pad": int(dim_pad)}


def dynamic_features_forward(x_tokens, prepared):
    """`DynamicFeatures.forward` for one env: (N, in_dim) -> (1, N, dim)."""
    n = int(x_tokens.shape[0])
    rows_b = _round_up(max(n, _ROW_BUCKET), _ROW_BUCKET)   # bound compiled shapes
    if rows_b > n:
        x_tokens = jnp.pad(x_tokens, ((0, rows_b - n), (0, 0)))
    feats = _mlp_rows_padded(x_tokens, prepared["wf"], prepared["w1"],
                             prepared["w2"], prepared["bias"])
    return feats[:n, :prepared["dim"]][None]


@functools.partial(jax.jit, static_argnums=(3, 4, 5))
def _gather_to_batched(feats, idx, mask, dim, batch, max_len):
    """One fused pass: gather valid rows, drop lane padding, zero the rest."""
    g = jnp.take(feats, idx, axis=0)[:, :dim]
    g = jnp.where(mask[:, None], g, 0.0)
    return g.reshape(batch, max_len, dim)


def dynamic_features_forward_batch(token_list, prepared):
    """`DynamicFeatures.forward_batch`: -> ((B, max_len, dim) zero-padded, lengths).

    All envs' tokens go through ONE fused kernel call (largest possible row
    tile); the zero-padded scatter is a single jitted gather (no O(B) Python
    loop of full-tensor copies)."""
    dim, in_dim = prepared["dim"], prepared["in_dim"]
    lengths = [int(t.shape[0]) for t in token_list]
    batch, max_len, total = len(token_list), max(lengths), sum(lengths)

    rows_b = _round_up(max(total, _ROW_BUCKET), _ROW_BUCKET)
    parts = list(token_list)
    if rows_b > total:
        # Row bucketing fused into the (already required) concat pass.
        parts.append(jnp.zeros((rows_b - total, in_dim), token_list[0].dtype))
    x_cat = jnp.concatenate(parts, axis=0)

    feats = _mlp_rows_padded(x_cat, prepared["wf"], prepared["w1"],
                             prepared["w2"], prepared["bias"])

    # Host-side flat row-index map + validity mask (lengths are Python ints).
    offs = np.concatenate([[0], np.cumsum(lengths)[:-1]]).astype(np.int32)
    idx = np.zeros((batch, max_len), np.int32)
    mask = np.zeros((batch, max_len), bool)
    for i, (o, l) in enumerate(zip(offs, lengths)):
        idx[i, :l] = o + np.arange(l, dtype=np.int32)
        mask[i, :l] = True

    batched = _gather_to_batched(feats, jnp.asarray(idx.reshape(-1)),
                                 jnp.asarray(mask.reshape(-1)),
                                 dim, batch, max_len)
    return batched, lengths


def _init_linear(key, fan_in, fan_out, dtype=jnp.float32):
    """PyTorch-style Linear init: U(-1/sqrt(fan_in), 1/sqrt(fan_in))."""
    kw, kb = jax.random.split(key)
    bound = 1.0 / np.sqrt(fan_in)
    w = jax.random.uniform(kw, (fan_in, fan_out), dtype, -bound, bound)  # = torch W.T
    b = jax.random.uniform(kb, (fan_out,), dtype, -bound, bound)
    return w, b


if __name__ == "__main__":
    key = jax.random.PRNGKey(0)
    k_x0, k_x1, k_f, k_1, k_2 = jax.random.split(key, 5)

    in_dim, dim = 32, 32
    lengths = [8, 5]  # two "envs" with different sequence lengths

    wf, bf = _init_linear(k_f, in_dim, dim)   # features
    w1, b1 = _init_linear(k_1, dim, dim)      # torch_layers[0]
    w2, b2 = _init_linear(k_2, dim, dim)      # torch_layers[2]
    prepared = prepare_params(wf, bf, w1, b1, w2, b2, use_bf16=USE_BF16_MXU)

    xs = [jax.random.normal(k, (l, in_dim), jnp.float32)
          for k, l in zip((k_x0, k_x1), lengths)]

    # forward(env): (1, N, dim)
    f0 = jax.block_until_ready(dynamic_features_forward(xs[0], prepared))
    assert f0.shape == (1, lengths[0], dim)

    # forward_batch(envs): zero-padded (B, max_len, dim) + lengths
    batched, blens = dynamic_features_forward_batch(xs, prepared)
    batched = jax.block_until_ready(batched)
    assert batched.shape == (len(xs), max(lengths), dim)
    assert blens == lengths

    # Pure-JAX reference of the same forward pass.
    def ref_mlp(x):
        return jnp.tanh((x @ wf + bf) @ w1 + b1) @ w2 + b2

    ref0 = ref_mlp(xs[0])[None]
    assert jnp.allclose(f0, ref0, atol=1e-4, rtol=1e-4)

    ref_b = jnp.zeros((len(xs), max(lengths), dim), jnp.float32)
    for i, x in enumerate(xs):
        ref_b = ref_b.at[i, :x.shape[0], :].set(ref_mlp(x))
    assert jnp.allclose(batched, ref_b, atol=1e-4, rtol=1e-4)
    assert jnp.allclose(batched[1, lengths[1]:], 0.0)  # zero padding preserved

    print("KERNEL_OK")
</pallas_src>

<mosaic_0001>
module attributes {stable_mosaic.version = 11 : i64} {
  func.func @_dyn_feats_mlp_kernel(%arg0: i32, %arg1: memref<128x32xf32, #tpu.memory_space<vmem>>, %arg2: memref<32x128xf32, #tpu.memory_space<vmem>>, %arg3: memref<128x128xf32, #tpu.memory_space<vmem>>, %arg4: memref<128x128xf32, #tpu.memory_space<vmem>>, %arg5: memref<8x128xf32, #tpu.memory_space<vmem>>, %arg6: memref<128x128xf32, #tpu.memory_space<vmem>>) attributes {dimension_semantics = [#tpu.dimension_semantics<parallel>], iteration_bounds = array<i64: 1>, scalar_prefetch = 0 : i64, scratch_operands = 0 : i64, tpu.core_type = #tpu.core_type<tc>, window_params = [{transform_indices = @transform_0, window_bounds = array<i64: 128, 32>}, {pipeline_mode = #tpu.pipeline_mode<synchronous>, transform_indices = @transform_1, window_bounds = array<i64: 32, 128>}, {pipeline_mode = #tpu.pipeline_mode<synchronous>, transform_indices = @transform_2, window_bounds = array<i64: 128, 128>}, {pipeline_mode = #tpu.pipeline_mode<synchronous>, transform_indices = @transform_3, window_bounds = array<i64: 128, 128>}, {pipeline_mode = #tpu.pipeline_mode<synchronous>, transform_indices = @transform_4, window_bounds = array<i64: 8, 128>}, {transform_indices = @transform_5, window_bounds = array<i64: 128, 128>}]} {
    %c0 = arith.constant 0 : index
    %c0_0 = arith.constant 0 : index
    %0 = vector.load %arg5[%c0, %c0_0] : memref<8x128xf32, #tpu.memory_space<vmem>>, vector<8x128xf32>
    %c0_1 = arith.constant 0 : index
    %c0_2 = arith.constant 0 : index
    %1 = vector.load %arg1[%c0_1, %c0_2] : memref<128x32xf32, #tpu.memory_space<vmem>>, vector<128x32xf32>
    %c0_3 = arith.constant 0 : index
    %c0_4 = arith.constant 0 : index
    %2 = vector.load %arg2[%c0_3, %c0_4] : memref<32x128xf32, #tpu.memory_space<vmem>>, vector<32x128xf32>
    %cst = arith.constant dense<0.000000e+00> : vector<128x128xf32>
    %3 = tpu.matmul %1, %2, %cst {dimension_numbers = #tpu.dot_dimension_numbers<[1], [0], [0], [1], [0, 0, 1, 1], [], []>, precision = #tpu.contract_precision<fp32>} : vector<128x32xf32>, vector<32x128xf32>, vector<128x128xf32> -> vector<128x128xf32>
    %4 = vector.extract_strided_slice %0 {offsets = [0, 0], sizes = [1, 128], strides = [1, 1]} : vector<8x128xf32> to vector<1x128xf32>
    %5 = vector.broadcast %4 : vector<1x128xf32> to vector<128x128xf32>
    %6 = arith.addf %3, %5 : vector<128x128xf32>
    %c0_5 = arith.constant 0 : index
    %c0_6 = arith.constant 0 : index
    %7 = vector.load %arg3[%c0_5, %c0_6] : memref<128x128xf32, #tpu.memory_space<vmem>>, vector<128x128xf32>
    %cst_7 = arith.constant dense<0.000000e+00> : vector<128x128xf32>
    %8 = tpu.matmul %6, %7, %cst_7 {dimension_numbers = #tpu.dot_dimension_numbers<[1], [0], [0], [1], [0, 0, 1, 1], [], []>, precision = #tpu.contract_precision<fp32>} : vector<128x128xf32>, vector<128x128xf32>, vector<128x128xf32> -> vector<128x128xf32>
    %9 = vector.extract_strided_slice %0 {offsets = [1, 0], sizes = [1, 128], strides = [1, 1]} : vector<8x128xf32> to vector<1x128xf32>
    %10 = vector.broadcast %9 : vector<1x128xf32> to vector<128x128xf32>
    %11 = arith.addf %8, %10 : vector<128x128xf32>
    %12 = math.tanh %11 : vector<128x128xf32>
    %c0_8 = arith.constant 0 : index
    %c0_9 = arith.constant 0 : index
    %13 = vector.load %arg4[%c0_8, %c0_9] : memref<128x128xf32, #tpu.memory_space<vmem>>, vector<128x128xf32>
    %cst_10 = arith.constant dense<0.000000e+00> : vector<128x128xf32>
    %14 = tpu.matmul %12, %13, %cst_10 {dimension_numbers = #tpu.dot_dimension_numbers<[1], [0], [0], [1], [0, 0, 1, 1], [], []>, precision = #tpu.contract_precision<fp32>} : vector<128x128xf32>, vector<128x128xf32>, vector<128x128xf32> -> vector<128x128xf32>
    %15 = vector.extract_strided_slice %0 {offsets = [2, 0], sizes = [1, 128], strides = [1, 1]} : vector<8x128xf32> to vector<1x128xf32>
    %16 = vector.broadcast %15 : vector<1x128xf32> to vector<128x128xf32>
    %17 = arith.addf %14, %16 : vector<128x128xf32>
    %c0_11 = arith.constant 0 : index
    %c0_12 = arith.constant 0 : index
    %18 = vector.load %arg6[%c0_11, %c0_12] : memref<128x128xf32, #tpu.memory_space<vmem>>, vector<128x128xf32>
    tpu.vector_store %arg6[%c0_11, %c0_12], %17 {strides = array<i32>} : memref<128x128xf32, #tpu.memory_space<vmem>>, vector<128x128xf32>,
    return
  }
  func.func @transform_0(%arg0: i32) -> (i32, i32) {
    %c0_i32 = arith.constant 0 : i32
    %c0_i32_0 = arith.constant 0 : i32
    return %arg0, %c0_i32 : i32, i32
  }
  func.func @transform_1(%arg0: i32) -> (i32, i32) {
    %c0_i32 = arith.constant 0 : i32
    %c0_i32_0 = arith.constant 0 : i32
    %c0_i32_1 = arith.constant 0 : i32
    return %c0_i32, %c0_i32_0 : i32, i32
  }
  func.func @transform_2(%arg0: i32) -> (i32, i32) {
    %c0_i32 = arith.constant 0 : i32
    %c0_i32_0 = arith.constant 0 : i32
    %c0_i32_1 = arith.constant 0 : i32
    return %c0_i32, %c0_i32_0 : i32, i32
  }
  func.func @transform_3(%arg0: i32) -> (i32, i32) {
    %c0_i32 = arith.constant 0 : i32
    %c0_i32_0 = arith.constant 0 : i32
    %c0_i32_1 = arith.constant 0 : i32
    return %c0_i32, %c0_i32_0 : i32, i32
  }
  func.func @transform_4(%arg0: i32) -> (i32, i32) {
    %c0_i32 = arith.constant 0 : i32
    %c0_i32_0 = arith.constant 0 : i32
    %c0_i32_1 = arith.constant 0 : i32
    return %c0_i32, %c0_i32_0 : i32, i32
  }
  func.func @transform_5(%arg0: i32) -> (i32, i32) {
    %c0_i32 = arith.constant 0 : i32
    %c0_i32_0 = arith.constant 0 : i32
    return %arg0, %c0_i32 : i32, i32
  }
}

</mosaic_0001>

<llo_original>
// kernel: _mlp_rows_padded.1
$region0: #{_mlp_rows_padded.1}
  #allocation0 [shape = 'u32[]', space=smem, size = 0x4, offset = 0x4, fixed_abs, tag = 'smem constant byte address 0x4 - core index']
  #allocation1 [shape = 'u32[144,128]{1,0:T(1,128)}', space=vmem, size = 0x12000, scoped, tag = 'internal scratch']
  %s0 = inlined_call_operand.vmem [shape: f32[128,32], index: 0, kind: input, shape index: {}]
  %s1 = inlined_call_operand.vmem [shape: f32[32,128], index: 1, kind: input, shape index: {}]
  %s2 = inlined_call_operand.vmem [shape: f32[128,128], index: 2, kind: input, shape index: {}]
  %s3 = inlined_call_operand.hbm [shape: f32[128,128], index: 3, kind: input, shape index: {}]
  %s4 = inlined_call_operand.vmem [shape: f32[8,128], index: 4, kind: input, shape index: {}]
  %s5 = inlined_call_operand.hbm [shape: f32[128,128], index: 5, kind: output, shape index: {}]
  %s6 = sld [smem:[#allocation0]]
  $region34: #{_mlp_rows_padded.1} parent=0
    _
  %s8 = ssub.s32 1, %s6
  %s9 = scalar_select 0, %s8, %s6
  $region1: #{_mlp_rows_padded.1} parent=0
    #allocation2 [shape = 'u8[65536]{0}', space=vmem, size = 0x10000, scoped, tag = 'input window, operand 3, single buffered']
    #allocation3 [shape = 's32[1]{0}', space=sflag, size = 0x4, scoped, tag = 'scoped memory for _mlp_rows_padded.1']
    #allocation4 [shape = 's32[1]{0}', space=sflag, size = 0x4, scoped, tag = 'scoped memory for _mlp_rows_padded.1']
    #allocation5 [shape = 'u8[65536]{0}', space=vmem, size = 0x10000, scoped, tag = 'output window, operand 0, single buffered']
    %10 = vsyncpa [#allocation3], 0
    %11 = vsyncpa [#allocation4], 0
    // Predicated region
    $region2: #{_mlp_rows_padded.1} parent=1 // pred_check
      _
    $region3: #{_mlp_rows_padded.1} parent=1 // pred_check_branch
      %13 = sbr.rel (0) target = $region5
    $region4: #{_mlp_rows_padded.1} parent=1 // pred_region
      _
    $region5: #{_mlp_rows_padded.1} parent=1 // pred_fallthru
      _
    // Predicated region
    $region6: #{_mlp_rows_padded.1} parent=1 // pred_check
      _
    $region7: #{_mlp_rows_padded.1} parent=1 // pred_check_branch
      %15 = sbr.rel (0) target = $region9
    $region8: #{_mlp_rows_padded.1} parent=1 // pred_region
      _
    $region9: #{_mlp_rows_padded.1} parent=1 // pred_fallthru
      _
    // Predicated region
    $region10: #{_mlp_rows_padded.1} parent=1 // pred_check
      _
    $region11: #{_mlp_rows_padded.1} parent=1 // pred_check_branch
      %17 = sbr.rel (0) target = $region13
    $region12: #{_mlp_rows_padded.1} parent=1 // pred_region
      _
    $region13: #{_mlp_rows_padded.1} parent=1 // pred_fallthru
      _
    // Predicated region
    $region14: #{_mlp_rows_padded.1} parent=1 // pred_check
      _
    $region15: #{_mlp_rows_padded.1} parent=1 // pred_check_branch
      %19 = sbr.rel (0) target = $region17
    $region16: #{_mlp_rows_padded.1} parent=1 // pred_region
      %s21 = ssub.s32 2048, 2048
      %22 = vsyncadd [#allocation3], %s21
      %s23 = sshll.u32 [#allocation2], 4
      %s24 = int_to_ptr.vmem [resolvable:$true] %s23
      %29 = dma.hbm_to_vmem [thread:$0]  %s3, 2048, %s24, [#allocation3], 128, 128, 8
    $region17: #{_mlp_rows_padded.1} parent=1 // pred_fallthru
      _
    // Predicated region
    $region18: #{_mlp_rows_padded.1} parent=1 // pred_check
      _
    $region19: #{_mlp_rows_padded.1} parent=1 // pred_check_branch
      %31 = sbr.rel (0) target = $region21
    $region20: #{_mlp_rows_padded.1} parent=1 // pred_region
      _
    $region21: #{_mlp_rows_padded.1} parent=1 // pred_fallthru
      _
    // Predicated region
    $region22: #{_mlp_rows_padded.1} parent=1 // pred_check
      _
    $region23: #{_mlp_rows_padded.1} parent=1 // pred_check_branch
      %33 = sbr.rel (0) target = $region25
    $region24: #{_mlp_rows_padded.1} parent=1 // pred_region
      %34 = dma.done [#allocation3], 2048
    $region25: #{_mlp_rows_padded.1} parent=1 // pred_fallthru
      _
    %v35 = vld [vmem:[%s4] sm:$0xff]
    %v36 = vld [vmem:[%s0] sm:$0xff]
    %v37 = vld [vmem:[%s0 + $0x8] sm:$0xff]
    %v38 = vld [vmem:[%s0 + $0x10] sm:$0xff]
    %v39 = vld [vmem:[%s0 + $0x18] sm:$0xff]
    %v40 = vld [vmem:[%s0 + $0x20] sm:$0xff]
    %v41 = vld [vmem:[%s0 + $0x28] sm:$0xff]
    %v42 = vld [vmem:[%s0 + $0x30] sm:$0xff]
    %v43 = vld [vmem:[%s0 + $0x38] sm:$0xff]
    %v44 = vld [vmem:[%s0 + $0x40] sm:$0xff]
    %v45 = vld [vmem:[%s0 + $0x48] sm:$0xff]
    %v46 = vld [vmem:[%s0 + $0x50] sm:$0xff]
    %v47 = vld [vmem:[%s0 + $0x58] sm:$0xff]
    %v48 = vld [vmem:[%s0 + $0x60] sm:$0xff]
    %v49 = vld [vmem:[%s0 + $0x68] sm:$0xff]
    %v50 = vld [vmem:[%s0 + $0x70] sm:$0xff]
    %v51 = vld [vmem:[%s0 + $0x78] sm:$0xff]
    %v52 = vld [vmem:[%s1] sm:$0xff]
    %v53 = vld [vmem:[%s1 + $0x8] sm:$0xff]
    %v54 = vld [vmem:[%s1 + $0x10] sm:$0xff]
    %v55 = vld [vmem:[%s1 + $0x18] sm:$0xff]
    %v56 = vlaneseq
    %v57 = vshrl.u32 %v56, 7
    %v58 = vsub.s32 0, %v57
    %v59 = vrot.slane %v35, %v58
    %vm60 = vcmask 261120
    %v62 = vsel %vm60, %v36, 0
    %v65 = vsel %vm60, %v37, 0
    %v68 = vsel %vm60, %v38, 0
    %v71 = vsel %vm60, %v39, 0
    %v74 = vsel %vm60, %v40, 0
    %v77 = vsel %vm60, %v41, 0
    %v80 = vsel %vm60, %v42, 0
    %v83 = vsel %vm60, %v43, 0
    %v86 = vsel %vm60, %v44, 0
    %v89 = vsel %vm60, %v45, 0
    %v92 = vsel %vm60, %v46, 0
    %v95 = vsel %vm60, %v47, 0
    %v98 = vsel %vm60, %v48, 0
    %v101 = vsel %vm60, %v49, 0
    %v104 = vsel %vm60, %v50, 0
    %v107 = vsel %vm60, %v51, 0
    %109 = vmatprep.subr.mxu0 0.0
    %v110 = vand.u32 %v52, 4294901760
    %111 = vmatpush1.msra.mxu0 %v110
    %112 = vmatprep.subr.mxu0 0.0
    %v113 = vand.u32 %v53, 4294901760
    %114 = vmatpush1.msra.mxu0 %v113
    %115 = vmatprep.subr.mxu0 0.0
    %v116 = vand.u32 %v54, 4294901760
    %117 = vmatpush1.msra.mxu0 %v116
    %118 = vmatprep.subr.mxu0 0.0
    %v119 = vand.u32 %v55, 4294901760
    %120 = vmatpush1.msra.mxu0 %v119
    %121 = vmatprep.subr.mxu0 0.0
    %122 = vmatpush1.msra.mxu0 0.0
    %123 = vmatprep.subr.mxu0 0.0
    %124 = vmatpush1.msra.mxu0 0.0
    %125 = vmatprep.subr.mxu0 0.0
    %126 = vmatpush1.msra.mxu0 0.0
    %127 = vmatprep.subr.mxu0 0.0
    %128 = vmatpush1.msra.mxu0 0.0
    %129 = vmatprep.subr.mxu0 0.0
    %130 = vmatpush1.msra.mxu0 0.0
    %131 = vmatprep.subr.mxu0 0.0
    %132 = vmatpush1.msra.mxu0 0.0
    %133 = vmatprep.subr.mxu0 0.0
    %134 = vmatpush1.msra.mxu0 0.0
    %135 = vmatprep.subr.mxu0 0.0
    %136 = vmatpush1.msra.mxu0 0.0
    %137 = vmatprep.subr.mxu0 0.0
    %138 = vmatpush1.msra.mxu0 0.0
    %139 = vmatprep.subr.mxu0 0.0
    %140 = vmatpush1.msra.mxu0 0.0
    %141 = vmatprep.subr.mxu0 0.0
    %142 = vmatpush1.msra.mxu0 0.0
    %143 = vmatprep.subr.mxu0 0.0
    %144 = vmatpush1.msra.mxu0 0.0
    %145 = vmatprep.subr.mxu0 0.0
    %146 = vmatpush1.msra.mxu0 0.0
    %147 = vmatprep.subr.mxu0 0.0
    %148 = vmatpush1.msra.mxu0 0.0
    %149 = vmatprep.subr.mxu0 0.0
    %150 = vmatpush1.msra.mxu0 0.0
    %151 = vmatprep.subr.mxu0 0.0
    %152 = vmatpush1.msra.mxu0 0.0
    %153 = vmatprep.subr.mxu0 0.0
    %154 = vmatpush1.msra.mxu0 0.0
    %155 = vmatprep.subr.mxu0 0.0
    %156 = vmatpush1.msra.mxu0 0.0
    %157 = vmatprep.subr.mxu0 0.0
    %158 = vmatpush1.msra.mxu0 0.0
    %159 = vmatprep.subr.mxu0 0.0
    %160 = vmatpush1.msra.mxu0 0.0
    %161 = vmatprep.subr.mxu0 0.0
    %162 = vmatpush1.msra.mxu0 0.0
    %163 = vmatprep.subr.mxu0 0.0
    %164 = vmatpush1.msra.mxu0 0.0
    %165 = vmatprep.subr.mxu0 0.0
    %166 = vmatpush1.msra.mxu0 0.0
    %167 = vmatprep.subr.mxu0 0.0
    %168 = vmatpush1.msra.mxu0 0.0
    %169 = vmatprep.subr.mxu0 0.0
    %170 = vmatpush1.msra.mxu0 0.0
    %171 = vmatprep.subr.mxu0 0.0
    %172 = vmatpush1.msra.mxu0 0.0
    %173 = vmatprep.subr.mxu0 0.0
    %174 = vmatpush1.msra.mxu0 0.0
    %175 = vmatprep.subr.mxu0 0.0
    %176 = vmatpush1.msra.mxu0 0.0
    %177 = vmatprep.mubr.f32.mxu0 0.0
    %v178 = vand.u32 %v62, 4294901760
    %v179 = vsub.f32 %v62, %v178
    %v180 = vand.u32 %v179, 4294901760
    %v181 = vsub.f32 %v179, %v180
    %v182 = vand.u32 %v181, 4294901760
    %183 = vmatmul.mubr.f32.gmra.mrb[0].mxu0 %v182
    %v184 = vpop.f32.mrb[0].mxu0
    %v185 = vadd.f32 %v59, %v184
    %v186 = vpop.f32.mrb[0].mxu0
    %187 = vmatprep.mubr.f32.mxu0 0.0
    %v188 = vand.u32 %v65, 4294901760
    %v189 = vsub.f32 %v65, %v188
    %v190 = vand.u32 %v189, 4294901760
    %v191 = vsub.f32 %v189, %v190
    %v192 = vand.u32 %v191, 4294901760
    %193 = vmatmul.mubr.f32.gmra.mrb[0].mxu0 %v192
    %v194 = vpop.f32.mrb[0].mxu0
    %v195 = vadd.f32 %v59, %v194
    %v196 = vpop.f32.mrb[0].mxu0
    %197 = vmatprep.mubr.f32.mxu0 0.0
    %v198 = vand.u32 %v68, 4294901760
    %v199 = vsub.f32 %v68, %v198
    %v200 = vand.u32 %v199, 4294901760
    %v201 = vsub.f32 %v199, %v200
    %v202 = vand.u32 %v201, 4294901760
    %203 = vmatmul.mubr.f32.gmra.mrb[0].mxu0 %v202
    %v204 = vpop.f32.mrb[0].mxu0
    %v205 = vadd.f32 %v59, %v204
    %v206 = vpop.f32.mrb[0].mxu0
    %207 = vmatprep.mubr.f32.mxu0 0.0
    %v208 = vand.u32 %v71, 4294901760
    %v209 = vsub.f32 %v71, %v208
    %v210 = vand.u32 %v209, 4294901760
    %v211 = vsub.f32 %v209, %v210
    %v212 = vand.u32 %v211, 4294901760
    %213 = vmatmul.mubr.f32.gmra.mrb[0].mxu0 %v212
    %v214 = vpop.f32.mrb[0].mxu0
    %v215 = vadd.f32 %v59, %v214
    %v216 = vpop.f32.mrb[0].mxu0
    %217 = vmatprep.mubr.f32.mxu0 0.0
    %v218 = vand.u32 %v74, 4294901760
    %v219 = vsub.f32 %v74, %v218
    %v220 = vand.u32 %v219, 4294901760
    %v221 = vsub.f32 %v219, %v220
    %v222 = vand.u32 %v221, 4294901760
    %223 = vmatmul.mubr.f32.gmra.mrb[0].mxu0 %v222
    %v224 = vpop.f32.mrb[0].mxu0
    %v225 = vadd.f32 %v59, %v224
    %v226 = vpop.f32.mrb[0].mxu0
    %227 = vmatprep.mubr.f32.mxu0 0.0
    %v228 = vand.u32 %v77, 4294901760
    %v229 = vsub.f32 %v77, %v228
    %v230 = vand.u32 %v229, 4294901760
    %v231 = vsub.f32 %v229, %v230
    %v232 = vand.u32 %v231, 4294901760
    %233 = vmatmul.mubr.f32.gmra.mrb[0].mxu0 %v232
    %v234 = vpop.f32.mrb[0].mxu0
    %v235 = vadd.f32 %v59, %v234
    %v236 = vpop.f32.mrb[0].mxu0
    %237 = vmatprep.mubr.f32.mxu0 0.0
    %v238 = vand.u32 %v80, 4294901760
    %v239 = vsub.f32 %v80, %v238
    %v240 = vand.u32 %v239, 4294901760
    %v241 = vsub.f32 %v239, %v240
    %v242 = vand.u32 %v241, 4294901760
    %243 = vmatmul.mubr.f32.gmra.mrb[0].mxu0 %v242
    %v244 = vpop.f32.mrb[0].mxu0
    %v245 = vadd.f32 %v59, %v244
    %v246 = vpop.f32.mrb[0].mxu0
    %247 = vmatprep.mubr.f32.mxu0 0.0
    %v248 = vand.u32 %v83, 4294901760
    %v249 = vsub.f32 %v83, %v248
    %v250 = vand.u32 %v249, 4294901760
    %v251 = vsub.f32 %v249, %v250
    %v252 = vand.u32 %v251, 4294901760
    %253 = vmatmul.mubr.f32.gmra.mrb[0].mxu0 %v252
    %v254 = vpop.f32.mrb[0].mxu0
    %v255 = vadd.f32 %v59, %v254
    %v256 = vpop.f32.mrb[0].mxu0
    %257 = vmatprep.mubr.f32.mxu0 0.0
    %v258 = vand.u32 %v86, 4294901760
    %v259 = vsub.f32 %v86, %v258
    %v260 = vand.u32 %v259, 4294901760
    %v261 = vsub.f32 %v259, %v260
    %v262 = vand.u32 %v261, 4294901760
    %263 = vmatmul.mubr.f32.gmra.mrb[0].mxu0 %v262
    %v264 = vpop.f32.mrb[0].mxu0
    %v265 = vadd.f32 %v59, %v264
    %v266 = vpop.f32.mrb[0].mxu0
    %267 = vmatprep.mubr.f32.mxu0 0.0
    %v268 = vand.u32 %v89, 4294901760
    %v269 = vsub.f32 %v89, %v268
    %v270 = vand.u32 %v269, 4294901760
    %v271 = vsub.f32 %v269, %v270
    %v272 = vand.u32 %v271, 4294901760
    %273 = vmatmul.mubr.f32.gmra.mrb[0].mxu0 %v272
    %v274 = vpop.f32.mrb[0].mxu0
    %v275 = vadd.f32 %v59, %v274
    %v276 = vpop.f32.mrb[0].mxu0
    %277 = vmatprep.mubr.f32.mxu0 0.0
    %v278 = vand.u32 %v92, 4294901760
    %v279 = vsub.f32 %v92, %v278
    %v280 = vand.u32 %v279, 4294901760
    %v281 = vsub.f32 %v279, %v280
    %v282 = vand.u32 %v281, 4294901760
    %283 = vmatmul.mubr.f32.gmra.mrb[0].mxu0 %v282
    %v284 = vpop.f32.mrb[0].mxu0
    %v285 = vadd.f32 %v59, %v284
    %v286 = vpop.f32.mrb[0].mxu0
    %287 = vmatprep.mubr.f32.mxu0 0.0
    %v288 = vand.u32 %v95, 4294901760
    %v289 = vsub.f32 %v95, %v288
    %v290 = vand.u32 %v289, 4294901760
    %v291 = vsub.f32 %v289, %v290
    %v292 = vand.u32 %v291, 4294901760
    %293 = vmatmul.mubr.f32.gmra.mrb[0].mxu0 %v292
    %v294 = vpop.f32.mrb[0].mxu0
    %v295 = vadd.f32 %v59, %v294
    %v296 = vpop.f32.mrb[0].mxu0
    %297 = vmatprep.mubr.f32.mxu0 0.0
    %v298 = vand.u32 %v98, 4294901760
    %v299 = vsub.f32 %v98, %v298
    %v300 = vand.u32 %v299, 4294901760
    %v301 = vsub.f32 %v299, %v300
    %v302 = vand.u32 %v301, 4294901760
    %303 = vmatmul.mubr.f32.gmra.mrb[0].mxu0 %v302
    %v304 = vpop.f32.mrb[0].mxu0
    %v305 = vadd.f32 %v59, %v304
    %v306 = vpop.f32.mrb[0].mxu0
    %307 = vmatprep.mubr.f32.mxu0 0.0
    %v308 = vand.u32 %v101, 4294901760
    %v309 = vsub.f32 %v101, %v308
    %v310 = vand.u32 %v309, 4294901760
    %v311 = vsub.f32 %v309, %v310
    %v312 = vand.u32 %v311, 4294901760
    %313 = vmatmul.mubr.f32.gmra.mrb[0].mxu0 %v312
    %v314 = vpop.f32.mrb[0].mxu0
    %v315 = vadd.f32 %v59, %v314
    %v316 = vpop.f32.mrb[0].mxu0
    %317 = vmatprep.mubr.f32.mxu0 0.0
    %v318 = vand.u32 %v104, 4294901760
    %v319 = vsub.f32 %v104, %v318
    %v320 = vand.u32 %v319, 4294901760
    %v321 = vsub.f32 %v319, %v320
    %v322 = vand.u32 %v321, 4294901760
    %323 = vmatmul.mubr.f32.gmra.mrb[0].mxu0 %v322
    %v324 = vpop.f32.mrb[0].mxu0
    %v325 = vadd.f32 %v59, %v324
    %v326 = vpop.f32.mrb[0].mxu0
    %327 = vmatprep.mubr.f32.mxu0 0.0
    %v328 = vand.u32 %v107, 4294901760
    %v329 = vsub.f32 %v107, %v328
    %v330 = vand.u32 %v329, 4294901760
    %v331 = vsub.f32 %v329, %v330
    %v332 = vand.u32 %v331, 4294901760
    %333 = vmatmul.mubr.f32.gmra.mrb[0].mxu0 %v332
    %v334 = vpop.f32.mrb[0].mxu0
    %v335 = vadd.f32 %v59, %v334
    %v336 = vpop.f32.mrb[0].mxu0
    %337 = vdwg.mxu0
    %338 = vmatprep.subr.mxu0 0.0
    %v339 = vand.u32 %v52, 4294901760
    %v340 = vsub.f32 %v52, %v339
    %v341 = vand.u32 %v340, 4294901760
    %v342 = vsub.f32 %v340, %v341
    %v343 = vand.u32 %v342, 4294901760
    %344 = vmatpush1.msra.mxu0 %v343
    %345 = vmatprep.subr.mxu0 0.0
    %v346 = vand.u32 %v53, 4294901760
    %v347 = vsub.f32 %v53, %v346
    %v348 = vand.u32 %v347, 4294901760
    %v349 = vsub.f32 %v347, %v348
    %v350 = vand.u32 %v349, 4294901760
    %351 = vmatpush1.msra.mxu0 %v350
    %352 = vmatprep.subr.mxu0 0.0
    %v353 = vand.u32 %v54, 4294901760
    %v354 = vsub.f32 %v54, %v353
    %v355 = vand.u32 %v354, 4294901760
    %v356 = vsub.f32 %v354, %v355
    %v357 = vand.u32 %v356, 4294901760
    %358 = vmatpush1.msra.mxu0 %v357
    %359 = vmatprep.subr.mxu0 0.0
    %v360 = vand.u32 %v55, 4294901760
    %v361 = vsub.f32 %v55, %v360
    %v362 = vand.u32 %v361, 4294901760
    %v363 = vsub.f32 %v361, %v362
    %v364 = vand.u32 %v363, 4294901760
    %365 = vmatpush1.msra.mxu0 %v364
    %366 = vmatprep.subr.mxu0 0.0
    %367 = vmatpush1.msra.mxu0 0.0
    %368 = vmatprep.subr.mxu0 0.0
    %369 = vmatpush1.msra.mxu0 0.0
    %370 = vmatprep.subr.mxu0 0.0
    %371 = vmatpush1.msra.mxu0 0.0
    %372 = vmatprep.subr.mxu0 0.0
    %373 = vmatpush1.msra.mxu0 0.0
    %374 = vmatprep.subr.mxu0 0.0
    %375 = vmatpush1.msra.mxu0 0.0
    %376 = vmatprep.subr.mxu0 0.0
    %377 = vmatpush1.msra.mxu0 0.0
    %378 = vmatprep.subr.mxu0 0.0
    %379 = vmatpush1.msra.mxu0 0.0
    %380 = vmatprep.subr.mxu0 0.0
    %381 = vmatpush1.msra.mxu0 0.0
    %382 = vmatprep.subr.mxu0 0.0
    %383 = vmatpush1.msra.mxu0 0.0
    %384 = vmatprep.subr.mxu0 0.0
    %385 = vmatpush1.msra.mxu0 0.0
    %386 = vmatprep.subr.mxu0 0.0
    %387 = vmatpush1.msra.mxu0 0.0
    %388 = vmatprep.subr.mxu0 0.0
    %389 = vmatpush1.msra.mxu0 0.0
    %390 = vmatprep.subr.mxu0 0.0
    %391 = vmatpush1.msra.mxu0 0.0
    %392 = vmatprep.subr.mxu0 0.0
    %393 = vmatpush1.msra.mxu0 0.0
    %394 = vmatprep.subr.mxu0 0.0
    %395 = vmatpush1.msra.mxu0 0.0
    %396 = vmatprep.subr.mxu0 0.0
    %397 = vmatpush1.msra.mxu0 0.0
    %398 = vmatprep.subr.mxu0 0.0
    %399 = vmatpush1.msra.mxu0 0.0
    %400 = vmatprep.subr.mxu0 0.0
    %401 = vmatpush1.msra.mxu0 0.0
    %402 = vmatprep.subr.mxu0 0.0
    %403 = vmatpush1.msra.mxu0 0.0
    %404 = vmatprep.subr.mxu0 0.0
    %405 = vmatpush1.msra.mxu0 0.0
    %406 = vmatprep.subr.mxu0 0.0
    %407 = vmatpush1.msra.mxu0 0.0
    %408 = vmatprep.subr.mxu0 0.0
    %409 = vmatpush1.msra.mxu0 0.0
    %410 = vmatprep.subr.mxu0 0.0
    %411 = vmatpush1.msra.mxu0 0.0
    %412 = vmatprep.subr.mxu0 0.0
    %413 = vmatpush1.msra.mxu0 0.0
    %414 = vmatprep.subr.mxu0 0.0
    %415 = vmatpush1.msra.mxu0 0.0
    %416 = vmatprep.subr.mxu0 0.0
    %417 = vmatpush1.msra.mxu0 0.0
    %418 = vmatprep.subr.mxu0 0.0
    %419 = vmatpush1.msra.mxu0 0.0
    %420 = vmatprep.subr.mxu0 0.0
    %421 = vmatpush1.msra.mxu0 0.0
    %422 = vmatprep.mubr.f32.mxu0 0.0
    %v423 = vand.u32 %v62, 4294901760
    %424 = vmatmul.mubr.f32.gmra.mrb[0].mxu0 %v423
    %v425 = vpop.f32.mrb[0].mxu0
    %v426 = vadd.f32 %v185, %v425
    %v427 = vpop.f32.mrb[0].mxu0
    %428 = vmatprep.mubr.f32.mxu0 0.0
    %v429 = vand.u32 %v65, 4294901760
    %430 = vmatmul.mubr.f32.gmra.mrb[0].mxu0 %v429
    %v431 = vpop.f32.mrb[0].mxu0
    %v432 = vadd.f32 %v195, %v431
    %v433 = vpop.f32.mrb[0].mxu0
    %434 = vmatprep.mubr.f32.mxu0 0.0
    %v435 = vand.u32 %v68, 4294901760
    %436 = vmatmul.mubr.f32.gmra.mrb[0].mxu0 %v435
    %v437 = vpop.f32.mrb[0].mxu0
    %v438 = vadd.f32 %v205, %v437
    %v439 = vpop.f32.mrb[0].mxu0
    %440 = vmatprep.mubr.f32.mxu0 0.0
    %v441 = vand.u32 %v71, 4294901760
    %442 = vmatmul.mubr.f32.gmra.mrb[0].mxu0 %v441
    %v443 = vpop.f32.mrb[0].mxu0
    %v444 = vadd.f32 %v215, %v443
    %v445 = vpop.f32.mrb[0].mxu0
    %446 = vmatprep.mubr.f32.mxu0 0.0
    %v447 = vand.u32 %v74, 4294901760
    %448 = vmatmul.mubr.f32.gmra.mrb[0].mxu0 %v447
    %v449 = vpop.f32.mrb[0].mxu0
    %v450 = vadd.f32 %v225, %v449
    %v451 = vpop.f32.mrb[0].mxu0
    %452 = vmatprep.mubr.f32.mxu0 0.0
    %v453 = vand.u32 %v77, 4294901760
    %454 = vmatmul.mubr.f32.gmra.mrb[0].mxu0 %v453
    %v455 = vpop.f32.mrb[0].mxu0
    %v456 = vadd.f32 %v235, %v455
    %v457 = vpop.f32.mrb[0].mxu0
    %458 = vmatprep.mubr.f32.mxu0 0.0
    %v459 = vand.u32 %v80, 4294901760
    %460 = vmatmul.mubr.f32.gmra.mrb[0].mxu0 %v459
    %v461 = vpop.f32.mrb[0].mxu0
    %v462 = vadd.f32 %v245, %v461
    %v463 = vpop.f32.mrb[0].mxu0
    %464 = vmatprep.mubr.f32.mxu0 0.0
    %v465 = vand.u32 %v83, 4294901760
    %466 = vmatmul.mubr.f32.gmra.mrb[0].mxu0 %v465
    %v467 = vpop.f32.mrb[0].mxu0
    %v468 = vadd.f32 %v255, %v467
    %v469 = vpop.f32.mrb[0].mxu0
    %470 = vmatprep.mubr.f32.mxu0 0.0
    %v471 = vand.u32 %v86, 4294901760
    %472 = vmatmul.mubr.f32.gmra.mrb[0].mxu0 %v471
    %v473 = vpop.f32.mrb[0].mxu0
    %v474 = vadd.f32 %v265, %v473
    %v475 = vpop.f32.mrb[0].mxu0
    %476 = vmatprep.mubr.f32.mxu0 0.0
    %v477 = vand.u32 %v89, 4294901760
    %478 = vmatmul.mubr.f32.gmra.mrb[0].mxu0 %v477
    %v479 = vpop.f32.mrb[0].mxu0
    %v480 = vadd.f32 %v275, %v479
    %v481 = vpop.f32.mrb[0].mxu0
    %482 = vmatprep.mubr.f32.mxu0 0.0
    %v483 = vand.u32 %v92, 4294901760
    %484 = vmatmul.mubr.f32.gmra.mrb[0].mxu0 %v483
    %v485 = vpop.f32.mrb[0].mxu0
    %v486 = vadd.f32 %v285, %v485
    %v487 = vpop.f32.mrb[0].mxu0
    %488 = vmatprep.mubr.f32.mxu0 0.0
    %v489 = vand.u32 %v95, 4294901760
    %490 = vmatmul.mubr.f32.gmra.mrb[0].mxu0 %v489
    %v491 = vpop.f32.mrb[0].mxu0
    %v492 = vadd.f32 %v295, %v491
    %v493 = vpop.f32.mrb[0].mxu0
    %494 = vmatprep.mubr.f32.mxu0 0.0
    %v495 = vand.u32 %v98, 4294901760
    %496 = vmatmul.mubr.f32.gmra.mrb[0].mxu0 %v495
    %v497 = vpop.f32.mrb[0].mxu0
    %v498 = vadd.f32 %v305, %v497
    %v499 = vpop.f32.mrb[0].mxu0
    %500 = vmatprep.mubr.f32.mxu0 0.0
    %v501 = vand.u32 %v101, 4294901760
    %502 = vmatmul.mubr.f32.gmra.mrb[0].mxu0 %v501
    %v503 = vpop.f32.mrb[0].mxu0
    %v504 = vadd.f32 %v315, %v503
    %v505 = vpop.f32.mrb[0].mxu0
    %506 = vmatprep.mubr.f32.mxu0 0.0
    %v507 = vand.u32 %v104, 4294901760
    %508 = vmatmul.mubr.f32.gmra.mrb[0].mxu0 %v507
    %v509 = vpop.f32.mrb[0].mxu0
    %v510 = vadd.f32 %v325, %v509
    %v511 = vpop.f32.mrb[0].mxu0
    %512 = vmatprep.mubr.f32.mxu0 0.0
    %v513 = vand.u32 %v107, 4294901760
    %514 = vmatmul.mubr.f32.gmra.mrb[0].mxu0 %v513
    %v515 = vpop.f32.mrb[0].mxu0
    %v516 = vadd.f32 %v335, %v515
    %v517 = vpop.f32.mrb[0].mxu0
    %518 = vdwg.mxu0
    %519 = vmatprep.subr.mxu0 0.0
    %v520 = vand.u32 %v52, 4294901760
    %v521 = vsub.f32 %v52, %v520
    %522 = vmatpush1.msra.mxu0 %v521
    %523 = vmatprep.subr.mxu0 0.0
    %v524 = vand.u32 %v53, 4294901760
    %v525 = vsub.f32 %v53, %v524
    %526 = vmatpush1.msra.mxu0 %v525
    %527 = vmatprep.subr.mxu0 0.0
    %v528 = vand.u32 %v54, 4294901760
    %v529 = vsub.f32 %v54, %v528
    %530 = vmatpush1.msra.mxu0 %v529
    %531 = vmatprep.subr.mxu0 0.0
    %v532 = vand.u32 %v55, 4294901760
    %v533 = vsub.f32 %v55, %v532
    %534 = vmatpush1.msra.mxu0 %v533
    %535 = vmatprep.subr.mxu0 0.0
    %536 = vmatpush1.msra.mxu0 0.0
    %537 = vmatprep.subr.mxu0 0.0
    %538 = vmatpush1.msra.mxu0 0.0
    %539 = vmatprep.subr.mxu0 0.0
    %540 = vmatpush1.msra.mxu0 0.0
    %541 = vmatprep.subr.mxu0 0.0
    %542 = vmatpush1.msra.mxu0 0.0
    %543 = vmatprep.subr.mxu0 0.0
    %544 = vmatpush1.msra.mxu0 0.0
    %545 = vmatprep.subr.mxu0 0.0
    %546 = vmatpush1.msra.mxu0 0.0
    %547 = vmatprep.subr.mxu0 0.0
    %548 = vmatpush1.msra.mxu0 0.0
    %549 = vmatprep.subr.mxu0 0.0
    %550 = vmatpush1.msra.mxu0 0.0
    %551 = vmatprep.subr.mxu0 0.0
    %552 = vmatpush1.msra.mxu0 0.0
    %553 = vmatprep.subr.mxu0 0.0
    %554 = vmatpush1.msra.mxu0 0.0
    %555 = vmatprep.subr.mxu0 0.0
    %556 = vmatpush1.msra.mxu0 0.0
    %557 = vmatprep.subr.mxu0 0.0
    %558 = vmatpush1.msra.mxu0 0.0
    %559 = vmatprep.subr.mxu0 0.0
    %560 = vmatpush1.msra.mxu0 0.0
    %561 = vmatprep.subr.mxu0 0.0
    %562 = vmatpush1.msra.mxu0 0.0
    %563 = vmatprep.subr.mxu0 0.0
    %564 = vmatpush1.msra.mxu0 0.0
    %565 = vmatprep.subr.mxu0 0.0
    %566 = vmatpush1.msra.mxu0 0.0
    %567 = vmatprep.subr.mxu0 0.0
    %568 = vmatpush1.msra.mxu0 0.0
    %569 = vmatprep.subr.mxu0 0.0
    %570 = vmatpush1.msra.mxu0 0.0
    %571 = vmatprep.subr.mxu0 0.0
    %572 = vmatpush1.msra.mxu0 0.0
    %573 = vmatprep.subr.mxu0 0.0
    %574 = vmatpush1.msra.mxu0 0.0
    %575 = vmatprep.subr.mxu0 0.0
    %576 = vmatpush1.msra.mxu0 0.0
    %577 = vmatprep.subr.mxu0 0.0
    %578 = vmatpush1.msra.mxu0 0.0
    %579 = vmatprep.subr.mxu0 0.0
    %580 = vmatpush1.msra.mxu0 0.0
    %581 = vmatprep.subr.mxu0 0.0
    %582 = vmatpush1.msra.mxu0 0.0
    %583 = vmatprep.subr.mxu0 0.0
    %584 = vmatpush1.msra.mxu0 0.0
    %585 = vmatprep.subr.mxu0 0.0
    %586 = vmatpush1.msra.mxu0 0.0
    %587 = vmatprep.subr.mxu0 0.0
    %588 = vmatpush1.msra.mxu0 0.0
    %589 = vmatprep.subr.mxu0 0.0
    %590 = vmatpush1.msra.mxu0 0.0
    %591 = vmatprep.mubr.f32.mxu0 0.0
    %v592 = vand.u32 %v62, 4294901760
    %v593 = vsub.f32 %v62, %v592
    %594 = vmatmul.mubr.f32.gmra.mrb[0].mxu0 %v593
    %v595 = vpop.f32.mrb[0].mxu0
    %v596 = vadd.f32 %v426, %v595
    %v597 = vpop.f32.mrb[0].mxu0
    %598 = vmatprep.mubr.f32.mxu0 0.0
    %v599 = vand.u32 %v65, 4294901760
    %v600 = vsub.f32 %v65, %v599
    %601 = vmatmul.mubr.f32.gmra.mrb[0].mxu0 %v600
    %v602 = vpop.f32.mrb[0].mxu0
    %v603 = vadd.f32 %v432, %v602
    %v604 = vpop.f32.mrb[0].mxu0
    %605 = vmatprep.mubr.f32.mxu0 0.0
    %v606 = vand.u32 %v68, 4294901760
    %v607 = vsub.f32 %v68, %v606
    %608 = vmatmul.mubr.f32.gmra.mrb[0].mxu0 %v607
    %v609 = vpop.f32.mrb[0].mxu0
    %v610 = vadd.f32 %v438, %v609
    %v611 = vpop.f32.mrb[0].mxu0
    %612 = vmatprep.mubr.f32.mxu0 0.0
    %v613 = vand.u32 %v71, 4294901760
    %v614 = vsub.f32 %v71, %v613
    %615 = vmatmul.mubr.f32.gmra.mrb[0].mxu0 %v614
    %v616 = vpop.f32.mrb[0].mxu0
    %v617 = vadd.f32 %v444, %v616
    %v618 = vpop.f32.mrb[0].mxu0
    %619 = vmatprep.mubr.f32.mxu0 0.0
    %v620 = vand.u32 %v74, 4294901760
    %v621 = vsub.f32 %v74, %v620
    %622 = vmatmul.mubr.f32.gmra.mrb[0].mxu0 %v621
    %v623 = vpop.f32.mrb[0].mxu0
    %v624 = vadd.f32 %v450, %v623
    %v625 = vpop.f32.mrb[0].mxu0
    %626 = vmatprep.mubr.f32.mxu0 0.0
    %v627 = vand.u32 %v77, 4294901760
    %v628 = vsub.f32 %v77, %v627
    %629 = vmatmul.mubr.f32.gmra.mrb[0].mxu0 %v628
    %v630 = vpop.f32.mrb[0].mxu0
    %v631 = vadd.f32 %v456, %v630
    %v632 = vpop.f32.mrb[0].mxu0
    %633 = vmatprep.mubr.f32.mxu0 0.0
    %v634 = vand.u32 %v80, 4294901760
    %v635 = vsub.f32 %v80, %v634
    %636 = vmatmul.mubr.f32.gmra.mrb[0].mxu0 %v635
    %v637 = vpop.f32.mrb[0].mxu0
    %v638 = vadd.f32 %v462, %v637
    %v639 = vpop.f32.mrb[0].mxu0
    %640 = vmatprep.mubr.f32.mxu0 0.0
    %v641 = vand.u32 %v83, 4294901760
    %v642 = vsub.f32 %v83, %v641
    %643 = vmatmul.mubr.f32.gmra.mrb[0].mxu0 %v642
    %v644 = vpop.f32.mrb[0].mxu0
    %v645 = vadd.f32 %v468, %v644
    %v646 = vpop.f32.mrb[0].mxu0
    %647 = vmatprep.mubr.f32.mxu0 0.0
    %v648 = vand.u32 %v86, 4294901760
    %v649 = vsub.f32 %v86, %v648
    %650 = vmatmul.mubr.f32.gmra.mrb[0].mxu0 %v649
    %v651 = vpop.f32.mrb[0].mxu0
    %v652 = vadd.f32 %v474, %v651
    %v653 = vpop.f32.mrb[0].mxu0
    %654 = vmatprep.mubr.f32.mxu0 0.0
    %v655 = vand.u32 %v89, 4294901760
    %v656 = vsub.f32 %v89, %v655
    %657 = vmatmul.mubr.f32.gmra.mrb[0].mxu0 %v656
    %v658 = vpop.f32.mrb[0].mxu0
    %v659 = vadd.f32 %v480, %v658
    %v660 = vpop.f32.mrb[0].mxu0
    %661 = vmatprep.mubr.f32.mxu0 0.0
    %v662 = vand.u32 %v92, 4294901760
    %v663 = vsub.f32 %v92, %v662
    %664 = vmatmul.mubr.f32.gmra.mrb[0].mxu0 %v663
    %v665 = vpop.f32.mrb[0].mxu0
    %v666 = vadd.f32 %v486, %v665
    %v667 = vpop.f32.mrb[0].mxu0
    %668 = vmatprep.mubr.f32.mxu0 0.0
    %v669 = vand.u32 %v95, 4294901760
    %v670 = vsub.f32 %v95, %v669
    %671 = vmatmul.mubr.f32.gmra.mrb[0].mxu0 %v670
    %v672 = vpop.f32.mrb[0].mxu0
    %v673 = vadd.f32 %v492, %v672
    %v674 = vpop.f32.mrb[0].mxu0
    %675 = vmatprep.mubr.f32.mxu0 0.0
    %v676 = vand.u32 %v98, 4294901760
    %v677 = vsub.f32 %v98, %v676
    %678 = vmatmul.mubr.f32.gmra.mrb[0].mxu0 %v677
    %v679 = vpop.f32.mrb[0].mxu0
    %v680 = vadd.f32 %v498, %v679
    %v681 = vpop.f32.mrb[0].mxu0
    %682 = vmatprep.mubr.f32.mxu0 0.0
    %v683 = vand.u32 %v101, 4294901760
    %v684 = vsub.f32 %v101, %v683
    %685 = vmatmul.mubr.f32.gmra.mrb[0].mxu0 %v684
    %v686 = vpop.f32.mrb[0].mxu0
    %v687 = vadd.f32 %v504, %v686
    %v688 = vpop.f32.mrb[0].mxu0
    %689 = vmatprep.mubr.f32.mxu0 0.0
    %v690 = vand.u32 %v104, 4294901760
    %v691 = vsub.f32 %v104, %v690
    %692 = vmatmul.mubr.f32.gmra.mrb[0].mxu0 %v691
    %v693 = vpop.f32.mrb[0].mxu0
    %v694 = vadd.f32 %v510, %v693
    %v695 = vpop.f32.mrb[0].mxu0
    %696 = vmatprep.mubr.f32.mxu0 0.0
    %v697 = vand.u32 %v107, 4294901760
    %v698 = vsub.f32 %v107, %v697
    %699 = vmatmul.mubr.f32.gmra.mrb[0].mxu0 %v698
    %v700 = vpop.f32.mrb[0].mxu0
    %v701 = vadd.f32 %v516, %v700
    %v702 = vpop.f32.mrb[0].mxu0
    %703 = vdwg.mxu0
    %704 = vmatprep.subr.mxu0 0.0
    %v705 = vand.u32 %v52, 4294901760
    %706 = vmatpush1.msra.mxu0 %v705
    %707 = vmatprep.subr.mxu0 0.0
    %v708 = vand.u32 %v53, 4294901760
    %709 = vmatpush1.msra.mxu0 %v708
    %710 = vmatprep.subr.mxu0 0.0
    %v711 = vand.u32 %v54, 4294901760
    %712 = vmatpush1.msra.mxu0 %v711
    %713 = vmatprep.subr.mxu0 0.0
    %v714 = vand.u32 %v55, 4294901760
    %715 = vmatpush1.msra.mxu0 %v714
    %716 = vmatprep.subr.mxu0 0.0
    %717 = vmatpush1.msra.mxu0 0.0
    %718 = vmatprep.subr.mxu0 0.0
    %719 = vmatpush1.msra.mxu0 0.0
    %720 = vmatprep.subr.mxu0 0.0
    %721 = vmatpush1.msra.mxu0 0.0
    %722 = vmatprep.subr.mxu0 0.0
    %723 = vmatpush1.msra.mxu0 0.0
    %724 = vmatprep.subr.mxu0 0.0
    %725 = vmatpush1.msra.mxu0 0.0
    %726 = vmatprep.subr.mxu0 0.0
    %727 = vmatpush1.msra.mxu0 0.0
    %728 = vmatprep.subr.mxu0 0.0
    %729 = vmatpush1.msra.mxu0 0.0
    %730 = vmatprep.subr.mxu0 0.0
    %731 = vmatpush1.msra.mxu0 0.0
    %732 = vmatprep.subr.mxu0 0.0
    %733 = vmatpush1.msra.mxu0 0.0
    %734 = vmatprep.subr.mxu0 0.0
    %735 = vmatpush1.msra.mxu0 0.0
    %736 = vmatprep.subr.mxu0 0.0
    %737 = vmatpush1.msra.mxu0 0.0
    %738 = vmatprep.subr.mxu0 0.0
    %739 = vmatpush1.msra.mxu0 0.0
    %740 = vmatprep.subr.mxu0 0.0
    %741 = vmatpush1.msra.mxu0 0.0
    %742 = vmatprep.subr.mxu0 0.0
    %743 = vmatpush1.msra.mxu0 0.0
    %744 = vmatprep.subr.mxu0 0.0
    %745 = vmatpush1.msra.mxu0 0.0
    %746 = vmatprep.subr.mxu0 0.0
    %747 = vmatpush1.msra.mxu0 0.0
    %748 = vmatprep.subr.mxu0 0.0
    %749 = vmatpush1.msra.mxu0 0.0
    %750 = vmatprep.subr.mxu0 0.0
    %751 = vmatpush1.msra.mxu0 0.0
    %752 = vmatprep.subr.mxu0 0.0
    %753 = vmatpush1.msra.mxu0 0.0
    %754 = vmatprep.subr.mxu0 0.0
    %755 = vmatpush1.msra.mxu0 0.0
    %756 = vmatprep.subr.mxu0 0.0
    %757 = vmatpush1.msra.mxu0 0.0
    %758 = vmatprep.subr.mxu0 0.0
    %759 = vmatpush1.msra.mxu0 0.0
    %760 = vmatprep.subr.mxu0 0.0
    %761 = vmatpush1.msra.mxu0 0.0
    %762 = vmatprep.subr.mxu0 0.0
    %763 = vmatpush1.msra.mxu0 0.0
    %764 = vmatprep.subr.mxu0 0.0
    %765 = vmatpush1.msra.mxu0 0.0
    %766 = vmatprep.subr.mxu0 0.0
    %767 = vmatpush1.msra.mxu0 0.0
    %768 = vmatprep.subr.mxu0 0.0
    %769 = vmatpush1.msra.mxu0 0.0
    %770 = vmatprep.subr.mxu0 0.0
    %771 = vmatpush1.msra.mxu0 0.0
    %772 = vmatprep.mubr.f32.mxu0 0.0
    %v773 = vand.u32 %v62, 4294901760
    %v774 = vsub.f32 %v62, %v773
    %v775 = vand.u32 %v774, 4294901760
    %776 = vmatmul.mubr.f32.gmra.mrb[0].mxu0 %v775
    %v777 = vpop.f32.mrb[0].mxu0
    %v778 = vadd.f32 %v596, %v777
    %v779 = vpop.f32.mrb[0].mxu0
    %780 = vmatprep.mubr.f32.mxu0 0.0
    %v781 = vand.u32 %v65, 4294901760
    %v782 = vsub.f32 %v65, %v781
    %v783 = vand.u32 %v782, 4294901760
    %784 = vmatmul.mubr.f32.gmra.mrb[0].mxu0 %v783
    %v785 = vpop.f32.mrb[0].mxu0
    %v786 = vadd.f32 %v603, %v785
    %v787 = vpop.f32.mrb[0].mxu0
    %788 = vmatprep.mubr.f32.mxu0 0.0
    %v789 = vand.u32 %v68, 4294901760
    %v790 = vsub.f32 %v68, %v789
    %v791 = vand.u32 %v790, 4294901760
    %792 = vmatmul.mubr.f32.gmra.mrb[0].mxu0 %v791
    %v793 = vpop.f32.mrb[0].mxu0
    %v794 = vadd.f32 %v610, %v793
    %v795 = vpop.f32.mrb[0].mxu0
    %796 = vmatprep.mubr.f32.mxu0 0.0
    %v797 = vand.u32 %v71, 4294901760
    %v798 = vsub.f32 %v71, %v797
    %v799 = vand.u32 %v798, 4294901760
    %800 = vmatmul.mubr.f32.gmra.mrb[0].mxu0 %v799
    %v801 = vpop.f32.mrb[0].mxu0
    %v802 = vadd.f32 %v617, %v801
    %v803 = vpop.f32.mrb[0].mxu0
    %804 = vmatprep.mubr.f32.mxu0 0.0
    %v805 = vand.u32 %v74, 4294901760
    %v806 = vsub.f32 %v74, %v805
    %v807 = vand.u32 %v806, 4294901760
    %808 = vmatmul.mubr.f32.gmra.mrb[0].mxu0 %v807
    %v809 = vpop.f32.mrb[0].mxu0
    %v810 = vadd.f32 %v624, %v809
    %v811 = vpop.f32.mrb[0].mxu0
    %812 = vmatprep.mubr.f32.mxu0 0.0
    %v813 = vand.u32 %v77, 4294901760
    %v814 = vsub.f32 %v77, %v813
    %v815 = vand.u32 %v814, 4294901760
    %816 = vmatmul.mubr.f32.gmra.mrb[0].mxu0 %v815
    %v817 = vpop.f32.mrb[0].mxu0
    %v818 = vadd.f32 %v631, %v817
    %v819 = vpop.f32.mrb[0].mxu0
    %820 = vmatprep.mubr.f32.mxu0 0.0
    %v821 = vand.u32 %v80, 4294901760
    %v822 = vsub.f32 %v80, %v821
    %v823 = vand.u32 %v822, 4294901760
    %824 = vmatmul.mubr.f32.gmra.mrb[0].mxu0 %v823
    %v825 = vpop.f32.mrb[0].mxu0
    %v826 = vadd.f32 %v638, %v825
    %v827 = vpop.f32.mrb[0].mxu0
    %828 = vmatprep.mubr.f32.mxu0 0.0
    %v829 = vand.u32 %v83, 4294901760
    %v830 = vsub.f32 %v83, %v829
    %v831 = vand.u32 %v830, 4294901760
    %832 = vmatmul.mubr.f32.gmra.mrb[0].mxu0 %v831
    %v833 = vpop.f32.mrb[0].mxu0
    %v834 = vadd.f32 %v645, %v833
    %v835 = vpop.f32.mrb[0].mxu0
    %836 = vmatprep.mubr.f32.mxu0 0.0
    %v837 = vand.u32 %v86, 4294901760
    %v838 = vsub.f32 %v86, %v837
    %v839 = vand.u32 %v838, 4294901760
    %840 = vmatmul.mubr.f32.gmra.mrb[0].mxu0 %v839
    %v841 = vpop.f32.mrb[0].mxu0
    %v842 = vadd.f32 %v652, %v841
    %v843 = vpop.f32.mrb[0].mxu0
    %844 = vmatprep.mubr.f32.mxu0 0.0
    %v845 = vand.u32 %v89, 4294901760
    %v846 = vsub.f32 %v89, %v845
    %v847 = vand.u32 %v846, 4294901760
    %848 = vmatmul.mubr.f32.gmra.mrb[0].mxu0 %v847
    %v849 = vpop.f32.mrb[0].mxu0
    %v850 = vadd.f32 %v659, %v849
    %v851 = vpop.f32.mrb[0].mxu0
    %852 = vmatprep.mubr.f32.mxu0 0.0
    %v853 = vand.u32 %v92, 4294901760
    %v854 = vsub.f32 %v92, %v853
    %v855 = vand.u32 %v854, 4294901760
    %856 = vmatmul.mubr.f32.gmra.mrb[0].mxu0 %v855
    %v857 = vpop.f32.mrb[0].mxu0
    %v858 = vadd.f32 %v666, %v857
    %v859 = vpop.f32.mrb[0].mxu0
    %860 = vmatprep.mubr.f32.mxu0 0.0
    %v861 = vand.u32 %v95, 4294901760
    %v862 = vsub.f32 %v95, %v861
    %v863 = vand.u32 %v862, 4294901760
    %864 = vmatmul.mubr.f32.gmra.mrb[0].mxu0 %v863
    %v865 = vpop.f32.mrb[0].mxu0
    %v866 = vadd.f32 %v673, %v865
    %v867 = vpop.f32.mrb[0].mxu0
    %868 = vmatprep.mubr.f32.mxu0 0.0
    %v869 = vand.u32 %v98, 4294901760
    %v870 = vsub.f32 %v98, %v869
    %v871 = vand.u32 %v870, 4294901760
    %872 = vmatmul.mubr.f32.gmra.mrb[0].mxu0 %v871
    %v873 = vpop.f32.mrb[0].mxu0
    %v874 = vadd.f32 %v680, %v873
    %v875 = vpop.f32.mrb[0].mxu0
    %876 = vmatprep.mubr.f32.mxu0 0.0
    %v877 = vand.u32 %v101, 4294901760
    %v878 = vsub.f32 %v101, %v877
    %v879 = vand.u32 %v878, 4294901760
    %880 = vmatmul.mubr.f32.gmra.mrb[0].mxu0 %v879
    %v881 = vpop.f32.mrb[0].mxu0
    %v882 = vadd.f32 %v687, %v881
    %v883 = vpop.f32.mrb[0].mxu0
    %884 = vmatprep.mubr.f32.mxu0 0.0
    %v885 = vand.u32 %v104, 4294901760
    %v886 = vsub.f32 %v104, %v885
    %v887 = vand.u32 %v886, 4294901760
    %888 = vmatmul.mubr.f32.gmra.mrb[0].mxu0 %v887
    %v889 = vpop.f32.mrb[0].mxu0
    %v890 = vadd.f32 %v694, %v889
    %v891 = vpop.f32.mrb[0].mxu0
    %892 = vmatprep.mubr.f32.mxu0 0.0
    %v893 = vand.u32 %v107, 4294901760
    %v894 = vsub.f32 %v107, %v893
    %v895 = vand.u32 %v894, 4294901760
    %896 = vmatmul.mubr.f32.gmra.mrb[0].mxu0 %v895
    %v897 = vpop.f32.mrb[0].mxu0
    %v898 = vadd.f32 %v701, %v897
    %v899 = vpop.f32.mrb[0].mxu0
    %900 = vdwg.mxu0
    %901 = vmatprep.subr.mxu0 0.0
    %v902 = vand.u32 %v52, 4294901760
    %v903 = vsub.f32 %v52, %v902
    %v904 = vand.u32 %v903, 4294901760
    %905 = vmatpush1.msra.mxu0 %v904
    %906 = vmatprep.subr.mxu0 0.0
    %v907 = vand.u32 %v53, 4294901760
    %v908 = vsub.f32 %v53, %v907
    %v909 = vand.u32 %v908, 4294901760
    %910 = vmatpush1.msra.mxu0 %v909
    %911 = vmatprep.subr.mxu0 0.0
    %v912 = vand.u32 %v54, 4294901760
    %v913 = vsub.f32 %v54, %v912
    %v914 = vand.u32 %v913, 4294901760
    %915 = vmatpush1.msra.mxu0 %v914
    %916 = vmatprep.subr.mxu0 0.0
    %v917 = vand.u32 %v55, 4294901760
    %v918 = vsub.f32 %v55, %v917
    %v919 = vand.u32 %v918, 4294901760
    %920 = vmatpush1.msra.mxu0 %v919
    %921 = vmatprep.subr.mxu0 0.0
    %922 = vmatpush1.msra.mxu0 0.0
    %923 = vmatprep.subr.mxu0 0.0
    %924 = vmatpush1.msra.mxu0 0.0
    %925 = vmatprep.subr.mxu0 0.0
    %926 = vmatpush1.msra.mxu0 0.0
    %927 = vmatprep.subr.mxu0 0.0
    %928 = vmatpush1.msra.mxu0 0.0
    %929 = vmatprep.subr.mxu0 0.0
    %930 = vmatpush1.msra.mxu0 0.0
    %931 = vmatprep.subr.mxu0 0.0
    %932 = vmatpush1.msra.mxu0 0.0
    %933 = vmatprep.subr.mxu0 0.0
    %934 = vmatpush1.msra.mxu0 0.0
    %935 = vmatprep.subr.mxu0 0.0
    %936 = vmatpush1.msra.mxu0 0.0
    %937 = vmatprep.subr.mxu0 0.0
    %938 = vmatpush1.msra.mxu0 0.0
    %939 = vmatprep.subr.mxu0 0.0
    %940 = vmatpush1.msra.mxu0 0.0
    %941 = vmatprep.subr.mxu0 0.0
    %942 = vmatpush1.msra.mxu0 0.0
    %943 = vmatprep.subr.mxu0 0.0
    %944 = vmatpush1.msra.mxu0 0.0
    %945 = vmatprep.subr.mxu0 0.0
    %946 = vmatpush1.msra.mxu0 0.0
    %947 = vmatprep.subr.mxu0 0.0
    %948 = vmatpush1.msra.mxu0 0.0
    %949 = vmatprep.subr.mxu0 0.0
    %950 = vmatpush1.msra.mxu0 0.0
    %951 = vmatprep.subr.mxu0 0.0
    %952 = vmatpush1.msra.mxu0 0.0
    %953 = vmatprep.subr.mxu0 0.0
    %954 = vmatpush1.msra.mxu0 0.0
    %955 = vmatprep.subr.mxu0 0.0
    %956 = vmatpush1.msra.mxu0 0.0
    %957 = vmatprep.subr.mxu0 0.0
    %958 = vmatpush1.msra.mxu0 0.0
    %959 = vmatprep.subr.mxu0 0.0
    %960 = vmatpush1.msra.mxu0 0.0
    %961 = vmatprep.subr.mxu0 0.0
    %962 = vmatpush1.msra.mxu0 0.0
    %963 = vmatprep.subr.mxu0 0.0
    %964 = vmatpush1.msra.mxu0 0.0
    %965 = vmatprep.subr.mxu0 0.0
    %966 = vmatpush1.msra.mxu0 0.0
    %967 = vmatprep.subr.mxu0 0.0
    %968 = vmatpush1.msra.mxu0 0.0
    %969 = vmatprep.subr.mxu0 0.0
    %970 = vmatpush1.msra.mxu0 0.0
    %971 = vmatprep.subr.mxu0 0.0
    %972 = vmatpush1.msra.mxu0 0.0
    %973 = vmatprep.subr.mxu0 0.0
    %974 = vmatpush1.msra.mxu0 0.0
    %975 = vmatprep.subr.mxu0 0.0
    %976 = vmatpush1.msra.mxu0 0.0
    %977 = vmatprep.mubr.f32.mxu0 0.0
    %v978 = vand.u32 %v62, 4294901760
    %979 = vmatmul.mubr.f32.gmra.mrb[0].mxu0 %v978
    %v980 = vpop.f32.mrb[0].mxu0
    %v981 = vadd.f32 %v778, %v980
    %v982 = vpop.f32.mrb[0].mxu0
    %983 = vmatprep.mubr.f32.mxu0 0.0
    %v984 = vand.u32 %v65, 4294901760
    %985 = vmatmul.mubr.f32.gmra.mrb[0].mxu0 %v984
    %v986 = vpop.f32.mrb[0].mxu0
    %v987 = vadd.f32 %v786, %v986
    %v988 = vpop.f32.mrb[0].mxu0
    %989 = vmatprep.mubr.f32.mxu0 0.0
    %v990 = vand.u32 %v68, 4294901760
    %991 = vmatmul.mubr.f32.gmra.mrb[0].mxu0 %v990
    %v992 = vpop.f32.mrb[0].mxu0
    %v993 = vadd.f32 %v794, %v992
    %v994 = vpop.f32.mrb[0].mxu0
    %995 = vmatprep.mubr.f32.mxu0 0.0
    %v996 = vand.u32 %v71, 4294901760
    %997 = vmatmul.mubr.f32.gmra.mrb[0].mxu0 %v996
    %v998 = vpop.f32.mrb[0].mxu0
    %v999 = vadd.f32 %v802, %v998
    %v1000 = vpop.f32.mrb[0].mxu0
    %1001 = vmatprep.mubr.f32.mxu0 0.0
    %v1002 = vand.u32 %v74, 4294901760
    %1003 = vmatmul.mubr.f32.gmra.mrb[0].mxu0 %v1002
    %v1004 = vpop.f32.mrb[0].mxu0
    %v1005 = vadd.f32 %v810, %v1004
    %v1006 = vpop.f32.mrb[0].mxu0
    %1007 = vmatprep.mubr.f32.mxu0 0.0
    %v1008 = vand.u32 %v77, 4294901760
    %1009 = vmatmul.mubr.f32.gmra.mrb[0].mxu0 %v1008
    %v1010 = vpop.f32.mrb[0].mxu0
    %v1011 = vadd.f32 %v818, %v1010
    %v1012 = vpop.f32.mrb[0].mxu0
    %1013 = vmatprep.mubr.f32.mxu0 0.0
    %v1014 = vand.u32 %v80, 4294901760
    %1015 = vmatmul.mubr.f32.gmra.mrb[0].mxu0 %v1014
    %v1016 = vpop.f32.mrb[0].mxu0
    %v1017 = vadd.f32 %v826, %v1016
    %v1018 = vpop.f32.mrb[0].mxu0
    %1019 = vmatprep.mubr.f32.mxu0 0.0
    %v1020 = vand.u32 %v83, 4294901760
    %1021 = vmatmul.mubr.f32.gmra.mrb[0].mxu0 %v1020
    %v1022 = vpop.f32.mrb[0].mxu0
    %v1023 = vadd.f32 %v834, %v1022
    %v1024 = vpop.f32.mrb[0].mxu0
    %1025 = vmatprep.mubr.f32.mxu0 0.0
    %v1026 = vand.u32 %v86, 4294901760
    %1027 = vmatmul.mubr.f32.gmra.mrb[0].mxu0 %v1026
    %v1028 = vpop.f32.mrb[0].mxu0
    %v1029 = vadd.f32 %v842, %v1028
    %v1030 = vpop.f32.mrb[0].mxu0
    %1031 = vmatprep.mubr.f32.mxu0 0.0
    %v1032 = vand.u32 %v89, 4294901760
    %1033 = vmatmul.mubr.f32.gmra.mrb[0].mxu0 %v1032
    %v1034 = vpop.f32.mrb[0].mxu0
    %v1035 = vadd.f32 %v850, %v1034
    %v1036 = vpop.f32.mrb[0].mxu0
    %1037 = vmatprep.mubr.f32.mxu0 0.0
    %v1038 = vand.u32 %v92, 4294901760
    %1039 = vmatmul.mubr.f32.gmra.mrb[0].mxu0 %v1038
    %v1040 = vpop.f32.mrb[0].mxu0
    %v1041 = vadd.f32 %v858, %v1040
    %v1042 = vpop.f32.mrb[0].mxu0
    %1043 = vmatprep.mubr.f32.mxu0 0.0
    %v1044 = vand.u32 %v95, 4294901760
    %1045 = vmatmul.mubr.f32.gmra.mrb[0].mxu0 %v1044
    %v1046 = vpop.f32.mrb[0].mxu0
    %v1047 = vadd.f32 %v866, %v1046
    %v1048 = vpop.f32.mrb[0].mxu0
    %1049 = vmatprep.mubr.f32.mxu0 0.0
    %v1050 = vand.u32 %v98, 4294901760
    %1051 = vmatmul.mubr.f32.gmra.mrb[0].mxu0 %v1050
    %v1052 = vpop.f32.mrb[0].mxu0
    %v1053 = vadd.f32 %v874, %v1052
    %v1054 = vpop.f32.mrb[0].mxu0
    %1055 = vmatprep.mubr.f32.mxu0 0.0
    %v1056 = vand.u32 %v101, 4294901760
    %1057 = vmatmul.mubr.f32.gmra.mrb[0].mxu0 %v1056
    %v1058 = vpop.f32.mrb[0].mxu0
    %v1059 = vadd.f32 %v882, %v1058
    %v1060 = vpop.f32.mrb[0].mxu0
    %1061 = vmatprep.mubr.f32.mxu0 0.0
    %v1062 = vand.u32 %v104, 4294901760
    %1063 = vmatmul.mubr.f32.gmra.mrb[0].mxu0 %v1062
    %v1064 = vpop.f32.mrb[0].mxu0
    %v1065 = vadd.f32 %v890, %v1064
    %v1066 = vpop.f32.mrb[0].mxu0
    %1067 = vmatprep.mubr.f32.mxu0 0.0
    %v1068 = vand.u32 %v107, 4294901760
    %1069 = vmatmul.mubr.f32.gmra.mrb[0].mxu0 %v1068
    %v1070 = vpop.f32.mrb[0].mxu0
    %v1071 = vadd.f32 %v898, %v1070
    %v1072 = vpop.f32.mrb[0].mxu0
    %1073 = vdwg.mxu0
    %1074 = vmatprep.subr.mxu0 0.0
    %v1075 = vand.u32 %v52, 4294901760
    %1076 = vmatpush1.msra.mxu0 %v1075
    %1077 = vmatprep.subr.mxu0 0.0
    %v1078 = vand.u32 %v53, 4294901760
    %1079 = vmatpush1.msra.mxu0 %v1078
    %1080 = vmatprep.subr.mxu0 0.0
    %v1081 = vand.u32 %v54, 4294901760
    %1082 = vmatpush1.msra.mxu0 %v1081
    %1083 = vmatprep.subr.mxu0 0.0
    %v1084 = vand.u32 %v55, 4294901760
    %1085 = vmatpush1.msra.mxu0 %v1084
    %1086 = vmatprep.subr.mxu0 0.0
    %1087 = vmatpush1.msra.mxu0 0.0
    %1088 = vmatprep.subr.mxu0 0.0
    %1089 = vmatpush1.msra.mxu0 0.0
    %1090 = vmatprep.subr.mxu0 0.0
    %1091 = vmatpush1.msra.mxu0 0.0
    %1092 = vmatprep.subr.mxu0 0.0
    %1093 = vmatpush1.msra.mxu0 0.0
    %1094 = vmatprep.subr.mxu0 0.0
    %1095 = vmatpush1.msra.mxu0 0.0
    %1096 = vmatprep.subr.mxu0 0.0
    %1097 = vmatpush1.msra.mxu0 0.0
    %1098 = vmatprep.subr.mxu0 0.0
    %1099 = vmatpush1.msra.mxu0 0.0
    %1100 = vmatprep.subr.mxu0 0.0
    %1101 = vmatpush1.msra.mxu0 0.0
    %1102 = vmatprep.subr.mxu0 0.0
    %1103 = vmatpush1.msra.mxu0 0.0
    %1104 = vmatprep.subr.mxu0 0.0
    %1105 = vmatpush1.msra.mxu0 0.0
    %1106 = vmatprep.subr.mxu0 0.0
    %1107 = vmatpush1.msra.mxu0 0.0
    %1108 = vmatprep.subr.mxu0 0.0
    %1109 = vmatpush1.msra.mxu0 0.0
    %1110 = vmatprep.subr.mxu0 0.0
    %1111 = vmatpush1.msra.mxu0 0.0
    %1112 = vmatprep.subr.mxu0 0.0
    %1113 = vmatpush1.msra.mxu0 0.0
    %1114 = vmatprep.subr.mxu0 0.0
    %1115 = vmatpush1.msra.mxu0 0.0
    %1116 = vmatprep.subr.mxu0 0.0
    %1117 = vmatpush1.msra.mxu0 0.0
    %1118 = vmatprep.subr.mxu0 0.0
    %1119 = vmatpush1.msra.mxu0 0.0
    %1120 = vmatprep.subr.mxu0 0.0
    %1121 = vmatpush1.msra.mxu0 0.0
    %1122 = vmatprep.subr.mxu0 0.0
    %1123 = vmatpush1.msra.mxu0 0.0
    %1124 = vmatprep.subr.mxu0 0.0
    %1125 = vmatpush1.msra.mxu0 0.0
    %1126 = vmatprep.subr.mxu0 0.0
    %1127 = vmatpush1.msra.mxu0 0.0
    %1128 = vmatprep.subr.mxu0 0.0
    %1129 = vmatpush1.msra.mxu0 0.0
    %1130 = vmatprep.subr.mxu0 0.0
    %1131 = vmatpush1.msra.mxu0 0.0
    %1132 = vmatprep.subr.mxu0 0.0
    %1133 = vmatpush1.msra.mxu0 0.0
    %1134 = vmatprep.subr.mxu0 0.0
    %1135 = vmatpush1.msra.mxu0 0.0
    %1136 = vmatprep.subr.mxu0 0.0
    %1137 = vmatpush1.msra.mxu0 0.0
    %1138 = vmatprep.subr.mxu0 0.0
    %1139 = vmatpush1.msra.mxu0 0.0
    %1140 = vmatprep.subr.mxu0 0.0
    %1141 = vmatpush1.msra.mxu0 0.0
    %1142 = vmatprep.mubr.f32.mxu0 0.0
    %v1143 = vand.u32 %v62, 4294901760
    %1144 = vmatmul.mubr.f32.gmra.mrb[0].mxu0 %v1143
    %v1145 = vpop.f32.mrb[0].mxu0
    %v1146 = vadd.f32 %v981, %v1145
    %v1147 = vpop.f32.mrb[0].mxu0
    %1148 = vmatprep.mubr.f32.mxu0 0.0
    %v1149 = vand.u32 %v65, 4294901760
    %1150 = vmatmul.mubr.f32.gmra.mrb[0].mxu0 %v1149
    %v1151 = vpop.f32.mrb[0].mxu0
    %v1152 = vadd.f32 %v987, %v1151
    %v1153 = vpop.f32.mrb[0].mxu0
    %1154 = vmatprep.mubr.f32.mxu0 0.0
    %v1155 = vand.u32 %v68, 4294901760
    %1156 = vmatmul.mubr.f32.gmra.mrb[0].mxu0 %v1155
    %v1157 = vpop.f32.mrb[0].mxu0
    %v1158 = vadd.f32 %v993, %v1157
    %v1159 = vpop.f32.mrb[0].mxu0
    %1160 = vmatprep.mubr.f32.mxu0 0.0
    %v1161 = vand.u32 %v71, 4294901760
    %1162 = vmatmul.mubr.f32.gmra.mrb[0].mxu0 %v1161
    %v1163 = vpop.f32.mrb[0].mxu0
    %v1164 = vadd.f32 %v999, %v1163
    %v1165 = vpop.f32.mrb[0].mxu0
    %1166 = vmatprep.mubr.f32.mxu0 0.0
    %v1167 = vand.u32 %v74, 4294901760
    %1168 = vmatmul.mubr.f32.gmra.mrb[0].mxu0 %v1167
    %v1169 = vpop.f32.mrb[0].mxu0
    %v1170 = vadd.f32 %v1005, %v1169
    %v1171 = vpop.f32.mrb[0].mxu0
    %1172 = vmatprep.mubr.f32.mxu0 0.0
    %v1173 = vand.u32 %v77, 4294901760
    %1174 = vmatmul.mubr.f32.gmra.mrb[0].mxu0 %v1173
    %v1175 = vpop.f32.mrb[0].mxu0
    %v1176 = vadd.f32 %v1011, %v1175
    %v1177 = vpop.f32.mrb[0].mxu0
    %1178 = vmatprep.mubr.f32.mxu0 0.0
    %v1179 = vand.u32 %v80, 4294901760
    %1180 = vmatmul.mubr.f32.gmra.mrb[0].mxu0 %v1179
    %v1181 = vpop.f32.mrb[0].mxu0
    %v1182 = vadd.f32 %v1017, %v1181
    %v1183 = vpop.f32.mrb[0].mxu0
    %1184 = vmatprep.mubr.f32.mxu0 0.0
    %v1185 = vand.u32 %v83, 4294901760
    %1186 = vmatmul.mubr.f32.gmra.mrb[0].mxu0 %v1185
    %v1187 = vpop.f32.mrb[0].mxu0
    %v1188 = vadd.f32 %v1023, %v1187
    %v1189 = vpop.f32.mrb[0].mxu0
    %1190 = vmatprep.mubr.f32.mxu0 0.0
    %v1191 = vand.u32 %v86, 4294901760
    %1192 = vmatmul.mubr.f32.gmra.mrb[0].mxu0 %v1191
    %v1193 = vpop.f32.mrb[0].mxu0
    %v1194 = vadd.f32 %v1029, %v1193
    %v1195 = vpop.f32.mrb[0].mxu0
    %1196 = vmatprep.mubr.f32.mxu0 0.0
    %v1197 = vand.u32 %v89, 4294901760
    %1198 = vmatmul.mubr.f32.gmra.mrb[0].mxu0 %v1197
    %v1199 = vpop.f32.mrb[0].mxu0
    %v1200 = vadd.f32 %v1035, %v1199
    %v1201 = vpop.f32.mrb[0].mxu0
    %1202 = vmatprep.mubr.f32.mxu0 0.0
    %v1203 = vand.u32 %v92, 4294901760
    %1204 = vmatmul.mubr.f32.gmra.mrb[0].mxu0 %v1203
    %v1205 = vpop.f32.mrb[0].mxu0
    %v1206 = vadd.f32 %v1041, %v1205
    %v1207 = vpop.f32.mrb[0].mxu0
    %1208 = vmatprep.mubr.f32.mxu0 0.0
    %v1209 = vand.u32 %v95, 4294901760
    %1210 = vmatmul.mubr.f32.gmra.mrb[0].mxu0 %v1209
    %v1211 = vpop.f32.mrb[0].mxu0
    %v1212 = vadd.f32 %v1047, %v1211
    %v1213 = vpop.f32.mrb[0].mxu0
    %1214 = vmatprep.mubr.f32.mxu0 0.0
    %v1215 = vand.u32 %v98, 4294901760
    %1216 = vmatmul.mubr.f32.gmra.mrb[0].mxu0 %v1215
    %v1217 = vpop.f32.mrb[0].mxu0
    %v1218 = vadd.f32 %v1053, %v1217
    %v1219 = vpop.f32.mrb[0].mxu0
    %1220 = vmatprep.mubr.f32.mxu0 0.0
    %v1221 = vand.u32 %v101, 4294901760
    %1222 = vmatmul.mubr.f32.gmra.mrb[0].mxu0 %v1221
    %v1223 = vpop.f32.mrb[0].mxu0
    %v1224 = vadd.f32 %v1059, %v1223
    %v1225 = vpop.f32.mrb[0].mxu0
    %1226 = vmatprep.mubr.f32.mxu0 0.0
    %v1227 = vand.u32 %v104, 4294901760
    %1228 = vmatmul.mubr.f32.gmra.mrb[0].mxu0 %v1227
    %v1229 = vpop.f32.mrb[0].mxu0
    %v1230 = vadd.f32 %v1065, %v1229
    %v1231 = vpop.f32.mrb[0].mxu0
    %1232 = vmatprep.mubr.f32.mxu0 0.0
    %v1233 = vand.u32 %v107, 4294901760
    %1234 = vmatmul.mubr.f32.gmra.mrb[0].mxu0 %v1233
    %v1235 = vpop.f32.mrb[0].mxu0
    %v1236 = vadd.f32 %v1071, %v1235
    %v1237 = vpop.f32.mrb[0].mxu0
    %1238 = vdwg.mxu0
    %v1239 = vld [vmem:[%s2] sm:$0xff]
    %v1240 = vld [vmem:[%s2 + $0x8] sm:$0xff]
    %v1241 = vld [vmem:[%s2 + $0x10] sm:$0xff]
    %v1242 = vld [vmem:[%s2 + $0x18] sm:$0xff]
    %v1243 = vld [vmem:[%s2 + $0x20] sm:$0xff]
    %v1244 = vld [vmem:[%s2 + $0x28] sm:$0xff]
    %v1245 = vld [vmem:[%s2 + $0x30] sm:$0xff]
    %v1246 = vld [vmem:[%s2 + $0x38] sm:$0xff]
    %v1247 = vld [vmem:[%s2 + $0x40] sm:$0xff]
    %v1248 = vld [vmem:[%s2 + $0x48] sm:$0xff]
    %v1249 = vld [vmem:[%s2 + $0x50] sm:$0xff]
    %v1250 = vld [vmem:[%s2 + $0x58] sm:$0xff]
    %v1251 = vld [vmem:[%s2 + $0x60] sm:$0xff]
    %v1252 = vld [vmem:[%s2 + $0x68] sm:$0xff]
    %v1253 = vld [vmem:[%s2 + $0x70] sm:$0xff]
    %v1254 = vld [vmem:[%s2 + $0x78] sm:$0xff]
    %v1255 = vlaneseq
    %v1256 = vshrl.u32 %v1255, 7
    %v1257 = vsub.s32 1, %v1256
    %v1258 = vrot.slane %v35, %v1257
    %1259 = vmatprep.subr.mxu0 0.0
    %v1260 = vand.u32 %v1239, 4294901760
    %1261 = vmatpush1.msra.mxu0 %v1260
    %1262 = vmatprep.subr.mxu0 0.0
    %v1263 = vand.u32 %v1240, 4294901760
    %1264 = vmatpush1.msra.mxu0 %v1263
    %1265 = vmatprep.subr.mxu0 0.0
    %v1266 = vand.u32 %v1241, 4294901760
    %1267 = vmatpush1.msra.mxu0 %v1266
    %1268 = vmatprep.subr.mxu0 0.0
    %v1269 = vand.u32 %v1242, 4294901760
    %1270 = vmatpush1.msra.mxu0 %v1269
    %1271 = vmatprep.subr.mxu0 0.0
    %v1272 = vand.u32 %v1243, 4294901760
    %1273 = vmatpush1.msra.mxu0 %v1272
    %1274 = vmatprep.subr.mxu0 0.0
    %v1275 = vand.u32 %v1244, 4294901760
    %1276 = vmatpush1.msra.mxu0 %v1275
    %1277 = vmatprep.subr.mxu0 0.0
    %v1278 = vand.u32 %v1245, 4294901760
    %1279 = vmatpush1.msra.mxu0 %v1278
    %1280 = vmatprep.subr.mxu0 0.0
    %v1281 = vand.u32 %v1246, 4294901760
    %1282 = vmatpush1.msra.mxu0 %v1281
    %1283 = vmatprep.subr.mxu0 0.0
    %v1284 = vand.u32 %v1247, 4294901760
    %1285 = vmatpush1.msra.mxu0 %v1284
    %1286 = vmatprep.subr.mxu0 0.0
    %v1287 = vand.u32 %v1248, 4294901760
    %1288 = vmatpush1.msra.mxu0 %v1287
    %1289 = vmatprep.subr.mxu0 0.0
    %v1290 = vand.u32 %v1249, 4294901760
    %1291 = vmatpush1.msra.mxu0 %v1290
    %1292 = vmatprep.subr.mxu0 0.0
    %v1293 = vand.u32 %v1250, 4294901760
    %1294 = vmatpush1.msra.mxu0 %v1293
    %1295 = vmatprep.subr.mxu0 0.0
    %v1296 = vand.u32 %v1251, 4294901760
    %1297 = vmatpush1.msra.mxu0 %v1296
    %1298 = vmatprep.subr.mxu0 0.0
    %v1299 = vand.u32 %v1252, 4294901760
    %1300 = vmatpush1.msra.mxu0 %v1299
    %1301 = vmatprep.subr.mxu0 0.0
    %v1302 = vand.u32 %v1253, 4294901760
    %1303 = vmatpush1.msra.mxu0 %v1302
    %1304 = vmatprep.subr.mxu0 0.0
    %v1305 = vand.u32 %v1254, 4294901760
    %1306 = vmatpush1.msra.mxu0 %v1305
    %1307 = vmatprep.subr.mxu0 0.0
    %1308 = vmatpush1.msra.mxu0 0.0
    %1309 = vmatprep.subr.mxu0 0.0
    %1310 = vmatpush1.msra.mxu0 0.0
    %1311 = vmatprep.subr.mxu0 0.0
    %1312 = vmatpush1.msra.mxu0 0.0
    %1313 = vmatprep.subr.mxu0 0.0
    %1314 = vmatpush1.msra.mxu0 0.0
    %1315 = vmatprep.subr.mxu0 0.0
    %1316 = vmatpush1.msra.mxu0 0.0
    %1317 = vmatprep.subr.mxu0 0.0
    %1318 = vmatpush1.msra.mxu0 0.0
    %1319 = vmatprep.subr.mxu0 0.0
    %1320 = vmatpush1.msra.mxu0 0.0
    %1321 = vmatprep.subr.mxu0 0.0
    %1322 = vmatpush1.msra.mxu0 0.0
    %1323 = vmatprep.subr.mxu0 0.0
    %1324 = vmatpush1.msra.mxu0 0.0
    %1325 = vmatprep.subr.mxu0 0.0
    %1326 = vmatpush1.msra.mxu0 0.0
    %1327 = vmatprep.subr.mxu0 0.0
    %1328 = vmatpush1.msra.mxu0 0.0
    %1329 = vmatprep.subr.mxu0 0.0
    %1330 = vmatpush1.msra.mxu0 0.0
    %1331 = vmatprep.subr.mxu0 0.0
    %1332 = vmatpush1.msra.mxu0 0.0
    %1333 = vmatprep.subr.mxu0 0.0
    %1334 = vmatpush1.msra.mxu0 0.0
    %1335 = vmatprep.subr.mxu0 0.0
    %1336 = vmatpush1.msra.mxu0 0.0
    %1337 = vmatprep.subr.mxu0 0.0
    %1338 = vmatpush1.msra.mxu0 0.0
    %1339 = vmatprep.mubr.f32.mxu0 0.0
    %v1340 = vand.u32 %v1146, 4294901760
    %v1341 = vsub.f32 %v1146, %v1340
    %v1342 = vand.u32 %v1341, 4294901760
    %v1343 = vsub.f32 %v1341, %v1342
    %v1344 = vand.u32 %v1343, 4294901760
    %1345 = vmatmul.mubr.f32.gmra.mrb[0].mxu0 %v1344
    %v1346 = vpop.f32.mrb[0].mxu0
    %v1347 = vadd.f32 %v1258, %v1346
    %v1348 = vpop.f32.mrb[0].mxu0
    %1349 = vmatprep.mubr.f32.mxu0 0.0
    %v1350 = vand.u32 %v1152, 4294901760
    %v1351 = vsub.f32 %v1152, %v1350
    %v1352 = vand.u32 %v1351, 4294901760
    %v1353 = vsub.f32 %v1351, %v1352
    %v1354 = vand.u32 %v1353, 4294901760
    %1355 = vmatmul.mubr.f32.gmra.mrb[0].mxu0 %v1354
    %v1356 = vpop.f32.mrb[0].mxu0
    %v1357 = vadd.f32 %v1258, %v1356
    %v1358 = vpop.f32.mrb[0].mxu0
    %1359 = vmatprep.mubr.f32.mxu0 0.0
    %v1360 = vand.u32 %v1158, 4294901760
    %v1361 = vsub.f32 %v1158, %v1360
    %v1362 = vand.u32 %v1361, 4294901760
    %v1363 = vsub.f32 %v1361, %v1362
    %v1364 = vand.u32 %v1363, 4294901760
    %1365 = vmatmul.mubr.f32.gmra.mrb[0].mxu0 %v1364
    %v1366 = vpop.f32.mrb[0].mxu0
    %v1367 = vadd.f32 %v1258, %v1366
    %v1368 = vpop.f32.mrb[0].mxu0
    %1369 = vmatprep.mubr.f32.mxu0 0.0
    %v1370 = vand.u32 %v1164, 4294901760
    %v1371 = vsub.f32 %v1164, %v1370
    %v1372 = vand.u32 %v1371, 4294901760
    %v1373 = vsub.f32 %v1371, %v1372
    %v1374 = vand.u32 %v1373, 4294901760
    %1375 = vmatmul.mubr.f32.gmra.mrb[0].mxu0 %v1374
    %v1376 = vpop.f32.mrb[0].mxu0
    %v1377 = vadd.f32 %v1258, %v1376
    %v1378 = vpop.f32.mrb[0].mxu0
    %1379 = vmatprep.mubr.f32.mxu0 0.0
    %v1380 = vand.u32 %v1170, 4294901760
    %v1381 = vsub.f32 %v1170, %v1380
    %v1382 = vand.u32 %v1381, 4294901760
    %v1383 = vsub.f32 %v1381, %v1382
    %v1384 = vand.u32 %v1383, 4294901760
    %1385 = vmatmul.mubr.f32.gmra.mrb[0].mxu0 %v1384
    %v1386 = vpop.f32.mrb[0].mxu0
    %v1387 = vadd.f32 %v1258, %v1386
    %v1388 = vpop.f32.mrb[0].mxu0
    %1389 = vmatprep.mubr.f32.mxu0 0.0
    %v1390 = vand.u32 %v1176, 4294901760
    %v1391 = vsub.f32 %v1176, %v1390
    %v1392 = vand.u32 %v1391, 4294901760
    %v1393 = vsub.f32 %v1391, %v1392
    %v1394 = vand.u32 %v1393, 4294901760
    %1395 = vmatmul.mubr.f32.gmra.mrb[0].mxu0 %v1394
    %v1396 = vpop.f32.mrb[0].mxu0
    %v1397 = vadd.f32 %v1258, %v1396
    %v1398 = vpop.f32.mrb[0].mxu0
    %1399 = vmatprep.mubr.f32.mxu0 0.0
    %v1400 = vand.u32 %v1182, 4294901760
    %v1401 = vsub.f32 %v1182, %v1400
    %v1402 = vand.u32 %v1401, 4294901760
    %v1403 = vsub.f32 %v1401, %v1402
    %v1404 = vand.u32 %v1403, 4294901760
    %1405 = vmatmul.mubr.f32.gmra.mrb[0].mxu0 %v1404
    %v1406 = vpop.f32.mrb[0].mxu0
    %v1407 = vadd.f32 %v1258, %v1406
    %v1408 = vpop.f32.mrb[0].mxu0
    %1409 = vmatprep.mubr.f32.mxu0 0.0
    %v1410 = vand.u32 %v1188, 4294901760
    %v1411 = vsub.f32 %v1188, %v1410
    %v1412 = vand.u32 %v1411, 4294901760
    %v1413 = vsub.f32 %v1411, %v1412
    %v1414 = vand.u32 %v1413, 4294901760
    %1415 = vmatmul.mubr.f32.gmra.mrb[0].mxu0 %v1414
    %v1416 = vpop.f32.mrb[0].mxu0
    %v1417 = vadd.f32 %v1258, %v1416
    %v1418 = vpop.f32.mrb[0].mxu0
    %1419 = vmatprep.mubr.f32.mxu0 0.0
    %v1420 = vand.u32 %v1194, 4294901760
    %v1421 = vsub.f32 %v1194, %v1420
    %v1422 = vand.u32 %v1421, 4294901760
    %v1423 = vsub.f32 %v1421, %v1422
    %v1424 = vand.u32 %v1423, 4294901760
    %1425 = vmatmul.mubr.f32.gmra.mrb[0].mxu0 %v1424
    %v1426 = vpop.f32.mrb[0].mxu0
    %v1427 = vadd.f32 %v1258, %v1426
    %v1428 = vpop.f32.mrb[0].mxu0
    %1429 = vmatprep.mubr.f32.mxu0 0.0
    %v1430 = vand.u32 %v1200, 4294901760
    %v1431 = vsub.f32 %v1200, %v1430
    %v1432 = vand.u32 %v1431, 4294901760
    %v1433 = vsub.f32 %v1431, %v1432
    %v1434 = vand.u32 %v1433, 4294901760
    %1435 = vmatmul.mubr.f32.gmra.mrb[0].mxu0 %v1434
    %v1436 = vpop.f32.mrb[0].mxu0
    %v1437 = vadd.f32 %v1258, %v1436
    %v1438 = vpop.f32.mrb[0].mxu0
    %1439 = vmatprep.mubr.f32.mxu0 0.0
    %v1440 = vand.u32 %v1206, 4294901760
    %v1441 = vsub.f32 %v1206, %v1440
    %v1442 = vand.u32 %v1441, 4294901760
    %v1443 = vsub.f32 %v1441, %v1442
    %v1444 = vand.u32 %v1443, 4294901760
    %1445 = vmatmul.mubr.f32.gmra.mrb[0].mxu0 %v1444
    %v1446 = vpop.f32.mrb[0].mxu0
    %v1447 = vadd.f32 %v1258, %v1446
    %v1448 = vpop.f32.mrb[0].mxu0
    %1449 = vmatprep.mubr.f32.mxu0 0.0
    %v1450 = vand.u32 %v1212, 4294901760
    %v1451 = vsub.f32 %v1212, %v1450
    %v1452 = vand.u32 %v1451, 4294901760
    %v1453 = vsub.f32 %v1451, %v1452
    %v1454 = vand.u32 %v1453, 4294901760
    %1455 = vmatmul.mubr.f32.gmra.mrb[0].mxu0 %v1454
    %v1456 = vpop.f32.mrb[0].mxu0
    %v1457 = vadd.f32 %v1258, %v1456
    %v1458 = vpop.f32.mrb[0].mxu0
    %1459 = vmatprep.mubr.f32.mxu0 0.0
    %v1460 = vand.u32 %v1218, 4294901760
    %v1461 = vsub.f32 %v1218, %v1460
    %v1462 = vand.u32 %v1461, 4294901760
    %v1463 = vsub.f32 %v1461, %v1462
    %v1464 = vand.u32 %v1463, 4294901760
    %1465 = vmatmul.mubr.f32.gmra.mrb[0].mxu0 %v1464
    %v1466 = vpop.f32.mrb[0].mxu0
    %v1467 = vadd.f32 %v1258, %v1466
    %v1468 = vpop.f32.mrb[0].mxu0
    %1469 = vmatprep.mubr.f32.mxu0 0.0
    %v1470 = vand.u32 %v1224, 4294901760
    %v1471 = vsub.f32 %v1224, %v1470
    %v1472 = vand.u32 %v1471, 4294901760
    %v1473 = vsub.f32 %v1471, %v1472
    %v1474 = vand.u32 %v1473, 4294901760
    %1475 = vmatmul.mubr.f32.gmra.mrb[0].mxu0 %v1474
    %v1476 = vpop.f32.mrb[0].mxu0
    %v1477 = vadd.f32 %v1258, %v1476
    %v1478 = vpop.f32.mrb[0].mxu0
    %1479 = vmatprep.mubr.f32.mxu0 0.0
    %v1480 = vand.u32 %v1230, 4294901760
    %v1481 = vsub.f32 %v1230, %v1480
    %v1482 = vand.u32 %v1481, 4294901760
    %v1483 = vsub.f32 %v1481, %v1482
    %v1484 = vand.u32 %v1483, 4294901760
    %1485 = vmatmul.mubr.f32.gmra.mrb[0].mxu0 %v1484
    %v1486 = vpop.f32.mrb[0].mxu0
    %v1487 = vadd.f32 %v1258, %v1486
    %v1488 = vpop.f32.mrb[0].mxu0
    %1489 = vmatprep.mubr.f32.mxu0 0.0
    %v1490 = vand.u32 %v1236, 4294901760
    %v1491 = vsub.f32 %v1236, %v1490
    %v1492 = vand.u32 %v1491, 4294901760
    %v1493 = vsub.f32 %v1491, %v1492
    %v1494 = vand.u32 %v1493, 4294901760
    %1495 = vmatmul.mubr.f32.gmra.mrb[0].mxu0 %v1494
    %v1496 = vpop.f32.mrb[0].mxu0
    %v1497 = vadd.f32 %v1258, %v1496
    %v1498 = vpop.f32.mrb[0].mxu0
    %1499 = vdwg.mxu0
    %1500 = vmatprep.subr.mxu0 0.0
    %v1501 = vand.u32 %v1239, 4294901760
    %v1502 = vsub.f32 %v1239, %v1501
    %v1503 = vand.u32 %v1502, 4294901760
    %v1504 = vsub.f32 %v1502, %v1503
    %v1505 = vand.u32 %v1504, 4294901760
    %1506 = vmatpush1.msra.mxu0 %v1505
    %1507 = vmatprep.subr.mxu0 0.0
    %v1508 = vand.u32 %v1240, 4294901760
    %v1509 = vsub.f32 %v1240, %v1508
    %v1510 = vand.u32 %v1509, 4294901760
    %v1511 = vsub.f32 %v1509, %v1510
    %v1512 = vand.u32 %v1511, 4294901760
    %1513 = vmatpush1.msra.mxu0 %v1512
    %1514 = vmatprep.subr.mxu0 0.0
    %v1515 = vand.u32 %v1241, 4294901760
    %v1516 = vsub.f32 %v1241, %v1515
    %v1517 = vand.u32 %v1516, 4294901760
    %v1518 = vsub.f32 %v1516, %v1517
    %v1519 = vand.u32 %v1518, 4294901760
    %1520 = vmatpush1.msra.mxu0 %v1519
    %1521 = vmatprep.subr.mxu0 0.0
    %v1522 = vand.u32 %v1242, 4294901760
    %v1523 = vsub.f32 %v1242, %v1522
    %v1524 = vand.u32 %v1523, 4294901760
    %v1525 = vsub.f32 %v1523, %v1524
    %v1526 = vand.u32 %v1525, 4294901760
    %1527 = vmatpush1.msra.mxu0 %v1526
    %1528 = vmatprep.subr.mxu0 0.0
    %v1529 = vand.u32 %v1243, 4294901760
    %v1530 = vsub.f32 %v1243, %v1529
    %v1531 = vand.u32 %v1530, 4294901760
    %v1532 = vsub.f32 %v1530, %v1531
    %v1533 = vand.u32 %v1532, 4294901760
    %1534 = vmatpush1.msra.mxu0 %v1533
    %1535 = vmatprep.subr.mxu0 0.0
    %v1536 = vand.u32 %v1244, 4294901760
    %v1537 = vsub.f32 %v1244, %v1536
    %v1538 = vand.u32 %v1537, 4294901760
    %v1539 = vsub.f32 %v1537, %v1538
    %v1540 = vand.u32 %v1539, 4294901760
    %1541 = vmatpush1.msra.mxu0 %v1540
    %1542 = vmatprep.subr.mxu0 0.0
    %v1543 = vand.u32 %v1245, 4294901760
    %v1544 = vsub.f32 %v1245, %v1543
    %v1545 = vand.u32 %v1544, 4294901760
    %v1546 = vsub.f32 %v1544, %v1545
    %v1547 = vand.u32 %v1546, 4294901760
    %1548 = vmatpush1.msra.mxu0 %v1547
    %1549 = vmatprep.subr.mxu0 0.0
    %v1550 = vand.u32 %v1246, 4294901760
    %v1551 = vsub.f32 %v1246, %v1550
    %v1552 = vand.u32 %v1551, 4294901760
    %v1553 = vsub.f32 %v1551, %v1552
    %v1554 = vand.u32 %v1553, 4294901760
    %1555 = vmatpush1.msra.mxu0 %v1554
    %1556 = vmatprep.subr.mxu0 0.0
    %v1557 = vand.u32 %v1247, 4294901760
    %v1558 = vsub.f32 %v1247, %v1557
    %v1559 = vand.u32 %v1558, 4294901760
    %v1560 = vsub.f32 %v1558, %v1559
    %v1561 = vand.u32 %v1560, 4294901760
    %1562 = vmatpush1.msra.mxu0 %v1561
    %1563 = vmatprep.subr.mxu0 0.0
    %v1564 = vand.u32 %v1248, 4294901760
    %v1565 = vsub.f32 %v1248, %v1564
    %v1566 = vand.u32 %v1565, 4294901760
    %v1567 = vsub.f32 %v1565, %v1566
    %v1568 = vand.u32 %v1567, 4294901760
    %1569 = vmatpush1.msra.mxu0 %v1568
    %1570 = vmatprep.subr.mxu0 0.0
    %v1571 = vand.u32 %v1249, 4294901760
    %v1572 = vsub.f32 %v1249, %v1571
    %v1573 = vand.u32 %v1572, 4294901760
    %v1574 = vsub.f32 %v1572, %v1573
    %v1575 = vand.u32 %v1574, 4294901760
    %1576 = vmatpush1.msra.mxu0 %v1575
    %1577 = vmatprep.subr.mxu0 0.0
    %v1578 = vand.u32 %v1250, 4294901760
    %v1579 = vsub.f32 %v1250, %v1578
    %v1580 = vand.u32 %v1579, 4294901760
    %v1581 = vsub.f32 %v1579, %v1580
    %v1582 = vand.u32 %v1581, 4294901760
    %1583 = vmatpush1.msra.mxu0 %v1582
    %1584 = vmatprep.subr.mxu0 0.0
    %v1585 = vand.u32 %v1251, 4294901760
    %v1586 = vsub.f32 %v1251, %v1585
    %v1587 = vand.u32 %v1586, 4294901760
    %v1588 = vsub.f32 %v1586, %v1587
    %v1589 = vand.u32 %v1588, 4294901760
    %1590 = vmatpush1.msra.mxu0 %v1589
    %1591 = vmatprep.subr.mxu0 0.0
    %v1592 = vand.u32 %v1252, 4294901760
    %v1593 = vsub.f32 %v1252, %v1592
    %v1594 = vand.u32 %v1593, 4294901760
    %v1595 = vsub.f32 %v1593, %v1594
    %v1596 = vand.u32 %v1595, 4294901760
    %1597 = vmatpush1.msra.mxu0 %v1596
    %1598 = vmatprep.subr.mxu0 0.0
    %v1599 = vand.u32 %v1253, 4294901760
    %v1600 = vsub.f32 %v1253, %v1599
    %v1601 = vand.u32 %v1600, 4294901760
    %v1602 = vsub.f32 %v1600, %v1601
    %v1603 = vand.u32 %v1602, 4294901760
    %1604 = vmatpush1.msra.mxu0 %v1603
    %1605 = vmatprep.subr.mxu0 0.0
    %v1606 = vand.u32 %v1254, 4294901760
    %v1607 = vsub.f32 %v1254, %v1606
    %v1608 = vand.u32 %v1607, 4294901760
    %v1609 = vsub.f32 %v1607, %v1608
    %v1610 = vand.u32 %v1609, 4294901760
    %1611 = vmatpush1.msra.mxu0 %v1610
    %1612 = vmatprep.subr.mxu0 0.0
    %1613 = vmatpush1.msra.mxu0 0.0
    %1614 = vmatprep.subr.mxu0 0.0
    %1615 = vmatpush1.msra.mxu0 0.0
    %1616 = vmatprep.subr.mxu0 0.0
    %1617 = vmatpush1.msra.mxu0 0.0
    %1618 = vmatprep.subr.mxu0 0.0
    %1619 = vmatpush1.msra.mxu0 0.0
    %1620 = vmatprep.subr.mxu0 0.0
    %1621 = vmatpush1.msra.mxu0 0.0
    %1622 = vmatprep.subr.mxu0 0.0
    %1623 = vmatpush1.msra.mxu0 0.0
    %1624 = vmatprep.subr.mxu0 0.0
    %1625 = vmatpush1.msra.mxu0 0.0
    %1626 = vmatprep.subr.mxu0 0.0
    %1627 = vmatpush1.msra.mxu0 0.0
    %1628 = vmatprep.subr.mxu0 0.0
    %1629 = vmatpush1.msra.mxu0 0.0
    %1630 = vmatprep.subr.mxu0 0.0
    %1631 = vmatpush1.msra.mxu0 0.0
    %1632 = vmatprep.subr.mxu0 0.0
    %1633 = vmatpush1.msra.mxu0 0.0
    %1634 = vmatprep.subr.mxu0 0.0
    %1635 = vmatpush1.msra.mxu0 0.0
    %1636 = vmatprep.subr.mxu0 0.0
    %1637 = vmatpush1.msra.mxu0 0.0
    %1638 = vmatprep.subr.mxu0 0.0
    %1639 = vmatpush1.msra.mxu0 0.0
    %1640 = vmatprep.subr.mxu0 0.0
    %1641 = vmatpush1.msra.mxu0 0.0
    %1642 = vmatprep.subr.mxu0 0.0
    %1643 = vmatpush1.msra.mxu0 0.0
    %1644 = vmatprep.mubr.f32.mxu0 0.0
    %v1645 = vand.u32 %v1146, 4294901760
    %1646 = vmatmul.mubr.f32.gmra.mrb[0].mxu0 %v1645
    %v1647 = vpop.f32.mrb[0].mxu0
    %v1648 = vadd.f32 %v1347, %v1647
    %v1649 = vpop.f32.mrb[0].mxu0
    %1650 = vmatprep.mubr.f32.mxu0 0.0
    %v1651 = vand.u32 %v1152, 4294901760
    %1652 = vmatmul.mubr.f32.gmra.mrb[0].mxu0 %v1651
    %v1653 = vpop.f32.mrb[0].mxu0
    %v1654 = vadd.f32 %v1357, %v1653
    %v1655 = vpop.f32.mrb[0].mxu0
    %1656 = vmatprep.mubr.f32.mxu0 0.0
    %v1657 = vand.u32 %v1158, 4294901760
    %1658 = vmatmul.mubr.f32.gmra.mrb[0].mxu0 %v1657
    %v1659 = vpop.f32.mrb[0].mxu0
    %v1660 = vadd.f32 %v1367, %v1659
    %v1661 = vpop.f32.mrb[0].mxu0
    %1662 = vmatprep.mubr.f32.mxu0 0.0
    %v1663 = vand.u32 %v1164, 4294901760
    %1664 = vmatmul.mubr.f32.gmra.mrb[0].mxu0 %v1663
    %v1665 = vpop.f32.mrb[0].mxu0
    %v1666 = vadd.f32 %v1377, %v1665
    %v1667 = vpop.f32.mrb[0].mxu0
    %1668 = vmatprep.mubr.f32.mxu0 0.0
    %v1669 = vand.u32 %v1170, 4294901760
    %1670 = vmatmul.mubr.f32.gmra.mrb[0].mxu0 %v1669
    %v1671 = vpop.f32.mrb[0].mxu0
    %v1672 = vadd.f32 %v1387, %v1671
    %v1673 = vpop.f32.mrb[0].mxu0
    %1674 = vmatprep.mubr.f32.mxu0 0.0
    %v1675 = vand.u32 %v1176, 4294901760
    %1676 = vmatmul.mubr.f32.gmra.mrb[0].mxu0 %v1675
    %v1677 = vpop.f32.mrb[0].mxu0
    %v1678 = vadd.f32 %v1397, %v1677
    %v1679 = vpop.f32.mrb[0].mxu0
    %1680 = vmatprep.mubr.f32.mxu0 0.0
    %v1681 = vand.u32 %v1182, 4294901760
    %1682 = vmatmul.mubr.f32.gmra.mrb[0].mxu0 %v1681
    %v1683 = vpop.f32.mrb[0].mxu0
    %v1684 = vadd.f32 %v1407, %v1683
    %v1685 = vpop.f32.mrb[0].mxu0
    %1686 = vmatprep.mubr.f32.mxu0 0.0
    %v1687 = vand.u32 %v1188, 4294901760
    %1688 = vmatmul.mubr.f32.gmra.mrb[0].mxu0 %v1687
    %v1689 = vpop.f32.mrb[0].mxu0
    %v1690 = vadd.f32 %v1417, %v1689
    %v1691 = vpop.f32.mrb[0].mxu0
    %1692 = vmatprep.mubr.f32.mxu0 0.0
    %v1693 = vand.u32 %v1194, 4294901760
    %1694 = vmatmul.mubr.f32.gmra.mrb[0].mxu0 %v1693
    %v1695 = vpop.f32.mrb[0].mxu0
    %v1696 = vadd.f32 %v1427, %v1695
    %v1697 = vpop.f32.mrb[0].mxu0
    %1698 = vmatprep.mubr.f32.mxu0 0.0
    %v1699 = vand.u32 %v1200, 4294901760
    %1700 = vmatmul.mubr.f32.gmra.mrb[0].mxu0 %v1699
    %v1701 = vpop.f32.mrb[0].mxu0
    %v1702 = vadd.f32 %v1437, %v1701
    %v1703 = vpop.f32.mrb[0].mxu0
    %1704 = vmatprep.mubr.f32.mxu0 0.0
    %v1705 = vand.u32 %v1206, 4294901760
    %1706 = vmatmul.mubr.f32.gmra.mrb[0].mxu0 %v1705
    %v1707 = vpop.f32.mrb[0].mxu0
    %v1708 = vadd.f32 %v1447, %v1707
    %v1709 = vpop.f32.mrb[0].mxu0
    %1710 = vmatprep.mubr.f32.mxu0 0.0
    %v1711 = vand.u32 %v1212, 4294901760
    %1712 = vmatmul.mubr.f32.gmra.mrb[0].mxu0 %v1711
    %v1713 = vpop.f32.mrb[0].mxu0
    %v1714 = vadd.f32 %v1457, %v1713
    %v1715 = vpop.f32.mrb[0].mxu0
    %1716 = vmatprep.mubr.f32.mxu0 0.0
    %v1717 = vand.u32 %v1218, 4294901760
    %1718 = vmatmul.mubr.f32.gmra.mrb[0].mxu0 %v1717
    %v1719 = vpop.f32.mrb[0].mxu0
    %v1720 = vadd.f32 %v1467, %v1719
    %v1721 = vpop.f32.mrb[0].mxu0
    %1722 = vmatprep.mubr.f32.mxu0 0.0
    %v1723 = vand.u32 %v1224, 4294901760
    %1724 = vmatmul.mubr.f32.gmra.mrb[0].mxu0 %v1723
    %v1725 = vpop.f32.mrb[0].mxu0
    %v1726 = vadd.f32 %v1477, %v1725
    %v1727 = vpop.f32.mrb[0].mxu0
    %1728 = vmatprep.mubr.f32.mxu0 0.0
    %v1729 = vand.u32 %v1230, 4294901760
    %1730 = vmatmul.mubr.f32.gmra.mrb[0].mxu0 %v1729
    %v1731 = vpop.f32.mrb[0].mxu0
    %v1732 = vadd.f32 %v1487, %v1731
    %v1733 = vpop.f32.mrb[0].mxu0
    %1734 = vmatprep.mubr.f32.mxu0 0.0
    %v1735 = vand.u32 %v1236, 4294901760
    %1736 = vmatmul.mubr.f32.gmra.mrb[0].mxu0 %v1735
    %v1737 = vpop.f32.mrb[0].mxu0
    %v1738 = vadd.f32 %v1497, %v1737
    %v1739 = vpop.f32.mrb[0].mxu0
    %1740 = vdwg.mxu0
    %1741 = vmatprep.subr.mxu0 0.0
    %v1742 = vand.u32 %v1239, 4294901760
    %v1743 = vsub.f32 %v1239, %v1742
    %1744 = vmatpush1.msra.mxu0 %v1743
    %1745 = vmatprep.subr.mxu0 0.0
    %v1746 = vand.u32 %v1240, 4294901760
    %v1747 = vsub.f32 %v1240, %v1746
    %1748 = vmatpush1.msra.mxu0 %v1747
    %1749 = vmatprep.subr.mxu0 0.0
    %v1750 = vand.u32 %v1241, 4294901760
    %v1751 = vsub.f32 %v1241, %v1750
    %1752 = vmatpush1.msra.mxu0 %v1751
    %1753 = vmatprep.subr.mxu0 0.0
    %v1754 = vand.u32 %v1242, 4294901760
    %v1755 = vsub.f32 %v1242, %v1754
    %1756 = vmatpush1.msra.mxu0 %v1755
    %1757 = vmatprep.subr.mxu0 0.0
    %v1758 = vand.u32 %v1243, 4294901760
    %v1759 = vsub.f32 %v1243, %v1758
    %1760 = vmatpush1.msra.mxu0 %v1759
    %1761 = vmatprep.subr.mxu0 0.0
    %v1762 = vand.u32 %v1244, 4294901760
    %v1763 = vsub.f32 %v1244, %v1762
    %1764 = vmatpush1.msra.mxu0 %v1763
    %1765 = vmatprep.subr.mxu0 0.0
    %v1766 = vand.u32 %v1245, 4294901760
    %v1767 = vsub.f32 %v1245, %v1766
    %1768 = vmatpush1.msra.mxu0 %v1767
    %1769 = vmatprep.subr.mxu0 0.0
    %v1770 = vand.u32 %v1246, 4294901760
    %v1771 = vsub.f32 %v1246, %v1770
    %1772 = vmatpush1.msra.mxu0 %v1771
    %1773 = vmatprep.subr.mxu0 0.0
    %v1774 = vand.u32 %v1247, 4294901760
    %v1775 = vsub.f32 %v1247, %v1774
    %1776 = vmatpush1.msra.mxu0 %v1775
    %1777 = vmatprep.subr.mxu0 0.0
    %v1778 = vand.u32 %v1248, 4294901760
    %v1779 = vsub.f32 %v1248, %v1778
    %1780 = vmatpush1.msra.mxu0 %v1779
    %1781 = vmatprep.subr.mxu0 0.0
    %v1782 = vand.u32 %v1249, 4294901760
    %v1783 = vsub.f32 %v1249, %v1782
    %1784 = vmatpush1.msra.mxu0 %v1783
    %1785 = vmatprep.subr.mxu0 0.0
    %v1786 = vand.u32 %v1250, 4294901760
    %v1787 = vsub.f32 %v1250, %v1786
    %1788 = vmatpush1.msra.mxu0 %v1787
    %1789 = vmatprep.subr.mxu0 0.0
    %v1790 = vand.u32 %v1251, 4294901760
    %v1791 = vsub.f32 %v1251, %v1790
    %1792 = vmatpush1.msra.mxu0 %v1791
    %1793 = vmatprep.subr.mxu0 0.0
    %v1794 = vand.u32 %v1252, 4294901760
    %v1795 = vsub.f32 %v1252, %v1794
    %1796 = vmatpush1.msra.mxu0 %v1795
    %1797 = vmatprep.subr.mxu0 0.0
    %v1798 = vand.u32 %v1253, 4294901760
    %v1799 = vsub.f32 %v1253, %v1798
    %1800 = vmatpush1.msra.mxu0 %v1799
    %1801 = vmatprep.subr.mxu0 0.0
    %v1802 = vand.u32 %v1254, 4294901760
    %v1803 = vsub.f32 %v1254, %v1802
    %1804 = vmatpush1.msra.mxu0 %v1803
    %1805 = vmatprep.subr.mxu0 0.0
    %1806 = vmatpush1.msra.mxu0 0.0
    %1807 = vmatprep.subr.mxu0 0.0
    %1808 = vmatpush1.msra.mxu0 0.0
    %1809 = vmatprep.subr.mxu0 0.0
    %1810 = vmatpush1.msra.mxu0 0.0
    %1811 = vmatprep.subr.mxu0 0.0
    %1812 = vmatpush1.msra.mxu0 0.0
    %1813 = vmatprep.subr.mxu0 0.0
    %1814 = vmatpush1.msra.mxu0 0.0
    %1815 = vmatprep.subr.mxu0 0.0
    %1816 = vmatpush1.msra.mxu0 0.0
    %1817 = vmatprep.subr.mxu0 0.0
    %1818 = vmatpush1.msra.mxu0 0.0
    %1819 = vmatprep.subr.mxu0 0.0
    %1820 = vmatpush1.msra.mxu0 0.0
    %1821 = vmatprep.subr.mxu0 0.0
    %1822 = vmatpush1.msra.mxu0 0.0
    %1823 = vmatprep.subr.mxu0 0.0
    %1824 = vmatpush1.msra.mxu0 0.0
    %1825 = vmatprep.subr.mxu0 0.0
    %1826 = vmatpush1.msra.mxu0 0.0
    %1827 = vmatprep.subr.mxu0 0.0
    %1828 = vmatpush1.msra.mxu0 0.0
    %1829 = vmatprep.subr.mxu0 0.0
    %1830 = vmatpush1.msra.mxu0 0.0
    %1831 = vmatprep.subr.mxu0 0.0
    %1832 = vmatpush1.msra.mxu0 0.0
    %1833 = vmatprep.subr.mxu0 0.0
    %1834 = vmatpush1.msra.mxu0 0.0
    %1835 = vmatprep.subr.mxu0 0.0
    %1836 = vmatpush1.msra.mxu0 0.0
    %1837 = vmatprep.mubr.f32.mxu0 0.0
    %v1838 = vand.u32 %v1146, 4294901760
    %v1839 = vsub.f32 %v1146, %v1838
    %1840 = vmatmul.mubr.f32.gmra.mrb[0].mxu0 %v1839
    %v1841 = vpop.f32.mrb[0].mxu0
    %v1842 = vadd.f32 %v1648, %v1841
    %v1843 = vpop.f32.mrb[0].mxu0
    %1844 = vmatprep.mubr.f32.mxu0 0.0
    %v1845 = vand.u32 %v1152, 4294901760
    %v1846 = vsub.f32 %v1152, %v1845
    %1847 = vmatmul.mubr.f32.gmra.mrb[0].mxu0 %v1846
    %v1848 = vpop.f32.mrb[0].mxu0
    %v1849 = vadd.f32 %v1654, %v1848
    %v1850 = vpop.f32.mrb[0].mxu0
    %1851 = vmatprep.mubr.f32.mxu0 0.0
    %v1852 = vand.u32 %v1158, 4294901760
    %v1853 = vsub.f32 %v1158, %v1852
    %1854 = vmatmul.mubr.f32.gmra.mrb[0].mxu0 %v1853
    %v1855 = vpop.f32.mrb[0].mxu0
    %v1856 = vadd.f32 %v1660, %v1855
    %v1857 = vpop.f32.mrb[0].mxu0
    %1858 = vmatprep.mubr.f32.mxu0 0.0
    %v1859 = vand.u32 %v1164, 4294901760
    %v1860 = vsub.f32 %v1164, %v1859
    %1861 = vmatmul.mubr.f32.gmra.mrb[0].mxu0 %v1860
    %v1862 = vpop.f32.mrb[0].mxu0
    %v1863 = vadd.f32 %v1666, %v1862
    %v1864 = vpop.f32.mrb[0].mxu0
    %1865 = vmatprep.mubr.f32.mxu0 0.0
    %v1866 = vand.u32 %v1170, 4294901760
    %v1867 = vsub.f32 %v1170, %v1866
    %1868 = vmatmul.mubr.f32.gmra.mrb[0].mxu0 %v1867
    %v1869 = vpop.f32.mrb[0].mxu0
    %v1870 = vadd.f32 %v1672, %v1869
    %v1871 = vpop.f32.mrb[0].mxu0
    %1872 = vmatprep.mubr.f32.mxu0 0.0
    %v1873 = vand.u32 %v1176, 4294901760
    %v1874 = vsub.f32 %v1176, %v1873
    %1875 = vmatmul.mubr.f32.gmra.mrb[0].mxu0 %v1874
    %v1876 = vpop.f32.mrb[0].mxu0
    %v1877 = vadd.f32 %v1678, %v1876
    %v1878 = vpop.f32.mrb[0].mxu0
    %1879 = vmatprep.mubr.f32.mxu0 0.0
    %v1880 = vand.u32 %v1182, 4294901760
    %v1881 = vsub.f32 %v1182, %v1880
    %1882 = vmatmul.mubr.f32.gmra.mrb[0].mxu0 %v1881
    %v1883 = vpop.f32.mrb[0].mxu0
    %v1884 = vadd.f32 %v1684, %v1883
    %v1885 = vpop.f32.mrb[0].mxu0
    %1886 = vmatprep.mubr.f32.mxu0 0.0
    %v1887 = vand.u32 %v1188, 4294901760
    %v1888 = vsub.f32 %v1188, %v1887
    %1889 = vmatmul.mubr.f32.gmra.mrb[0].mxu0 %v1888
    %v1890 = vpop.f32.mrb[0].mxu0
    %v1891 = vadd.f32 %v1690, %v1890
    %v1892 = vpop.f32.mrb[0].mxu0
    %1893 = vmatprep.mubr.f32.mxu0 0.0
    %v1894 = vand.u32 %v1194, 4294901760
    %v1895 = vsub.f32 %v1194, %v1894
    %1896 = vmatmul.mubr.f32.gmra.mrb[0].mxu0 %v1895
    %v1897 = vpop.f32.mrb[0].mxu0
    %v1898 = vadd.f32 %v1696, %v1897
    %v1899 = vpop.f32.mrb[0].mxu0
    %1900 = vmatprep.mubr.f32.mxu0 0.0
    %v1901 = vand.u32 %v1200, 4294901760
    %v1902 = vsub.f32 %v1200, %v1901
    %1903 = vmatmul.mubr.f32.gmra.mrb[0].mxu0 %v1902
    %v1904 = vpop.f32.mrb[0].mxu0
    %v1905 = vadd.f32 %v1702, %v1904
    %v1906 = vpop.f32.mrb[0].mxu0
    %1907 = vmatprep.mubr.f32.mxu0 0.0
    %v1908 = vand.u32 %v1206, 4294901760
    %v1909 = vsub.f32 %v1206, %v1908
    %1910 = vmatmul.mubr.f32.gmra.mrb[0].mxu0 %v1909
    %v1911 = vpop.f32.mrb[0].mxu0
    %v1912 = vadd.f32 %v1708, %v1911
    %v1913 = vpop.f32.mrb[0].mxu0
    %1914 = vmatprep.mubr.f32.mxu0 0.0
    %v1915 = vand.u32 %v1212, 4294901760
    %v1916 = vsub.f32 %v1212, %v1915
    %1917 = vmatmul.mubr.f32.gmra.mrb[0].mxu0 %v1916
    %v1918 = vpop.f32.mrb[0].mxu0
    %v1919 = vadd.f32 %v1714, %v1918
    %v1920 = vpop.f32.mrb[0].mxu0
    %1921 = vmatprep.mubr.f32.mxu0 0.0
    %v1922 = vand.u32 %v1218, 4294901760
    %v1923 = vsub.f32 %v1218, %v1922
    %1924 = vmatmul.mubr.f32.gmra.mrb[0].mxu0 %v1923
    %v1925 = vpop.f32.mrb[0].mxu0
    %v1926 = vadd.f32 %v1720, %v1925
    %v1927 = vpop.f32.mrb[0].mxu0
    %1928 = vmatprep.mubr.f32.mxu0 0.0
    %v1929 = vand.u32 %v1224, 4294901760
    %v1930 = vsub.f32 %v1224, %v1929
    %1931 = vmatmul.mubr.f32.gmra.mrb[0].mxu0 %v1930
    %v1932 = vpop.f32.mrb[0].mxu0
    %v1933 = vadd.f32 %v1726, %v1932
    %v1934 = vpop.f32.mrb[0].mxu0
    %1935 = vmatprep.mubr.f32.mxu0 0.0
    %v1936 = vand.u32 %v1230, 4294901760
    %v1937 = vsub.f32 %v1230, %v1936
    %1938 = vmatmul.mubr.f32.gmra.mrb[0].mxu0 %v1937
    %v1939 = vpop.f32.mrb[0].mxu0
    %v1940 = vadd.f32 %v1732, %v1939
    %v1941 = vpop.f32.mrb[0].mxu0
    %1942 = vmatprep.mubr.f32.mxu0 0.0
    %v1943 = vand.u32 %v1236, 4294901760
    %v1944 = vsub.f32 %v1236, %v1943
    %1945 = vmatmul.mubr.f32.gmra.mrb[0].mxu0 %v1944
    %v1946 = vpop.f32.mrb[0].mxu0
    %v1947 = vadd.f32 %v1738, %v1946
    %v1948 = vpop.f32.mrb[0].mxu0
    %1949 = vdwg.mxu0
    %1950 = vmatprep.subr.mxu0 0.0
    %v1951 = vand.u32 %v1239, 4294901760
    %1952 = vmatpush1.msra.mxu0 %v1951
    %1953 = vmatprep.subr.mxu0 0.0
    %v1954 = vand.u32 %v1240, 4294901760
    %1955 = vmatpush1.msra.mxu0 %v1954
    %1956 = vmatprep.subr.mxu0 0.0
    %v1957 = vand.u32 %v1241, 4294901760
    %1958 = vmatpush1.msra.mxu0 %v1957
    %1959 = vmatprep.subr.mxu0 0.0
    %v1960 = vand.u32 %v1242, 4294901760
    %1961 = vmatpush1.msra.mxu0 %v1960
    %1962 = vmatprep.subr.mxu0 0.0
    %v1963 = vand.u32 %v1243, 4294901760
    %1964 = vmatpush1.msra.mxu0 %v1963
    %1965 = vmatprep.subr.mxu0 0.0
    %v1966 = vand.u32 %v1244, 4294901760
    %1967 = vmatpush1.msra.mxu0 %v1966
    %1968 = vmatprep.subr.mxu0 0.0
    %v1969 = vand.u32 %v1245, 4294901760
    %1970 = vmatpush1.msra.mxu0 %v1969
    %1971 = vmatprep.subr.mxu0 0.0
    %v1972 = vand.u32 %v1246, 4294901760
    %1973 = vmatpush1.msra.mxu0 %v1972
    %1974 = vmatprep.subr.mxu0 0.0
    %v1975 = vand.u32 %v1247, 4294901760
    %1976 = vmatpush1.msra.mxu0 %v1975
    %1977 = vmatprep.subr.mxu0 0.0
    %v1978 = vand.u32 %v1248, 4294901760
    %1979 = vmatpush1.msra.mxu0 %v1978
    %1980 = vmatprep.subr.mxu0 0.0
    %v1981 = vand.u32 %v1249, 4294901760
    %1982 = vmatpush1.msra.mxu0 %v1981
    %1983 = vmatprep.subr.mxu0 0.0
    %v1984 = vand.u32 %v1250, 4294901760
    %1985 = vmatpush1.msra.mxu0 %v1984
    %1986 = vmatprep.subr.mxu0 0.0
    %v1987 = vand.u32 %v1251, 4294901760
    %1988 = vmatpush1.msra.mxu0 %v1987
    %1989 = vmatprep.subr.mxu0 0.0
    %v1990 = vand.u32 %v1252, 4294901760
    %1991 = vmatpush1.msra.mxu0 %v1990
    %1992 = vmatprep.subr.mxu0 0.0
    %v1993 = vand.u32 %v1253, 4294901760
    %1994 = vmatpush1.msra.mxu0 %v1993
    %1995 = vmatprep.subr.mxu0 0.0
    %v1996 = vand.u32 %v1254, 4294901760
    %1997 = vmatpush1.msra.mxu0 %v1996
    %1998 = vmatprep.subr.mxu0 0.0
    %1999 = vmatpush1.msra.mxu0 0.0
    %2000 = vmatprep.subr.mxu0 0.0
    %2001 = vmatpush1.msra.mxu0 0.0
    %2002 = vmatprep.subr.mxu0 0.0
    %2003 = vmatpush1.msra.mxu0 0.0
    %2004 = vmatprep.subr.mxu0 0.0
    %2005 = vmatpush1.msra.mxu0 0.0
    %2006 = vmatprep.subr.mxu0 0.0
    %2007 = vmatpush1.msra.mxu0 0.0
    %2008 = vmatprep.subr.mxu0 0.0
    %2009 = vmatpush1.msra.mxu0 0.0
    %2010 = vmatprep.subr.mxu0 0.0
    %2011 = vmatpush1.msra.mxu0 0.0
    %2012 = vmatprep.subr.mxu0 0.0
    %2013 = vmatpush1.msra.mxu0 0.0
    %2014 = vmatprep.subr.mxu0 0.0
    %2015 = vmatpush1.msra.mxu0 0.0
    %2016 = vmatprep.subr.mxu0 0.0
    %2017 = vmatpush1.msra.mxu0 0.0
    %2018 = vmatprep.subr.mxu0 0.0
    %2019 = vmatpush1.msra.mxu0 0.0
    %2020 = vmatprep.subr.mxu0 0.0
    %2021 = vmatpush1.msra.mxu0 0.0
    %2022 = vmatprep.subr.mxu0 0.0
    %2023 = vmatpush1.msra.mxu0 0.0
    %2024 = vmatprep.subr.mxu0 0.0
    %2025 = vmatpush1.msra.mxu0 0.0
    %2026 = vmatprep.subr.mxu0 0.0
    %2027 = vmatpush1.msra.mxu0 0.0
    %2028 = vmatprep.subr.mxu0 0.0
    %2029 = vmatpush1.msra.mxu0 0.0
    %2030 = vmatprep.mubr.f32.mxu0 0.0
    %v2031 = vand.u32 %v1146, 4294901760
    %v2032 = vsub.f32 %v1146, %v2031
    %v2033 = vand.u32 %v2032, 4294901760
    %2034 = vmatmul.mubr.f32.gmra.mrb[0].mxu0 %v2033
    %v2035 = vpop.f32.mrb[0].mxu0
    %v2036 = vadd.f32 %v1842, %v2035
    %v2037 = vpop.f32.mrb[0].mxu0
    %2038 = vmatprep.mubr.f32.mxu0 0.0
    %v2039 = vand.u32 %v1152, 4294901760
    %v2040 = vsub.f32 %v1152, %v2039
    %v2041 = vand.u32 %v2040, 4294901760
    %2042 = vmatmul.mubr.f32.gmra.mrb[0].mxu0 %v2041
    %v2043 = vpop.f32.mrb[0].mxu0
    %v2044 = vadd.f32 %v1849, %v2043
    %v2045 = vpop.f32.mrb[0].mxu0
    %2046 = vmatprep.mubr.f32.mxu0 0.0
    %v2047 = vand.u32 %v1158, 4294901760
    %v2048 = vsub.f32 %v1158, %v2047
    %v2049 = vand.u32 %v2048, 4294901760
    %2050 = vmatmul.mubr.f32.gmra.mrb[0].mxu0 %v2049
    %v2051 = vpop.f32.mrb[0].mxu0
    %v2052 = vadd.f32 %v1856, %v2051
    %v2053 = vpop.f32.mrb[0].mxu0
    %2054 = vmatprep.mubr.f32.mxu0 0.0
    %v2055 = vand.u32 %v1164, 4294901760
    %v2056 = vsub.f32 %v1164, %v2055
    %v2057 = vand.u32 %v2056, 4294901760
    %2058 = vmatmul.mubr.f32.gmra.mrb[0].mxu0 %v2057
    %v2059 = vpop.f32.mrb[0].mxu0
    %v2060 = vadd.f32 %v1863, %v2059
    %v2061 = vpop.f32.mrb[0].mxu0
    %2062 = vmatprep.mubr.f32.mxu0 0.0
    %v2063 = vand.u32 %v1170, 4294901760
    %v2064 = vsub.f32 %v1170, %v2063
    %v2065 = vand.u32 %v2064, 4294901760
    %2066 = vmatmul.mubr.f32.gmra.mrb[0].mxu0 %v2065
    %v2067 = vpop.f32.mrb[0].mxu0
    %v2068 = vadd.f32 %v1870, %v2067
    %v2069 = vpop.f32.mrb[0].mxu0
    %2070 = vmatprep.mubr.f32.mxu0 0.0
    %v2071 = vand.u32 %v1176, 4294901760
    %v2072 = vsub.f32 %v1176, %v2071
    %v2073 = vand.u32 %v2072, 4294901760
    %2074 = vmatmul.mubr.f32.gmra.mrb[0].mxu0 %v2073
    %v2075 = vpop.f32.mrb[0].mxu0
    %v2076 = vadd.f32 %v1877, %v2075
    %v2077 = vpop.f32.mrb[0].mxu0
    %2078 = vmatprep.mubr.f32.mxu0 0.0
    %v2079 = vand.u32 %v1182, 4294901760
    %v2080 = vsub.f32 %v1182, %v2079
    %v2081 = vand.u32 %v2080, 4294901760
    %2082 = vmatmul.mubr.f32.gmra.mrb[0].mxu0 %v2081
    %v2083 = vpop.f32.mrb[0].mxu0
    %v2084 = vadd.f32 %v1884, %v2083
    %v2085 = vpop.f32.mrb[0].mxu0
    %2086 = vmatprep.mubr.f32.mxu0 0.0
    %v2087 = vand.u32 %v1188, 4294901760
    %v2088 = vsub.f32 %v1188, %v2087
    %v2089 = vand.u32 %v2088, 4294901760
    %2090 = vmatmul.mubr.f32.gmra.mrb[0].mxu0 %v2089
    %v2091 = vpop.f32.mrb[0].mxu0
    %v2092 = vadd.f32 %v1891, %v2091
    %v2093 = vpop.f32.mrb[0].mxu0
    %2094 = vmatprep.mubr.f32.mxu0 0.0
    %v2095 = vand.u32 %v1194, 4294901760
    %v2096 = vsub.f32 %v1194, %v2095
    %v2097 = vand.u32 %v2096, 4294901760
    %2098 = vmatmul.mubr.f32.gmra.mrb[0].mxu0 %v2097
    %v2099 = vpop.f32.mrb[0].mxu0
    %v2100 = vadd.f32 %v1898, %v2099
    %v2101 = vpop.f32.mrb[0].mxu0
    %2102 = vmatprep.mubr.f32.mxu0 0.0
    %v2103 = vand.u32 %v1200, 4294901760
    %v2104 = vsub.f32 %v1200, %v2103
    %v2105 = vand.u32 %v2104, 4294901760
    %2106 = vmatmul.mubr.f32.gmra.mrb[0].mxu0 %v2105
    %v2107 = vpop.f32.mrb[0].mxu0
    %v2108 = vadd.f32 %v1905, %v2107
    %v2109 = vpop.f32.mrb[0].mxu0
    %2110 = vmatprep.mubr.f32.mxu0 0.0
    %v2111 = vand.u32 %v1206, 4294901760
    %v2112 = vsub.f32 %v1206, %v2111
    %v2113 = vand.u32 %v2112, 4294901760
    %2114 = vmatmul.mubr.f32.gmra.mrb[0].mxu0 %v2113
    %v2115 = vpop.f32.mrb[0].mxu0
    %v2116 = vadd.f32 %v1912, %v2115
    %v2117 = vpop.f32.mrb[0].mxu0
    %2118 = vmatprep.mubr.f32.mxu0 0.0
    %v2119 = vand.u32 %v1212, 4294901760
    %v2120 = vsub.f32 %v1212, %v2119
    %v2121 = vand.u32 %v2120, 4294901760
    %2122 = vmatmul.mubr.f32.gmra.mrb[0].mxu0 %v2121
    %v2123 = vpop.f32.mrb[0].mxu0
    %v2124 = vadd.f32 %v1919, %v2123
    %v2125 = vpop.f32.mrb[0].mxu0
    %2126 = vmatprep.mubr.f32.mxu0 0.0
    %v2127 = vand.u32 %v1218, 4294901760
    %v2128 = vsub.f32 %v1218, %v2127
    %v2129 = vand.u32 %v2128, 4294901760
    %2130 = vmatmul.mubr.f32.gmra.mrb[0].mxu0 %v2129
    %v2131 = vpop.f32.mrb[0].mxu0
    %v2132 = vadd.f32 %v1926, %v2131
    %v2133 = vpop.f32.mrb[0].mxu0
    %2134 = vmatprep.mubr.f32.mxu0 0.0
    %v2135 = vand.u32 %v1224, 4294901760
    %v2136 = vsub.f32 %v1224, %v2135
    %v2137 = vand.u32 %v2136, 4294901760
    %2138 = vmatmul.mubr.f32.gmra.mrb[0].mxu0 %v2137
    %v2139 = vpop.f32.mrb[0].mxu0
    %v2140 = vadd.f32 %v1933, %v2139
    %v2141 = vpop.f32.mrb[0].mxu0
    %2142 = vmatprep.mubr.f32.mxu0 0.0
    %v2143 = vand.u32 %v1230, 4294901760
    %v2144 = vsub.f32 %v1230, %v2143
    %v2145 = vand.u32 %v2144, 4294901760
    %2146 = vmatmul.mubr.f32.gmra.mrb[0].mxu0 %v2145
    %v2147 = vpop.f32.mrb[0].mxu0
    %v2148 = vadd.f32 %v1940, %v2147
    %v2149 = vpop.f32.mrb[0].mxu0
    %2150 = vmatprep.mubr.f32.mxu0 0.0
    %v2151 = vand.u32 %v1236, 4294901760
    %v2152 = vsub.f32 %v1236, %v2151
    %v2153 = vand.u32 %v2152, 4294901760
    %2154 = vmatmul.mubr.f32.gmra.mrb[0].mxu0 %v2153
    %v2155 = vpop.f32.mrb[0].mxu0
    %v2156 = vadd.f32 %v1947, %v2155
    %v2157 = vpop.f32.mrb[0].mxu0
    %2158 = vdwg.mxu0
    %2159 = vmatprep.subr.mxu0 0.0
    %v2160 = vand.u32 %v1239, 4294901760
    %v2161 = vsub.f32 %v1239, %v2160
    %v2162 = vand.u32 %v2161, 4294901760
    %2163 = vmatpush1.msra.mxu0 %v2162
    %2164 = vmatprep.subr.mxu0 0.0
    %v2165 = vand.u32 %v1240, 4294901760
    %v2166 = vsub.f32 %v1240, %v2165
    %v2167 = vand.u32 %v2166, 4294901760
    %2168 = vmatpush1.msra.mxu0 %v2167
    %2169 = vmatprep.subr.mxu0 0.0
    %v2170 = vand.u32 %v1241, 4294901760
    %v2171 = vsub.f32 %v1241, %v2170
    %v2172 = vand.u32 %v2171, 4294901760
    %2173 = vmatpush1.msra.mxu0 %v2172
    %2174 = vmatprep.subr.mxu0 0.0
    %v2175 = vand.u32 %v1242, 4294901760
    %v2176 = vsub.f32 %v1242, %v2175
    %v2177 = vand.u32 %v2176, 4294901760
    %2178 = vmatpush1.msra.mxu0 %v2177
    %2179 = vmatprep.subr.mxu0 0.0
    %v2180 = vand.u32 %v1243, 4294901760
    %v2181 = vsub.f32 %v1243, %v2180
    %v2182 = vand.u32 %v2181, 4294901760
    %2183 = vmatpush1.msra.mxu0 %v2182
    %2184 = vmatprep.subr.mxu0 0.0
    %v2185 = vand.u32 %v1244, 4294901760
    %v2186 = vsub.f32 %v1244, %v2185
    %v2187 = vand.u32 %v2186, 4294901760
    %2188 = vmatpush1.msra.mxu0 %v2187
    %2189 = vmatprep.subr.mxu0 0.0
    %v2190 = vand.u32 %v1245, 4294901760
    %v2191 = vsub.f32 %v1245, %v2190
    %v2192 = vand.u32 %v2191, 4294901760
    %2193 = vmatpush1.msra.mxu0 %v2192
    %2194 = vmatprep.subr.mxu0 0.0
    %v2195 = vand.u32 %v1246, 4294901760
    %v2196 = vsub.f32 %v1246, %v2195
    %v2197 = vand.u32 %v2196, 4294901760
    %2198 = vmatpush1.msra.mxu0 %v2197
    %2199 = vmatprep.subr.mxu0 0.0
    %v2200 = vand.u32 %v1247, 4294901760
    %v2201 = vsub.f32 %v1247, %v2200
    %v2202 = vand.u32 %v2201, 4294901760
    %2203 = vmatpush1.msra.mxu0 %v2202
    %2204 = vmatprep.subr.mxu0 0.0
    %v2205 = vand.u32 %v1248, 4294901760
    %v2206 = vsub.f32 %v1248, %v2205
    %v2207 = vand.u32 %v2206, 4294901760
    %2208 = vmatpush1.msra.mxu0 %v2207
    %2209 = vmatprep.subr.mxu0 0.0
    %v2210 = vand.u32 %v1249, 4294901760
    %v2211 = vsub.f32 %v1249, %v2210
    %v2212 = vand.u32 %v2211, 4294901760
    %2213 = vmatpush1.msra.mxu0 %v2212
    %2214 = vmatprep.subr.mxu0 0.0
    %v2215 = vand.u32 %v1250, 4294901760
    %v2216 = vsub.f32 %v1250, %v2215
    %v2217 = vand.u32 %v2216, 4294901760
    %2218 = vmatpush1.msra.mxu0 %v2217
    %2219 = vmatprep.subr.mxu0 0.0
    %v2220 = vand.u32 %v1251, 4294901760
    %v2221 = vsub.f32 %v1251, %v2220
    %v2222 = vand.u32 %v2221, 4294901760
    %2223 = vmatpush1.msra.mxu0 %v2222
    %2224 = vmatprep.subr.mxu0 0.0
    %v2225 = vand.u32 %v1252, 4294901760
    %v2226 = vsub.f32 %v1252, %v2225
    %v2227 = vand.u32 %v2226, 4294901760
    %2228 = vmatpush1.msra.mxu0 %v2227
    %2229 = vmatprep.subr.mxu0 0.0
    %v2230 = vand.u32 %v1253, 4294901760
    %v2231 = vsub.f32 %v1253, %v2230
    %v2232 = vand.u32 %v2231, 4294901760
    %2233 = vmatpush1.msra.mxu0 %v2232
    %2234 = vmatprep.subr.mxu0 0.0
    %v2235 = vand.u32 %v1254, 4294901760
    %v2236 = vsub.f32 %v1254, %v2235
    %v2237 = vand.u32 %v2236, 4294901760
    %2238 = vmatpush1.msra.mxu0 %v2237
    %2239 = vmatprep.subr.mxu0 0.0
    %2240 = vmatpush1.msra.mxu0 0.0
    %2241 = vmatprep.subr.mxu0 0.0
    %2242 = vmatpush1.msra.mxu0 0.0
    %2243 = vmatprep.subr.mxu0 0.0
    %2244 = vmatpush1.msra.mxu0 0.0
    %2245 = vmatprep.subr.mxu0 0.0
    %2246 = vmatpush1.msra.mxu0 0.0
    %2247 = vmatprep.subr.mxu0 0.0
    %2248 = vmatpush1.msra.mxu0 0.0
    %2249 = vmatprep.subr.mxu0 0.0
    %2250 = vmatpush1.msra.mxu0 0.0
    %2251 = vmatprep.subr.mxu0 0.0
    %2252 = vmatpush1.msra.mxu0 0.0
    %2253 = vmatprep.subr.mxu0 0.0
    %2254 = vmatpush1.msra.mxu0 0.0
    %2255 = vmatprep.subr.mxu0 0.0
    %2256 = vmatpush1.msra.mxu0 0.0
    %2257 = vmatprep.subr.mxu0 0.0
    %2258 = vmatpush1.msra.mxu0 0.0
    %2259 = vmatprep.subr.mxu0 0.0
    %2260 = vmatpush1.msra.mxu0 0.0
    %2261 = vmatprep.subr.mxu0 0.0
    %2262 = vmatpush1.msra.mxu0 0.0
    %2263 = vmatprep.subr.mxu0 0.0
    %2264 = vmatpush1.msra.mxu0 0.0
    %2265 = vmatprep.subr.mxu0 0.0
    %2266 = vmatpush1.msra.mxu0 0.0
    %2267 = vmatprep.subr.mxu0 0.0
    %2268 = vmatpush1.msra.mxu0 0.0
    %2269 = vmatprep.subr.mxu0 0.0
    %2270 = vmatpush1.msra.mxu0 0.0
    %2271 = vmatprep.mubr.f32.mxu0 0.0
    %v2272 = vand.u32 %v1146, 4294901760
    %2273 = vmatmul.mubr.f32.gmra.mrb[0].mxu0 %v2272
    %v2274 = vpop.f32.mrb[0].mxu0
    %v2275 = vadd.f32 %v2036, %v2274
    %v2276 = vpop.f32.mrb[0].mxu0
    %2277 = vmatprep.mubr.f32.mxu0 0.0
    %v2278 = vand.u32 %v1152, 4294901760
    %2279 = vmatmul.mubr.f32.gmra.mrb[0].mxu0 %v2278
    %v2280 = vpop.f32.mrb[0].mxu0
    %v2281 = vadd.f32 %v2044, %v2280
    %v2282 = vpop.f32.mrb[0].mxu0
    %2283 = vmatprep.mubr.f32.mxu0 0.0
    %v2284 = vand.u32 %v1158, 4294901760
    %2285 = vmatmul.mubr.f32.gmra.mrb[0].mxu0 %v2284
    %v2286 = vpop.f32.mrb[0].mxu0
    %v2287 = vadd.f32 %v2052, %v2286
    %v2288 = vpop.f32.mrb[0].mxu0
    %2289 = vmatprep.mubr.f32.mxu0 0.0
    %v2290 = vand.u32 %v1164, 4294901760
    %2291 = vmatmul.mubr.f32.gmra.mrb[0].mxu0 %v2290
    %v2292 = vpop.f32.mrb[0].mxu0
    %v2293 = vadd.f32 %v2060, %v2292
    %v2294 = vpop.f32.mrb[0].mxu0
    %2295 = vmatprep.mubr.f32.mxu0 0.0
    %v2296 = vand.u32 %v1170, 4294901760
    %2297 = vmatmul.mubr.f32.gmra.mrb[0].mxu0 %v2296
    %v2298 = vpop.f32.mrb[0].mxu0
    %v2299 = vadd.f32 %v2068, %v2298
    %v2300 = vpop.f32.mrb[0].mxu0
    %2301 = vmatprep.mubr.f32.mxu0 0.0
    %v2302 = vand.u32 %v1176, 4294901760
    %2303 = vmatmul.mubr.f32.gmra.mrb[0].mxu0 %v2302
    %v2304 = vpop.f32.mrb[0].mxu0
    %v2305 = vadd.f32 %v2076, %v2304
    %v2306 = vpop.f32.mrb[0].mxu0
    %2307 = vmatprep.mubr.f32.mxu0 0.0
    %v2308 = vand.u32 %v1182, 4294901760
    %2309 = vmatmul.mubr.f32.gmra.mrb[0].mxu0 %v2308
    %v2310 = vpop.f32.mrb[0].mxu0
    %v2311 = vadd.f32 %v2084, %v2310
    %v2312 = vpop.f32.mrb[0].mxu0
    %2313 = vmatprep.mubr.f32.mxu0 0.0
    %v2314 = vand.u32 %v1188, 4294901760
    %2315 = vmatmul.mubr.f32.gmra.mrb[0].mxu0 %v2314
    %v2316 = vpop.f32.mrb[0].mxu0
    %v2317 = vadd.f32 %v2092, %v2316
    %v2318 = vpop.f32.mrb[0].mxu0
    %2319 = vmatprep.mubr.f32.mxu0 0.0
    %v2320 = vand.u32 %v1194, 4294901760
    %2321 = vmatmul.mubr.f32.gmra.mrb[0].mxu0 %v2320
    %v2322 = vpop.f32.mrb[0].mxu0
    %v2323 = vadd.f32 %v2100, %v2322
    %v2324 = vpop.f32.mrb[0].mxu0
    %2325 = vmatprep.mubr.f32.mxu0 0.0
    %v2326 = vand.u32 %v1200, 4294901760
    %2327 = vmatmul.mubr.f32.gmra.mrb[0].mxu0 %v2326
    %v2328 = vpop.f32.mrb[0].mxu0
    %v2329 = vadd.f32 %v2108, %v2328
    %v2330 = vpop.f32.mrb[0].mxu0
    %2331 = vmatprep.mubr.f32.mxu0 0.0
    %v2332 = vand.u32 %v1206, 4294901760
    %2333 = vmatmul.mubr.f32.gmra.mrb[0].mxu0 %v2332
    %v2334 = vpop.f32.mrb[0].mxu0
    %v2335 = vadd.f32 %v2116, %v2334
    %v2336 = vpop.f32.mrb[0].mxu0
    %2337 = vmatprep.mubr.f32.mxu0 0.0
    %v2338 = vand.u32 %v1212, 4294901760
    %2339 = vmatmul.mubr.f32.gmra.mrb[0].mxu0 %v2338
    %v2340 = vpop.f32.mrb[0].mxu0
    %v2341 = vadd.f32 %v2124, %v2340
    %v2342 = vpop.f32.mrb[0].mxu0
    %2343 = vmatprep.mubr.f32.mxu0 0.0
    %v2344 = vand.u32 %v1218, 4294901760
    %2345 = vmatmul.mubr.f32.gmra.mrb[0].mxu0 %v2344
    %v2346 = vpop.f32.mrb[0].mxu0
    %v2347 = vadd.f32 %v2132, %v2346
    %v2348 = vpop.f32.mrb[0].mxu0
    %2349 = vmatprep.mubr.f32.mxu0 0.0
    %v2350 = vand.u32 %v1224, 4294901760
    %2351 = vmatmul.mubr.f32.gmra.mrb[0].mxu0 %v2350
    %v2352 = vpop.f32.mrb[0].mxu0
    %v2353 = vadd.f32 %v2140, %v2352
    %v2354 = vpop.f32.mrb[0].mxu0
    %2355 = vmatprep.mubr.f32.mxu0 0.0
    %v2356 = vand.u32 %v1230, 4294901760
    %2357 = vmatmul.mubr.f32.gmra.mrb[0].mxu0 %v2356
    %v2358 = vpop.f32.mrb[0].mxu0
    %v2359 = vadd.f32 %v2148, %v2358
    %v2360 = vpop.f32.mrb[0].mxu0
    %2361 = vmatprep.mubr.f32.mxu0 0.0
    %v2362 = vand.u32 %v1236, 4294901760
    %2363 = vmatmul.mubr.f32.gmra.mrb[0].mxu0 %v2362
    %v2364 = vpop.f32.mrb[0].mxu0
    %v2365 = vadd.f32 %v2156, %v2364
    %v2366 = vpop.f32.mrb[0].mxu0
    %2367 = vdwg.mxu0
    %2368 = vmatprep.subr.mxu0 0.0
    %v2369 = vand.u32 %v1239, 4294901760
    %2370 = vmatpush1.msra.mxu0 %v2369
    %2371 = vmatprep.subr.mxu0 0.0
    %v2372 = vand.u32 %v1240, 4294901760
    %2373 = vmatpush1.msra.mxu0 %v2372
    %2374 = vmatprep.subr.mxu0 0.0
    %v2375 = vand.u32 %v1241, 4294901760
    %2376 = vmatpush1.msra.mxu0 %v2375
    %2377 = vmatprep.subr.mxu0 0.0
    %v2378 = vand.u32 %v1242, 4294901760
    %2379 = vmatpush1.msra.mxu0 %v2378
    %2380 = vmatprep.subr.mxu0 0.0
    %v2381 = vand.u32 %v1243, 4294901760
    %2382 = vmatpush1.msra.mxu0 %v2381
    %2383 = vmatprep.subr.mxu0 0.0
    %v2384 = vand.u32 %v1244, 4294901760
    %2385 = vmatpush1.msra.mxu0 %v2384
    %2386 = vmatprep.subr.mxu0 0.0
    %v2387 = vand.u32 %v1245, 4294901760
    %2388 = vmatpush1.msra.mxu0 %v2387
    %2389 = vmatprep.subr.mxu0 0.0
    %v2390 = vand.u32 %v1246, 4294901760
    %2391 = vmatpush1.msra.mxu0 %v2390
    %2392 = vmatprep.subr.mxu0 0.0
    %v2393 = vand.u32 %v1247, 4294901760
    %2394 = vmatpush1.msra.mxu0 %v2393
    %2395 = vmatprep.subr.mxu0 0.0
    %v2396 = vand.u32 %v1248, 4294901760
    %2397 = vmatpush1.msra.mxu0 %v2396
    %2398 = vmatprep.subr.mxu0 0.0
    %v2399 = vand.u32 %v1249, 4294901760
    %2400 = vmatpush1.msra.mxu0 %v2399
    %2401 = vmatprep.subr.mxu0 0.0
    %v2402 = vand.u32 %v1250, 4294901760
    %2403 = vmatpush1.msra.mxu0 %v2402
    %2404 = vmatprep.subr.mxu0 0.0
    %v2405 = vand.u32 %v1251, 4294901760
    %2406 = vmatpush1.msra.mxu0 %v2405
    %2407 = vmatprep.subr.mxu0 0.0
    %v2408 = vand.u32 %v1252, 4294901760
    %2409 = vmatpush1.msra.mxu0 %v2408
    %2410 = vmatprep.subr.mxu0 0.0
    %v2411 = vand.u32 %v1253, 4294901760
    %2412 = vmatpush1.msra.mxu0 %v2411
    %2413 = vmatprep.subr.mxu0 0.0
    %v2414 = vand.u32 %v1254, 4294901760
    %2415 = vmatpush1.msra.mxu0 %v2414
    %2416 = vmatprep.subr.mxu0 0.0
    %2417 = vmatpush1.msra.mxu0 0.0
    %2418 = vmatprep.subr.mxu0 0.0
    %2419 = vmatpush1.msra.mxu0 0.0
    %2420 = vmatprep.subr.mxu0 0.0
    %2421 = vmatpush1.msra.mxu0 0.0
    %2422 = vmatprep.subr.mxu0 0.0
    %2423 = vmatpush1.msra.mxu0 0.0
    %2424 = vmatprep.subr.mxu0 0.0
    %2425 = vmatpush1.msra.mxu0 0.0
    %2426 = vmatprep.subr.mxu0 0.0
    %2427 = vmatpush1.msra.mxu0 0.0
    %2428 = vmatprep.subr.mxu0 0.0
    %2429 = vmatpush1.msra.mxu0 0.0
    %2430 = vmatprep.subr.mxu0 0.0
    %2431 = vmatpush1.msra.mxu0 0.0
    %2432 = vmatprep.subr.mxu0 0.0
    %2433 = vmatpush1.msra.mxu0 0.0
    %2434 = vmatprep.subr.mxu0 0.0
    %2435 = vmatpush1.msra.mxu0 0.0
    %2436 = vmatprep.subr.mxu0 0.0
    %2437 = vmatpush1.msra.mxu0 0.0
    %2438 = vmatprep.subr.mxu0 0.0
    %2439 = vmatpush1.msra.mxu0 0.0
    %2440 = vmatprep.subr.mxu0 0.0
    %2441 = vmatpush1.msra.mxu0 0.0
    %2442 = vmatprep.subr.mxu0 0.0
    %2443 = vmatpush1.msra.mxu0 0.0
    %2444 = vmatprep.subr.mxu0 0.0
    %2445 = vmatpush1.msra.mxu0 0.0
    %2446 = vmatprep.subr.mxu0 0.0
    %2447 = vmatpush1.msra.mxu0 0.0
    %2448 = vmatprep.mubr.f32.mxu0 0.0
    %v2449 = vand.u32 %v1146, 4294901760
    %2450 = vmatmul.mubr.f32.gmra.mrb[0].mxu0 %v2449
    %v2451 = vpop.f32.mrb[0].mxu0
    %v2452 = vadd.f32 %v2275, %v2451
    %v2453 = vpop.f32.mrb[0].mxu0
    %2454 = vmatprep.mubr.f32.mxu0 0.0
    %v2455 = vand.u32 %v1152, 4294901760
    %2456 = vmatmul.mubr.f32.gmra.mrb[0].mxu0 %v2455
    %v2457 = vpop.f32.mrb[0].mxu0
    %v2458 = vadd.f32 %v2281, %v2457
    %v2459 = vpop.f32.mrb[0].mxu0
    %2460 = vmatprep.mubr.f32.mxu0 0.0
    %v2461 = vand.u32 %v1158, 4294901760
    %2462 = vmatmul.mubr.f32.gmra.mrb[0].mxu0 %v2461
    %v2463 = vpop.f32.mrb[0].mxu0
    %v2464 = vadd.f32 %v2287, %v2463
    %v2465 = vpop.f32.mrb[0].mxu0
    %2466 = vmatprep.mubr.f32.mxu0 0.0
    %v2467 = vand.u32 %v1164, 4294901760
    %2468 = vmatmul.mubr.f32.gmra.mrb[0].mxu0 %v2467
    %v2469 = vpop.f32.mrb[0].mxu0
    %v2470 = vadd.f32 %v2293, %v2469
    %v2471 = vpop.f32.mrb[0].mxu0
    %2472 = vmatprep.mubr.f32.mxu0 0.0
    %v2473 = vand.u32 %v1170, 4294901760
    %2474 = vmatmul.mubr.f32.gmra.mrb[0].mxu0 %v2473
    %v2475 = vpop.f32.mrb[0].mxu0
    %v2476 = vadd.f32 %v2299, %v2475
    %v2477 = vpop.f32.mrb[0].mxu0
    %2478 = vmatprep.mubr.f32.mxu0 0.0
    %v2479 = vand.u32 %v1176, 4294901760
    %2480 = vmatmul.mubr.f32.gmra.mrb[0].mxu0 %v2479
    %v2481 = vpop.f32.mrb[0].mxu0
    %v2482 = vadd.f32 %v2305, %v2481
    %v2483 = vpop.f32.mrb[0].mxu0
    %2484 = vmatprep.mubr.f32.mxu0 0.0
    %v2485 = vand.u32 %v1182, 4294901760
    %2486 = vmatmul.mubr.f32.gmra.mrb[0].mxu0 %v2485
    %v2487 = vpop.f32.mrb[0].mxu0
    %v2488 = vadd.f32 %v2311, %v2487
    %v2489 = vpop.f32.mrb[0].mxu0
    %2490 = vmatprep.mubr.f32.mxu0 0.0
    %v2491 = vand.u32 %v1188, 4294901760
    %2492 = vmatmul.mubr.f32.gmra.mrb[0].mxu0 %v2491
    %v2493 = vpop.f32.mrb[0].mxu0
    %v2494 = vadd.f32 %v2317, %v2493
    %v2495 = vpop.f32.mrb[0].mxu0
    %2496 = vmatprep.mubr.f32.mxu0 0.0
    %v2497 = vand.u32 %v1194, 4294901760
    %2498 = vmatmul.mubr.f32.gmra.mrb[0].mxu0 %v2497
    %v2499 = vpop.f32.mrb[0].mxu0
    %v2500 = vadd.f32 %v2323, %v2499
    %v2501 = vpop.f32.mrb[0].mxu0
    %2502 = vmatprep.mubr.f32.mxu0 0.0
    %v2503 = vand.u32 %v1200, 4294901760
    %2504 = vmatmul.mubr.f32.gmra.mrb[0].mxu0 %v2503
    %v2505 = vpop.f32.mrb[0].mxu0
    %v2506 = vadd.f32 %v2329, %v2505
    %v2507 = vpop.f32.mrb[0].mxu0
    %2508 = vmatprep.mubr.f32.mxu0 0.0
    %v2509 = vand.u32 %v1206, 4294901760
    %2510 = vmatmul.mubr.f32.gmra.mrb[0].mxu0 %v2509
    %v2511 = vpop.f32.mrb[0].mxu0
    %v2512 = vadd.f32 %v2335, %v2511
    %v2513 = vpop.f32.mrb[0].mxu0
    %2514 = vmatprep.mubr.f32.mxu0 0.0
    %v2515 = vand.u32 %v1212, 4294901760
    %2516 = vmatmul.mubr.f32.gmra.mrb[0].mxu0 %v2515
    %v2517 = vpop.f32.mrb[0].mxu0
    %v2518 = vadd.f32 %v2341, %v2517
    %v2519 = vpop.f32.mrb[0].mxu0
    %2520 = vmatprep.mubr.f32.mxu0 0.0
    %v2521 = vand.u32 %v1218, 4294901760
    %2522 = vmatmul.mubr.f32.gmra.mrb[0].mxu0 %v2521
    %v2523 = vpop.f32.mrb[0].mxu0
    %v2524 = vadd.f32 %v2347, %v2523
    %v2525 = vpop.f32.mrb[0].mxu0
    %2526 = vmatprep.mubr.f32.mxu0 0.0
    %v2527 = vand.u32 %v1224, 4294901760
    %2528 = vmatmul.mubr.f32.gmra.mrb[0].mxu0 %v2527
    %v2529 = vpop.f32.mrb[0].mxu0
    %v2530 = vadd.f32 %v2353, %v2529
    %v2531 = vpop.f32.mrb[0].mxu0
    %2532 = vmatprep.mubr.f32.mxu0 0.0
    %v2533 = vand.u32 %v1230, 4294901760
    %2534 = vmatmul.mubr.f32.gmra.mrb[0].mxu0 %v2533
    %v2535 = vpop.f32.mrb[0].mxu0
    %v2536 = vadd.f32 %v2359, %v2535
    %v2537 = vpop.f32.mrb[0].mxu0
    %2538 = vmatprep.mubr.f32.mxu0 0.0
    %v2539 = vand.u32 %v1236, 4294901760
    %2540 = vmatmul.mubr.f32.gmra.mrb[0].mxu0 %v2539
    %v2541 = vpop.f32.mrb[0].mxu0
    %v2542 = vadd.f32 %v2365, %v2541
    %v2543 = vpop.f32.mrb[0].mxu0
    %2544 = vdwg.mxu0
    %v2545 = vtanh.pop %v2452
    %v2546 = vtanh.pop %v2458
    %v2547 = vtanh.pop %v2464
    %v2548 = vtanh.pop %v2470
    %v2549 = vtanh.pop %v2476
    %v2550 = vtanh.pop %v2482
    %v2551 = vtanh.pop %v2488
    %v2552 = vtanh.pop %v2494
    %v2553 = vtanh.pop %v2500
    %v2554 = vtanh.pop %v2506
    %v2555 = vtanh.pop %v2512
    %v2556 = vtanh.pop %v2518
    %v2557 = vtanh.pop %v2524
    %v2558 = vtanh.pop %v2530
    %v2559 = vtanh.pop %v2536
    %v2560 = vtanh.pop %v2542
    %v2561 = vld [vmem:[#allocation2] sm:$0xff]
    %v2562 = vld [vmem:[#allocation2 + $0x8] sm:$0xff]
    %v2563 = vld [vmem:[#allocation2 + $0x10] sm:$0xff]
    %v2564 = vld [vmem:[#allocation2 + $0x18] sm:$0xff]
    %v2565 = vld [vmem:[#allocation2 + $0x20] sm:$0xff]
    %v2566 = vld [vmem:[#allocation2 + $0x28] sm:$0xff]
    %v2567 = vld [vmem:[#allocation2 + $0x30] sm:$0xff]
    %v2568 = vld [vmem:[#allocation2 + $0x38] sm:$0xff]
    %v2569 = vld [vmem:[#allocation2 + $0x40] sm:$0xff]
    %v2570 = vld [vmem:[#allocation2 + $0x48] sm:$0xff]
    %v2571 = vld [vmem:[#allocation2 + $0x50] sm:$0xff]
    %v2572 = vld [vmem:[#allocation2 + $0x58] sm:$0xff]
    %v2573 = vld [vmem:[#allocation2 + $0x60] sm:$0xff]
    %v2574 = vld [vmem:[#allocation2 + $0x68] sm:$0xff]
    %v2575 = vld [vmem:[#allocation2 + $0x70] sm:$0xff]
    %v2576 = vld [vmem:[#allocation2 + $0x78] sm:$0xff]
    %v2577 = vlaneseq
    %v2578 = vshrl.u32 %v2577, 7
    %v2579 = vsub.s32 2, %v2578
    %v2580 = vrot.slane %v35, %v2579
    %2581 = vmatprep.subr.mxu0 0.0
    %v2582 = vand.u32 %v2561, 4294901760
    %2583 = vmatpush1.msra.mxu0 %v2582
    %2584 = vmatprep.subr.mxu0 0.0
    %v2585 = vand.u32 %v2562, 4294901760
    %2586 = vmatpush1.msra.mxu0 %v2585
    %2587 = vmatprep.subr.mxu0 0.0
    %v2588 = vand.u32 %v2563, 4294901760
    %2589 = vmatpush1.msra.mxu0 %v2588
    %2590 = vmatprep.subr.mxu0 0.0
    %v2591 = vand.u32 %v2564, 4294901760
    %2592 = vmatpush1.msra.mxu0 %v2591
    %2593 = vmatprep.subr.mxu0 0.0
    %v2594 = vand.u32 %v2565, 4294901760
    %2595 = vmatpush1.msra.mxu0 %v2594
    %2596 = vmatprep.subr.mxu0 0.0
    %v2597 = vand.u32 %v2566, 4294901760
    %2598 = vmatpush1.msra.mxu0 %v2597
    %2599 = vmatprep.subr.mxu0 0.0
    %v2600 = vand.u32 %v2567, 4294901760
    %2601 = vmatpush1.msra.mxu0 %v2600
    %2602 = vmatprep.subr.mxu0 0.0
    %v2603 = vand.u32 %v2568, 4294901760
    %2604 = vmatpush1.msra.mxu0 %v2603
    %2605 = vmatprep.subr.mxu0 0.0
    %v2606 = vand.u32 %v2569, 4294901760
    %2607 = vmatpush1.msra.mxu0 %v2606
    %2608 = vmatprep.subr.mxu0 0.0
    %v2609 = vand.u32 %v2570, 4294901760
    %2610 = vmatpush1.msra.mxu0 %v2609
    %2611 = vmatprep.subr.mxu0 0.0
    %v2612 = vand.u32 %v2571, 4294901760
    %2613 = vmatpush1.msra.mxu0 %v2612
    %2614 = vmatprep.subr.mxu0 0.0
    %v2615 = vand.u32 %v2572, 4294901760
    %2616 = vmatpush1.msra.mxu0 %v2615
    %2617 = vmatprep.subr.mxu0 0.0
    %v2618 = vand.u32 %v2573, 4294901760
    %2619 = vmatpush1.msra.mxu0 %v2618
    %2620 = vmatprep.subr.mxu0 0.0
    %v2621 = vand.u32 %v2574, 4294901760
    %2622 = vmatpush1.msra.mxu0 %v2621
    %2623 = vmatprep.subr.mxu0 0.0
    %v2624 = vand.u32 %v2575, 4294901760
    %2625 = vmatpush1.msra.mxu0 %v2624
    %2626 = vmatprep.subr.mxu0 0.0
    %v2627 = vand.u32 %v2576, 4294901760
    %2628 = vmatpush1.msra.mxu0 %v2627
    %2629 = vmatprep.subr.mxu0 0.0
    %2630 = vmatpush1.msra.mxu0 0.0
    %2631 = vmatprep.subr.mxu0 0.0
    %2632 = vmatpush1.msra.mxu0 0.0
    %2633 = vmatprep.subr.mxu0 0.0
    %2634 = vmatpush1.msra.mxu0 0.0
    %2635 = vmatprep.subr.mxu0 0.0
    %2636 = vmatpush1.msra.mxu0 0.0
    %2637 = vmatprep.subr.mxu0 0.0
    %2638 = vmatpush1.msra.mxu0 0.0
    %2639 = vmatprep.subr.mxu0 0.0
    %2640 = vmatpush1.msra.mxu0 0.0
    %2641 = vmatprep.subr.mxu0 0.0
    %2642 = vmatpush1.msra.mxu0 0.0
    %2643 = vmatprep.subr.mxu0 0.0
    %2644 = vmatpush1.msra.mxu0 0.0
    %2645 = vmatprep.subr.mxu0 0.0
    %2646 = vmatpush1.msra.mxu0 0.0
    %2647 = vmatprep.subr.mxu0 0.0
    %2648 = vmatpush1.msra.mxu0 0.0
    %2649 = vmatprep.subr.mxu0 0.0
    %2650 = vmatpush1.msra.mxu0 0.0
    %2651 = vmatprep.subr.mxu0 0.0
    %2652 = vmatpush1.msra.mxu0 0.0
    %2653 = vmatprep.subr.mxu0 0.0
    %2654 = vmatpush1.msra.mxu0 0.0
    %2655 = vmatprep.subr.mxu0 0.0
    %2656 = vmatpush1.msra.mxu0 0.0
    %2657 = vmatprep.subr.mxu0 0.0
    %2658 = vmatpush1.msra.mxu0 0.0
    %2659 = vmatprep.subr.mxu0 0.0
    %2660 = vmatpush1.msra.mxu0 0.0
    %2661 = vmatprep.mubr.f32.mxu0 0.0
    %v2662 = vand.u32 %v2545, 4294901760
    %v2663 = vsub.f32 %v2545, %v2662
    %v2664 = vand.u32 %v2663, 4294901760
    %v2665 = vsub.f32 %v2663, %v2664
    %v2666 = vand.u32 %v2665, 4294901760
    %2667 = vmatmul.mubr.f32.gmra.mrb[0].mxu0 %v2666
    %v2668 = vpop.f32.mrb[0].mxu0
    %v2669 = vadd.f32 %v2580, %v2668
    %v2670 = vpop.f32.mrb[0].mxu0
    %2671 = vmatprep.mubr.f32.mxu0 0.0
    %v2672 = vand.u32 %v2546, 4294901760
    %v2673 = vsub.f32 %v2546, %v2672
    %v2674 = vand.u32 %v2673, 4294901760
    %v2675 = vsub.f32 %v2673, %v2674
    %v2676 = vand.u32 %v2675, 4294901760
    %2677 = vmatmul.mubr.f32.gmra.mrb[0].mxu0 %v2676
    %v2678 = vpop.f32.mrb[0].mxu0
    %v2679 = vadd.f32 %v2580, %v2678
    %v2680 = vpop.f32.mrb[0].mxu0
    %2681 = vmatprep.mubr.f32.mxu0 0.0
    %v2682 = vand.u32 %v2547, 4294901760
    %v2683 = vsub.f32 %v2547, %v2682
    %v2684 = vand.u32 %v2683, 4294901760
    %v2685 = vsub.f32 %v2683, %v2684
    %v2686 = vand.u32 %v2685, 4294901760
    %2687 = vmatmul.mubr.f32.gmra.mrb[0].mxu0 %v2686
    %v2688 = vpop.f32.mrb[0].mxu0
    %v2689 = vadd.f32 %v2580, %v2688
    %v2690 = vpop.f32.mrb[0].mxu0
    %2691 = vmatprep.mubr.f32.mxu0 0.0
    %v2692 = vand.u32 %v2548, 4294901760
    %v2693 = vsub.f32 %v2548, %v2692
    %v2694 = vand.u32 %v2693, 4294901760
    %v2695 = vsub.f32 %v2693, %v2694
    %v2696 = vand.u32 %v2695, 4294901760
    %2697 = vmatmul.mubr.f32.gmra.mrb[0].mxu0 %v2696
    %v2698 = vpop.f32.mrb[0].mxu0
    %v2699 = vadd.f32 %v2580, %v2698
    %v2700 = vpop.f32.mrb[0].mxu0
    %2701 = vmatprep.mubr.f32.mxu0 0.0
    %v2702 = vand.u32 %v2549, 4294901760
    %v2703 = vsub.f32 %v2549, %v2702
    %v2704 = vand.u32 %v2703, 4294901760
    %v2705 = vsub.f32 %v2703, %v2704
    %v2706 = vand.u32 %v2705, 4294901760
    %2707 = vmatmul.mubr.f32.gmra.mrb[0].mxu0 %v2706
    %v2708 = vpop.f32.mrb[0].mxu0
    %v2709 = vadd.f32 %v2580, %v2708
    %v2710 = vpop.f32.mrb[0].mxu0
    %2711 = vmatprep.mubr.f32.mxu0 0.0
    %v2712 = vand.u32 %v2550, 4294901760
    %v2713 = vsub.f32 %v2550, %v2712
    %v2714 = vand.u32 %v2713, 4294901760
    %v2715 = vsub.f32 %v2713, %v2714
    %v2716 = vand.u32 %v2715, 4294901760
    %2717 = vmatmul.mubr.f32.gmra.mrb[0].mxu0 %v2716
    %v2718 = vpop.f32.mrb[0].mxu0
    %v2719 = vadd.f32 %v2580, %v2718
    %v2720 = vpop.f32.mrb[0].mxu0
    %2721 = vmatprep.mubr.f32.mxu0 0.0
    %v2722 = vand.u32 %v2551, 4294901760
    %v2723 = vsub.f32 %v2551, %v2722
    %v2724 = vand.u32 %v2723, 4294901760
    %v2725 = vsub.f32 %v2723, %v2724
    %v2726 = vand.u32 %v2725, 4294901760
    %2727 = vmatmul.mubr.f32.gmra.mrb[0].mxu0 %v2726
    %v2728 = vpop.f32.mrb[0].mxu0
    %v2729 = vadd.f32 %v2580, %v2728
    %v2730 = vpop.f32.mrb[0].mxu0
    %2731 = vmatprep.mubr.f32.mxu0 0.0
    %v2732 = vand.u32 %v2552, 4294901760
    %v2733 = vsub.f32 %v2552, %v2732
    %v2734 = vand.u32 %v2733, 4294901760
    %v2735 = vsub.f32 %v2733, %v2734
    %v2736 = vand.u32 %v2735, 4294901760
    %2737 = vmatmul.mubr.f32.gmra.mrb[0].mxu0 %v2736
    %v2738 = vpop.f32.mrb[0].mxu0
    %v2739 = vadd.f32 %v2580, %v2738
    %v2740 = vpop.f32.mrb[0].mxu0
    %2741 = vmatprep.mubr.f32.mxu0 0.0
    %v2742 = vand.u32 %v2553, 4294901760
    %v2743 = vsub.f32 %v2553, %v2742
    %v2744 = vand.u32 %v2743, 4294901760
    %v2745 = vsub.f32 %v2743, %v2744
    %v2746 = vand.u32 %v2745, 4294901760
    %2747 = vmatmul.mubr.f32.gmra.mrb[0].mxu0 %v2746
    %v2748 = vpop.f32.mrb[0].mxu0
    %v2749 = vadd.f32 %v2580, %v2748
    %v2750 = vpop.f32.mrb[0].mxu0
    %2751 = vmatprep.mubr.f32.mxu0 0.0
    %v2752 = vand.u32 %v2554, 4294901760
    %v2753 = vsub.f32 %v2554, %v2752
    %v2754 = vand.u32 %v2753, 4294901760
    %v2755 = vsub.f32 %v2753, %v2754
    %v2756 = vand.u32 %v2755, 4294901760
    %2757 = vmatmul.mubr.f32.gmra.mrb[0].mxu0 %v2756
    %v2758 = vpop.f32.mrb[0].mxu0
    %v2759 = vadd.f32 %v2580, %v2758
    %v2760 = vpop.f32.mrb[0].mxu0
    %2761 = vmatprep.mubr.f32.mxu0 0.0
    %v2762 = vand.u32 %v2555, 4294901760
    %v2763 = vsub.f32 %v2555, %v2762
    %v2764 = vand.u32 %v2763, 4294901760
    %v2765 = vsub.f32 %v2763, %v2764
    %v2766 = vand.u32 %v2765, 4294901760
    %2767 = vmatmul.mubr.f32.gmra.mrb[0].mxu0 %v2766
    %v2768 = vpop.f32.mrb[0].mxu0
    %v2769 = vadd.f32 %v2580, %v2768
    %v2770 = vpop.f32.mrb[0].mxu0
    %2771 = vmatprep.mubr.f32.mxu0 0.0
    %v2772 = vand.u32 %v2556, 4294901760
    %v2773 = vsub.f32 %v2556, %v2772
    %v2774 = vand.u32 %v2773, 4294901760
    %v2775 = vsub.f32 %v2773, %v2774
    %v2776 = vand.u32 %v2775, 4294901760
    %2777 = vmatmul.mubr.f32.gmra.mrb[0].mxu0 %v2776
    %v2778 = vpop.f32.mrb[0].mxu0
    %v2779 = vadd.f32 %v2580, %v2778
    %v2780 = vpop.f32.mrb[0].mxu0
    %2781 = vmatprep.mubr.f32.mxu0 0.0
    %v2782 = vand.u32 %v2557, 4294901760
    %v2783 = vsub.f32 %v2557, %v2782
    %v2784 = vand.u32 %v2783, 4294901760
    %v2785 = vsub.f32 %v2783, %v2784
    %v2786 = vand.u32 %v2785, 4294901760
    %2787 = vmatmul.mubr.f32.gmra.mrb[0].mxu0 %v2786
    %v2788 = vpop.f32.mrb[0].mxu0
    %v2789 = vadd.f32 %v2580, %v2788
    %v2790 = vpop.f32.mrb[0].mxu0
    %2791 = vmatprep.mubr.f32.mxu0 0.0
    %v2792 = vand.u32 %v2558, 4294901760
    %v2793 = vsub.f32 %v2558, %v2792
    %v2794 = vand.u32 %v2793, 4294901760
    %v2795 = vsub.f32 %v2793, %v2794
    %v2796 = vand.u32 %v2795, 4294901760
    %2797 = vmatmul.mubr.f32.gmra.mrb[0].mxu0 %v2796
    %v2798 = vpop.f32.mrb[0].mxu0
    %v2799 = vadd.f32 %v2580, %v2798
    %v2800 = vpop.f32.mrb[0].mxu0
    %2801 = vmatprep.mubr.f32.mxu0 0.0
    %v2802 = vand.u32 %v2559, 4294901760
    %v2803 = vsub.f32 %v2559, %v2802
    %v2804 = vand.u32 %v2803, 4294901760
    %v2805 = vsub.f32 %v2803, %v2804
    %v2806 = vand.u32 %v2805, 4294901760
    %2807 = vmatmul.mubr.f32.gmra.mrb[0].mxu0 %v2806
    %v2808 = vpop.f32.mrb[0].mxu0
    %v2809 = vadd.f32 %v2580, %v2808
    %v2810 = vpop.f32.mrb[0].mxu0
    %2811 = vmatprep.mubr.f32.mxu0 0.0
    %v2812 = vand.u32 %v2560, 4294901760
    %v2813 = vsub.f32 %v2560, %v2812
    %v2814 = vand.u32 %v2813, 4294901760
    %v2815 = vsub.f32 %v2813, %v2814
    %v2816 = vand.u32 %v2815, 4294901760
    %2817 = vmatmul.mubr.f32.gmra.mrb[0].mxu0 %v2816
    %v2818 = vpop.f32.mrb[0].mxu0
    %v2819 = vadd.f32 %v2580, %v2818
    %v2820 = vpop.f32.mrb[0].mxu0
    %2821 = vdwg.mxu0
    %2822 = vmatprep.subr.mxu0 0.0
    %v2823 = vand.u32 %v2561, 4294901760
    %v2824 = vsub.f32 %v2561, %v2823
    %v2825 = vand.u32 %v2824, 4294901760
    %v2826 = vsub.f32 %v2824, %v2825
    %v2827 = vand.u32 %v2826, 4294901760
    %2828 = vmatpush1.msra.mxu0 %v2827
    %2829 = vmatprep.subr.mxu0 0.0
    %v2830 = vand.u32 %v2562, 4294901760
    %v2831 = vsub.f32 %v2562, %v2830
    %v2832 = vand.u32 %v2831, 4294901760
    %v2833 = vsub.f32 %v2831, %v2832
    %v2834 = vand.u32 %v2833, 4294901760
    %2835 = vmatpush1.msra.mxu0 %v2834
    %2836 = vmatprep.subr.mxu0 0.0
    %v2837 = vand.u32 %v2563, 4294901760
    %v2838 = vsub.f32 %v2563, %v2837
    %v2839 = vand.u32 %v2838, 4294901760
    %v2840 = vsub.f32 %v2838, %v2839
    %v2841 = vand.u32 %v2840, 4294901760
    %2842 = vmatpush1.msra.mxu0 %v2841
    %2843 = vmatprep.subr.mxu0 0.0
    %v2844 = vand.u32 %v2564, 4294901760
    %v2845 = vsub.f32 %v2564, %v2844
    %v2846 = vand.u32 %v2845, 4294901760
    %v2847 = vsub.f32 %v2845, %v2846
    %v2848 = vand.u32 %v2847, 4294901760
    %2849 = vmatpush1.msra.mxu0 %v2848
    %2850 = vmatprep.subr.mxu0 0.0
    %v2851 = vand.u32 %v2565, 4294901760
    %v2852 = vsub.f32 %v2565, %v2851
    %v2853 = vand.u32 %v2852, 4294901760
    %v2854 = vsub.f32 %v2852, %v2853
    %v2855 = vand.u32 %v2854, 4294901760
    %2856 = vmatpush1.msra.mxu0 %v2855
    %2857 = vmatprep.subr.mxu0 0.0
    %v2858 = vand.u32 %v2566, 4294901760
    %v2859 = vsub.f32 %v2566, %v2858
    %v2860 = vand.u32 %v2859, 4294901760
    %v2861 = vsub.f32 %v2859, %v2860
    %v2862 = vand.u32 %v2861, 4294901760
    %2863 = vmatpush1.msra.mxu0 %v2862
    %2864 = vmatprep.subr.mxu0 0.0
    %v2865 = vand.u32 %v2567, 4294901760
    %v2866 = vsub.f32 %v2567, %v2865
    %v2867 = vand.u32 %v2866, 4294901760
    %v2868 = vsub.f32 %v2866, %v2867
    %v2869 = vand.u32 %v2868, 4294901760
    %2870 = vmatpush1.msra.mxu0 %v2869
    %2871 = vmatprep.subr.mxu0 0.0
    %v2872 = vand.u32 %v2568, 4294901760
    %v2873 = vsub.f32 %v2568, %v2872
    %v2874 = vand.u32 %v2873, 4294901760
    %v2875 = vsub.f32 %v2873, %v2874
    %v2876 = vand.u32 %v2875, 4294901760
    %2877 = vmatpush1.msra.mxu0 %v2876
    %2878 = vmatprep.subr.mxu0 0.0
    %v2879 = vand.u32 %v2569, 4294901760
    %v2880 = vsub.f32 %v2569, %v2879
    %v2881 = vand.u32 %v2880, 4294901760
    %v2882 = vsub.f32 %v2880, %v2881
    %v2883 = vand.u32 %v2882, 4294901760
    %2884 = vmatpush1.msra.mxu0 %v2883
    %2885 = vmatprep.subr.mxu0 0.0
    %v2886 = vand.u32 %v2570, 4294901760
    %v2887 = vsub.f32 %v2570, %v2886
    %v2888 = vand.u32 %v2887, 4294901760
    %v2889 = vsub.f32 %v2887, %v2888
    %v2890 = vand.u32 %v2889, 4294901760
    %2891 = vmatpush1.msra.mxu0 %v2890
    %2892 = vmatprep.subr.mxu0 0.0
    %v2893 = vand.u32 %v2571, 4294901760
    %v2894 = vsub.f32 %v2571, %v2893
    %v2895 = vand.u32 %v2894, 4294901760
    %v2896 = vsub.f32 %v2894, %v2895
    %v2897 = vand.u32 %v2896, 4294901760
    %2898 = vmatpush1.msra.mxu0 %v2897
    %2899 = vmatprep.subr.mxu0 0.0
    %v2900 = vand.u32 %v2572, 4294901760
    %v2901 = vsub.f32 %v2572, %v2900
    %v2902 = vand.u32 %v2901, 4294901760
    %v2903 = vsub.f32 %v2901, %v2902
    %v2904 = vand.u32 %v2903, 4294901760
    %2905 = vmatpush1.msra.mxu0 %v2904
    %2906 = vmatprep.subr.mxu0 0.0
    %v2907 = vand.u32 %v2573, 4294901760
    %v2908 = vsub.f32 %v2573, %v2907
    %v2909 = vand.u32 %v2908, 4294901760
    %v2910 = vsub.f32 %v2908, %v2909
    %v2911 = vand.u32 %v2910, 4294901760
    %2912 = vmatpush1.msra.mxu0 %v2911
    %2913 = vmatprep.subr.mxu0 0.0
    %v2914 = vand.u32 %v2574, 4294901760
    %v2915 = vsub.f32 %v2574, %v2914
    %v2916 = vand.u32 %v2915, 4294901760
    %v2917 = vsub.f32 %v2915, %v2916
    %v2918 = vand.u32 %v2917, 4294901760
    %2919 = vmatpush1.msra.mxu0 %v2918
    %2920 = vmatprep.subr.mxu0 0.0
    %v2921 = vand.u32 %v2575, 4294901760
    %v2922 = vsub.f32 %v2575, %v2921
    %v2923 = vand.u32 %v2922, 4294901760
    %v2924 = vsub.f32 %v2922, %v2923
    %v2925 = vand.u32 %v2924, 4294901760
    %2926 = vmatpush1.msra.mxu0 %v2925
    %2927 = vmatprep.subr.mxu0 0.0
    %v2928 = vand.u32 %v2576, 4294901760
    %v2929 = vsub.f32 %v2576, %v2928
    %v2930 = vand.u32 %v2929, 4294901760
    %v2931 = vsub.f32 %v2929, %v2930
    %v2932 = vand.u32 %v2931, 4294901760
    %2933 = vmatpush1.msra.mxu0 %v2932
    %2934 = vmatprep.subr.mxu0 0.0
    %2935 = vmatpush1.msra.mxu0 0.0
    %2936 = vmatprep.subr.mxu0 0.0
    %2937 = vmatpush1.msra.mxu0 0.0
    %2938 = vmatprep.subr.mxu0 0.0
    %2939 = vmatpush1.msra.mxu0 0.0
    %2940 = vmatprep.subr.mxu0 0.0
    %2941 = vmatpush1.msra.mxu0 0.0
    %2942 = vmatprep.subr.mxu0 0.0
    %2943 = vmatpush1.msra.mxu0 0.0
    %2944 = vmatprep.subr.mxu0 0.0
    %2945 = vmatpush1.msra.mxu0 0.0
    %2946 = vmatprep.subr.mxu0 0.0
    %2947 = vmatpush1.msra.mxu0 0.0
    %2948 = vmatprep.subr.mxu0 0.0
    %2949 = vmatpush1.msra.mxu0 0.0
    %2950 = vmatprep.subr.mxu0 0.0
    %2951 = vmatpush1.msra.mxu0 0.0
    %2952 = vmatprep.subr.mxu0 0.0
    %2953 = vmatpush1.msra.mxu0 0.0
    %2954 = vmatprep.subr.mxu0 0.0
    %2955 = vmatpush1.msra.mxu0 0.0
    %2956 = vmatprep.subr.mxu0 0.0
    %2957 = vmatpush1.msra.mxu0 0.0
    %2958 = vmatprep.subr.mxu0 0.0
    %2959 = vmatpush1.msra.mxu0 0.0
    %2960 = vmatprep.subr.mxu0 0.0
    %2961 = vmatpush1.msra.mxu0 0.0
    %2962 = vmatprep.subr.mxu0 0.0
    %2963 = vmatpush1.msra.mxu0 0.0
    %2964 = vmatprep.subr.mxu0 0.0
    %2965 = vmatpush1.msra.mxu0 0.0
    %2966 = vmatprep.mubr.f32.mxu0 0.0
    %v2967 = vand.u32 %v2545, 4294901760
    %2968 = vmatmul.mubr.f32.gmra.mrb[0].mxu0 %v2967
    %v2969 = vpop.f32.mrb[0].mxu0
    %v2970 = vadd.f32 %v2669, %v2969
    %v2971 = vpop.f32.mrb[0].mxu0
    %2972 = vmatprep.mubr.f32.mxu0 0.0
    %v2973 = vand.u32 %v2546, 4294901760
    %2974 = vmatmul.mubr.f32.gmra.mrb[0].mxu0 %v2973
    %v2975 = vpop.f32.mrb[0].mxu0
    %v2976 = vadd.f32 %v2679, %v2975
    %v2977 = vpop.f32.mrb[0].mxu0
    %2978 = vmatprep.mubr.f32.mxu0 0.0
    %v2979 = vand.u32 %v2547, 4294901760
    %2980 = vmatmul.mubr.f32.gmra.mrb[0].mxu0 %v2979
    %v2981 = vpop.f32.mrb[0].mxu0
    %v2982 = vadd.f32 %v2689, %v2981
    %v2983 = vpop.f32.mrb[0].mxu0
    %2984 = vmatprep.mubr.f32.mxu0 0.0
    %v2985 = vand.u32 %v2548, 4294901760
    %2986 = vmatmul.mubr.f32.gmra.mrb[0].mxu0 %v2985
    %v2987 = vpop.f32.mrb[0].mxu0
    %v2988 = vadd.f32 %v2699, %v2987
    %v2989 = vpop.f32.mrb[0].mxu0
    %2990 = vmatprep.mubr.f32.mxu0 0.0
    %v2991 = vand.u32 %v2549, 4294901760
    %2992 = vmatmul.mubr.f32.gmra.mrb[0].mxu0 %v2991
    %v2993 = vpop.f32.mrb[0].mxu0
    %v2994 = vadd.f32 %v2709, %v2993
    %v2995 = vpop.f32.mrb[0].mxu0
    %2996 = vmatprep.mubr.f32.mxu0 0.0
    %v2997 = vand.u32 %v2550, 4294901760
    %2998 = vmatmul.mubr.f32.gmra.mrb[0].mxu0 %v2997
    %v2999 = vpop.f32.mrb[0].mxu0
    %v3000 = vadd.f32 %v2719, %v2999
    %v3001 = vpop.f32.mrb[0].mxu0
    %3002 = vmatprep.mubr.f32.mxu0 0.0
    %v3003 = vand.u32 %v2551, 4294901760
    %3004 = vmatmul.mubr.f32.gmra.mrb[0].mxu0 %v3003
    %v3005 = vpop.f32.mrb[0].mxu0
    %v3006 = vadd.f32 %v2729, %v3005
    %v3007 = vpop.f32.mrb[0].mxu0
    %3008 = vmatprep.mubr.f32.mxu0 0.0
    %v3009 = vand.u32 %v2552, 4294901760
    %3010 = vmatmul.mubr.f32.gmra.mrb[0].mxu0 %v3009
    %v3011 = vpop.f32.mrb[0].mxu0
    %v3012 = vadd.f32 %v2739, %v3011
    %v3013 = vpop.f32.mrb[0].mxu0
    %3014 = vmatprep.mubr.f32.mxu0 0.0
    %v3015 = vand.u32 %v2553, 4294901760
    %3016 = vmatmul.mubr.f32.gmra.mrb[0].mxu0 %v3015
    %v3017 = vpop.f32.mrb[0].mxu0
    %v3018 = vadd.f32 %v2749, %v3017
    %v3019 = vpop.f32.mrb[0].mxu0
    %3020 = vmatprep.mubr.f32.mxu0 0.0
    %v3021 = vand.u32 %v2554, 4294901760
    %3022 = vmatmul.mubr.f32.gmra.mrb[0].mxu0 %v3021
    %v3023 = vpop.f32.mrb[0].mxu0
    %v3024 = vadd.f32 %v2759, %v3023
    %v3025 = vpop.f32.mrb[0].mxu0
    %3026 = vmatprep.mubr.f32.mxu0 0.0
    %v3027 = vand.u32 %v2555, 4294901760
    %3028 = vmatmul.mubr.f32.gmra.mrb[0].mxu0 %v3027
    %v3029 = vpop.f32.mrb[0].mxu0
    %v3030 = vadd.f32 %v2769, %v3029
    %v3031 = vpop.f32.mrb[0].mxu0
    %3032 = vmatprep.mubr.f32.mxu0 0.0
    %v3033 = vand.u32 %v2556, 4294901760
    %3034 = vmatmul.mubr.f32.gmra.mrb[0].mxu0 %v3033
    %v3035 = vpop.f32.mrb[0].mxu0
    %v3036 = vadd.f32 %v2779, %v3035
    %v3037 = vpop.f32.mrb[0].mxu0
    %3038 = vmatprep.mubr.f32.mxu0 0.0
    %v3039 = vand.u32 %v2557, 4294901760
    %3040 = vmatmul.mubr.f32.gmra.mrb[0].mxu0 %v3039
    %v3041 = vpop.f32.mrb[0].mxu0
    %v3042 = vadd.f32 %v2789, %v3041
    %v3043 = vpop.f32.mrb[0].mxu0
    %3044 = vmatprep.mubr.f32.mxu0 0.0
    %v3045 = vand.u32 %v2558, 4294901760
    %3046 = vmatmul.mubr.f32.gmra.mrb[0].mxu0 %v3045
    %v3047 = vpop.f32.mrb[0].mxu0
    %v3048 = vadd.f32 %v2799, %v3047
    %v3049 = vpop.f32.mrb[0].mxu0
    %3050 = vmatprep.mubr.f32.mxu0 0.0
    %v3051 = vand.u32 %v2559, 4294901760
    %3052 = vmatmul.mubr.f32.gmra.mrb[0].mxu0 %v3051
    %v3053 = vpop.f32.mrb[0].mxu0
    %v3054 = vadd.f32 %v2809, %v3053
    %v3055 = vpop.f32.mrb[0].mxu0
    %3056 = vmatprep.mubr.f32.mxu0 0.0
    %v3057 = vand.u32 %v2560, 4294901760
    %3058 = vmatmul.mubr.f32.gmra.mrb[0].mxu0 %v3057
    %v3059 = vpop.f32.mrb[0].mxu0
    %v3060 = vadd.f32 %v2819, %v3059
    %v3061 = vpop.f32.mrb[0].mxu0
    %3062 = vdwg.mxu0
    %3063 = vmatprep.subr.mxu0 0.0
    %v3064 = vand.u32 %v2561, 4294901760
    %v3065 = vsub.f32 %v2561, %v3064
    %3066 = vmatpush1.msra.mxu0 %v3065
    %3067 = vmatprep.subr.mxu0 0.0
    %v3068 = vand.u32 %v2562, 4294901760
    %v3069 = vsub.f32 %v2562, %v3068
    %3070 = vmatpush1.msra.mxu0 %v3069
    %3071 = vmatprep.subr.mxu0 0.0
    %v3072 = vand.u32 %v2563, 4294901760
    %v3073 = vsub.f32 %v2563, %v3072
    %3074 = vmatpush1.msra.mxu0 %v3073
    %3075 = vmatprep.subr.mxu0 0.0
    %v3076 = vand.u32 %v2564, 4294901760
    %v3077 = vsub.f32 %v2564, %v3076
    %3078 = vmatpush1.msra.mxu0 %v3077
    %3079 = vmatprep.subr.mxu0 0.0
    %v3080 = vand.u32 %v2565, 4294901760
    %v3081 = vsub.f32 %v2565, %v3080
    %3082 = vmatpush1.msra.mxu0 %v3081
    %3083 = vmatprep.subr.mxu0 0.0
    %v3084 = vand.u32 %v2566, 4294901760
    %v3085 = vsub.f32 %v2566, %v3084
    %3086 = vmatpush1.msra.mxu0 %v3085
    %3087 = vmatprep.subr.mxu0 0.0
    %v3088 = vand.u32 %v2567, 4294901760
    %v3089 = vsub.f32 %v2567, %v3088
    %3090 = vmatpush1.msra.mxu0 %v3089
    %3091 = vmatprep.subr.mxu0 0.0
    %v3092 = vand.u32 %v2568, 4294901760
    %v3093 = vsub.f32 %v2568, %v3092
    %3094 = vmatpush1.msra.mxu0 %v3093
    %3095 = vmatprep.subr.mxu0 0.0
    %v3096 = vand.u32 %v2569, 4294901760
    %v3097 = vsub.f32 %v2569, %v3096
    %3098 = vmatpush1.msra.mxu0 %v3097
    %3099 = vmatprep.subr.mxu0 0.0
    %v3100 = vand.u32 %v2570, 4294901760
    %v3101 = vsub.f32 %v2570, %v3100
    %3102 = vmatpush1.msra.mxu0 %v3101
    %3103 = vmatprep.subr.mxu0 0.0
    %v3104 = vand.u32 %v2571, 4294901760
    %v3105 = vsub.f32 %v2571, %v3104
    %3106 = vmatpush1.msra.mxu0 %v3105
    %3107 = vmatprep.subr.mxu0 0.0
    %v3108 = vand.u32 %v2572, 4294901760
    %v3109 = vsub.f32 %v2572, %v3108
    %3110 = vmatpush1.msra.mxu0 %v3109
    %3111 = vmatprep.subr.mxu0 0.0
    %v3112 = vand.u32 %v2573, 4294901760
    %v3113 = vsub.f32 %v2573, %v3112
    %3114 = vmatpush1.msra.mxu0 %v3113
    %3115 = vmatprep.subr.mxu0 0.0
    %v3116 = vand.u32 %v2574, 4294901760
    %v3117 = vsub.f32 %v2574, %v3116
    %3118 = vmatpush1.msra.mxu0 %v3117
    %3119 = vmatprep.subr.mxu0 0.0
    %v3120 = vand.u32 %v2575, 4294901760
    %v3121 = vsub.f32 %v2575, %v3120
    %3122 = vmatpush1.msra.mxu0 %v3121
    %3123 = vmatprep.subr.mxu0 0.0
    %v3124 = vand.u32 %v2576, 4294901760
    %v3125 = vsub.f32 %v2576, %v3124
    %3126 = vmatpush1.msra.mxu0 %v3125
    %3127 = vmatprep.subr.mxu0 0.0
    %3128 = vmatpush1.msra.mxu0 0.0
    %3129 = vmatprep.subr.mxu0 0.0
    %3130 = vmatpush1.msra.mxu0 0.0
    %3131 = vmatprep.subr.mxu0 0.0
    %3132 = vmatpush1.msra.mxu0 0.0
    %3133 = vmatprep.subr.mxu0 0.0
    %3134 = vmatpush1.msra.mxu0 0.0
    %3135 = vmatprep.subr.mxu0 0.0
    %3136 = vmatpush1.msra.mxu0 0.0
    %3137 = vmatprep.subr.mxu0 0.0
    %3138 = vmatpush1.msra.mxu0 0.0
    %3139 = vmatprep.subr.mxu0 0.0
    %3140 = vmatpush1.msra.mxu0 0.0
    %3141 = vmatprep.subr.mxu0 0.0
    %3142 = vmatpush1.msra.mxu0 0.0
    %3143 = vmatprep.subr.mxu0 0.0
    %3144 = vmatpush1.msra.mxu0 0.0
    %3145 = vmatprep.subr.mxu0 0.0
    %3146 = vmatpush1.msra.mxu0 0.0
    %3147 = vmatprep.subr.mxu0 0.0
    %3148 = vmatpush1.msra.mxu0 0.0
    %3149 = vmatprep.subr.mxu0 0.0
    %3150 = vmatpush1.msra.mxu0 0.0
    %3151 = vmatprep.subr.mxu0 0.0
    %3152 = vmatpush1.msra.mxu0 0.0
    %3153 = vmatprep.subr.mxu0 0.0
    %3154 = vmatpush1.msra.mxu0 0.0
    %3155 = vmatprep.subr.mxu0 0.0
    %3156 = vmatpush1.msra.mxu0 0.0
    %3157 = vmatprep.subr.mxu0 0.0
    %3158 = vmatpush1.msra.mxu0 0.0
    %3159 = vmatprep.mubr.f32.mxu0 0.0
    %v3160 = vand.u32 %v2545, 4294901760
    %v3161 = vsub.f32 %v2545, %v3160
    %3162 = vmatmul.mubr.f32.gmra.mrb[0].mxu0 %v3161
    %v3163 = vpop.f32.mrb[0].mxu0
    %v3164 = vadd.f32 %v2970, %v3163
    %v3165 = vpop.f32.mrb[0].mxu0
    %3166 = vmatprep.mubr.f32.mxu0 0.0
    %v3167 = vand.u32 %v2546, 4294901760
    %v3168 = vsub.f32 %v2546, %v3167
    %3169 = vmatmul.mubr.f32.gmra.mrb[0].mxu0 %v3168
    %v3170 = vpop.f32.mrb[0].mxu0
    %v3171 = vadd.f32 %v2976, %v3170
    %v3172 = vpop.f32.mrb[0].mxu0
    %3173 = vmatprep.mubr.f32.mxu0 0.0
    %v3174 = vand.u32 %v2547, 4294901760
    %v3175 = vsub.f32 %v2547, %v3174
    %3176 = vmatmul.mubr.f32.gmra.mrb[0].mxu0 %v3175
    %v3177 = vpop.f32.mrb[0].mxu0
    %v3178 = vadd.f32 %v2982, %v3177
    %v3179 = vpop.f32.mrb[0].mxu0
    %3180 = vmatprep.mubr.f32.mxu0 0.0
    %v3181 = vand.u32 %v2548, 4294901760
    %v3182 = vsub.f32 %v2548, %v3181
    %3183 = vmatmul.mubr.f32.gmra.mrb[0].mxu0 %v3182
    %v3184 = vpop.f32.mrb[0].mxu0
    %v3185 = vadd.f32 %v2988, %v3184
    %v3186 = vpop.f32.mrb[0].mxu0
    %3187 = vmatprep.mubr.f32.mxu0 0.0
    %v3188 = vand.u32 %v2549, 4294901760
    %v3189 = vsub.f32 %v2549, %v3188
    %3190 = vmatmul.mubr.f32.gmra.mrb[0].mxu0 %v3189
    %v3191 = vpop.f32.mrb[0].mxu0
    %v3192 = vadd.f32 %v2994, %v3191
    %v3193 = vpop.f32.mrb[0].mxu0
    %3194 = vmatprep.mubr.f32.mxu0 0.0
    %v3195 = vand.u32 %v2550, 4294901760
    %v3196 = vsub.f32 %v2550, %v3195
    %3197 = vmatmul.mubr.f32.gmra.mrb[0].mxu0 %v3196
    %v3198 = vpop.f32.mrb[0].mxu0
    %v3199 = vadd.f32 %v3000, %v3198
    %v3200 = vpop.f32.mrb[0].mxu0
    %3201 = vmatprep.mubr.f32.mxu0 0.0
    %v3202 = vand.u32 %v2551, 4294901760
    %v3203 = vsub.f32 %v2551, %v3202
    %3204 = vmatmul.mubr.f32.gmra.mrb[0].mxu0 %v3203
    %v3205 = vpop.f32.mrb[0].mxu0
    %v3206 = vadd.f32 %v3006, %v3205
    %v3207 = vpop.f32.mrb[0].mxu0
    %3208 = vmatprep.mubr.f32.mxu0 0.0
    %v3209 = vand.u32 %v2552, 4294901760
    %v3210 = vsub.f32 %v2552, %v3209
    %3211 = vmatmul.mubr.f32.gmra.mrb[0].mxu0 %v3210
    %v3212 = vpop.f32.mrb[0].mxu0
    %v3213 = vadd.f32 %v3012, %v3212
    %v3214 = vpop.f32.mrb[0].mxu0
    %3215 = vmatprep.mubr.f32.mxu0 0.0
    %v3216 = vand.u32 %v2553, 4294901760
    %v3217 = vsub.f32 %v2553, %v3216
    %3218 = vmatmul.mubr.f32.gmra.mrb[0].mxu0 %v3217
    %v3219 = vpop.f32.mrb[0].mxu0
    %v3220 = vadd.f32 %v3018, %v3219
    %v3221 = vpop.f32.mrb[0].mxu0
    %3222 = vmatprep.mubr.f32.mxu0 0.0
    %v3223 = vand.u32 %v2554, 4294901760
    %v3224 = vsub.f32 %v2554, %v3223
    %3225 = vmatmul.mubr.f32.gmra.mrb[0].mxu0 %v3224
    %v3226 = vpop.f32.mrb[0].mxu0
    %v3227 = vadd.f32 %v3024, %v3226
    %v3228 = vpop.f32.mrb[0].mxu0
    %3229 = vmatprep.mubr.f32.mxu0 0.0
    %v3230 = vand.u32 %v2555, 4294901760
    %v3231 = vsub.f32 %v2555, %v3230
    %3232 = vmatmul.mubr.f32.gmra.mrb[0].mxu0 %v3231
    %v3233 = vpop.f32.mrb[0].mxu0
    %v3234 = vadd.f32 %v3030, %v3233
    %v3235 = vpop.f32.mrb[0].mxu0
    %3236 = vmatprep.mubr.f32.mxu0 0.0
    %v3237 = vand.u32 %v2556, 4294901760
    %v3238 = vsub.f32 %v2556, %v3237
    %3239 = vmatmul.mubr.f32.gmra.mrb[0].mxu0 %v3238
    %v3240 = vpop.f32.mrb[0].mxu0
    %v3241 = vadd.f32 %v3036, %v3240
    %v3242 = vpop.f32.mrb[0].mxu0
    %3243 = vmatprep.mubr.f32.mxu0 0.0
    %v3244 = vand.u32 %v2557, 4294901760
    %v3245 = vsub.f32 %v2557, %v3244
    %3246 = vmatmul.mubr.f32.gmra.mrb[0].mxu0 %v3245
    %v3247 = vpop.f32.mrb[0].mxu0
    %v3248 = vadd.f32 %v3042, %v3247
    %v3249 = vpop.f32.mrb[0].mxu0
    %3250 = vmatprep.mubr.f32.mxu0 0.0
    %v3251 = vand.u32 %v2558, 4294901760
    %v3252 = vsub.f32 %v2558, %v3251
    %3253 = vmatmul.mubr.f32.gmra.mrb[0].mxu0 %v3252
    %v3254 = vpop.f32.mrb[0].mxu0
    %v3255 = vadd.f32 %v3048, %v3254
    %v3256 = vpop.f32.mrb[0].mxu0
    %3257 = vmatprep.mubr.f32.mxu0 0.0
    %v3258 = vand.u32 %v2559, 4294901760
    %v3259 = vsub.f32 %v2559, %v3258
    %3260 = vmatmul.mubr.f32.gmra.mrb[0].mxu0 %v3259
    %v3261 = vpop.f32.mrb[0].mxu0
    %v3262 = vadd.f32 %v3054, %v3261
    %v3263 = vpop.f32.mrb[0].mxu0
    %3264 = vmatprep.mubr.f32.mxu0 0.0
    %v3265 = vand.u32 %v2560, 4294901760
    %v3266 = vsub.f32 %v2560, %v3265
    %3267 = vmatmul.mubr.f32.gmra.mrb[0].mxu0 %v3266
    %v3268 = vpop.f32.mrb[0].mxu0
    %v3269 = vadd.f32 %v3060, %v3268
    %v3270 = vpop.f32.mrb[0].mxu0
    %3271 = vdwg.mxu0
    %3272 = vmatprep.subr.mxu0 0.0
    %v3273 = vand.u32 %v2561, 4294901760
    %3274 = vmatpush1.msra.mxu0 %v3273
    %3275 = vmatprep.subr.mxu0 0.0
    %v3276 = vand.u32 %v2562, 4294901760
    %3277 = vmatpush1.msra.mxu0 %v3276
    %3278 = vmatprep.subr.mxu0 0.0
    %v3279 = vand.u32 %v2563, 4294901760
    %3280 = vmatpush1.msra.mxu0 %v3279
    %3281 = vmatprep.subr.mxu0 0.0
    %v3282 = vand.u32 %v2564, 4294901760
    %3283 = vmatpush1.msra.mxu0 %v3282
    %3284 = vmatprep.subr.mxu0 0.0
    %v3285 = vand.u32 %v2565, 4294901760
    %3286 = vmatpush1.msra.mxu0 %v3285
    %3287 = vmatprep.subr.mxu0 0.0
    %v3288 = vand.u32 %v2566, 4294901760
    %3289 = vmatpush1.msra.mxu0 %v3288
    %3290 = vmatprep.subr.mxu0 0.0
    %v3291 = vand.u32 %v2567, 4294901760
    %3292 = vmatpush1.msra.mxu0 %v3291
    %3293 = vmatprep.subr.mxu0 0.0
    %v3294 = vand.u32 %v2568, 4294901760
    %3295 = vmatpush1.msra.mxu0 %v3294
    %3296 = vmatprep.subr.mxu0 0.0
    %v3297 = vand.u32 %v2569, 4294901760
    %3298 = vmatpush1.msra.mxu0 %v3297
    %3299 = vmatprep.subr.mxu0 0.0
    %v3300 = vand.u32 %v2570, 4294901760
    %3301 = vmatpush1.msra.mxu0 %v3300
    %3302 = vmatprep.subr.mxu0 0.0
    %v3303 = vand.u32 %v2571, 4294901760
    %3304 = vmatpush1.msra.mxu0 %v3303
    %3305 = vmatprep.subr.mxu0 0.0
    %v3306 = vand.u32 %v2572, 4294901760
    %3307 = vmatpush1.msra.mxu0 %v3306
    %3308 = vmatprep.subr.mxu0 0.0
    %v3309 = vand.u32 %v2573, 4294901760
    %3310 = vmatpush1.msra.mxu0 %v3309
    %3311 = vmatprep.subr.mxu0 0.0
    %v3312 = vand.u32 %v2574, 4294901760
    %3313 = vmatpush1.msra.mxu0 %v3312
    %3314 = vmatprep.subr.mxu0 0.0
    %v3315 = vand.u32 %v2575, 4294901760
    %3316 = vmatpush1.msra.mxu0 %v3315
    %3317 = vmatprep.subr.mxu0 0.0
    %v3318 = vand.u32 %v2576, 4294901760
    %3319 = vmatpush1.msra.mxu0 %v3318
    %3320 = vmatprep.subr.mxu0 0.0
    %3321 = vmatpush1.msra.mxu0 0.0
    %3322 = vmatprep.subr.mxu0 0.0
    %3323 = vmatpush1.msra.mxu0 0.0
    %3324 = vmatprep.subr.mxu0 0.0
    %3325 = vmatpush1.msra.mxu0 0.0
    %3326 = vmatprep.subr.mxu0 0.0
    %3327 = vmatpush1.msra.mxu0 0.0
    %3328 = vmatprep.subr.mxu0 0.0
    %3329 = vmatpush1.msra.mxu0 0.0
    %3330 = vmatprep.subr.mxu0 0.0
    %3331 = vmatpush1.msra.mxu0 0.0
    %3332 = vmatprep.subr.mxu0 0.0
    %3333 = vmatpush1.msra.mxu0 0.0
    %3334 = vmatprep.subr.mxu0 0.0
    %3335 = vmatpush1.msra.mxu0 0.0
    %3336 = vmatprep.subr.mxu0 0.0
    %3337 = vmatpush1.msra.mxu0 0.0
    %3338 = vmatprep.subr.mxu0 0.0
    %3339 = vmatpush1.msra.mxu0 0.0
    %3340 = vmatprep.subr.mxu0 0.0
    %3341 = vmatpush1.msra.mxu0 0.0
    %3342 = vmatprep.subr.mxu0 0.0
    %3343 = vmatpush1.msra.mxu0 0.0
    %3344 = vmatprep.subr.mxu0 0.0
    %3345 = vmatpush1.msra.mxu0 0.0
    %3346 = vmatprep.subr.mxu0 0.0
    %3347 = vmatpush1.msra.mxu0 0.0
    %3348 = vmatprep.subr.mxu0 0.0
    %3349 = vmatpush1.msra.mxu0 0.0
    %3350 = vmatprep.subr.mxu0 0.0
    %3351 = vmatpush1.msra.mxu0 0.0
    %3352 = vmatprep.mubr.f32.mxu0 0.0
    %v3353 = vand.u32 %v2545, 4294901760
    %v3354 = vsub.f32 %v2545, %v3353
    %v3355 = vand.u32 %v3354, 4294901760
    %3356 = vmatmul.mubr.f32.gmra.mrb[0].mxu0 %v3355
    %v3357 = vpop.f32.mrb[0].mxu0
    %v3358 = vadd.f32 %v3164, %v3357
    %v3359 = vpop.f32.mrb[0].mxu0
    %3360 = vmatprep.mubr.f32.mxu0 0.0
    %v3361 = vand.u32 %v2546, 4294901760
    %v3362 = vsub.f32 %v2546, %v3361
    %v3363 = vand.u32 %v3362, 4294901760
    %3364 = vmatmul.mubr.f32.gmra.mrb[0].mxu0 %v3363
    %v3365 = vpop.f32.mrb[0].mxu0
    %v3366 = vadd.f32 %v3171, %v3365
    %v3367 = vpop.f32.mrb[0].mxu0
    %3368 = vmatprep.mubr.f32.mxu0 0.0
    %v3369 = vand.u32 %v2547, 4294901760
    %v3370 = vsub.f32 %v2547, %v3369
    %v3371 = vand.u32 %v3370, 4294901760
    %3372 = vmatmul.mubr.f32.gmra.mrb[0].mxu0 %v3371
    %v3373 = vpop.f32.mrb[0].mxu0
    %v3374 = vadd.f32 %v3178, %v3373
    %v3375 = vpop.f32.mrb[0].mxu0
    %3376 = vmatprep.mubr.f32.mxu0 0.0
    %v3377 = vand.u32 %v2548, 4294901760
    %v3378 = vsub.f32 %v2548, %v3377
    %v3379 = vand.u32 %v3378, 4294901760
    %3380 = vmatmul.mubr.f32.gmra.mrb[0].mxu0 %v3379
    %v3381 = vpop.f32.mrb[0].mxu0
    %v3382 = vadd.f32 %v3185, %v3381
    %v3383 = vpop.f32.mrb[0].mxu0
    %3384 = vmatprep.mubr.f32.mxu0 0.0
    %v3385 = vand.u32 %v2549, 4294901760
    %v3386 = vsub.f32 %v2549, %v3385
    %v3387 = vand.u32 %v3386, 4294901760
    %3388 = vmatmul.mubr.f32.gmra.mrb[0].mxu0 %v3387
    %v3389 = vpop.f32.mrb[0].mxu0
    %v3390 = vadd.f32 %v3192, %v3389
    %v3391 = vpop.f32.mrb[0].mxu0
    %3392 = vmatprep.mubr.f32.mxu0 0.0
    %v3393 = vand.u32 %v2550, 4294901760
    %v3394 = vsub.f32 %v2550, %v3393
    %v3395 = vand.u32 %v3394, 4294901760
    %3396 = vmatmul.mubr.f32.gmra.mrb[0].mxu0 %v3395
    %v3397 = vpop.f32.mrb[0].mxu0
    %v3398 = vadd.f32 %v3199, %v3397
    %v3399 = vpop.f32.mrb[0].mxu0
    %3400 = vmatprep.mubr.f32.mxu0 0.0
    %v3401 = vand.u32 %v2551, 4294901760
    %v3402 = vsub.f32 %v2551, %v3401
    %v3403 = vand.u32 %v3402, 4294901760
    %3404 = vmatmul.mubr.f32.gmra.mrb[0].mxu0 %v3403
    %v3405 = vpop.f32.mrb[0].mxu0
    %v3406 = vadd.f32 %v3206, %v3405
    %v3407 = vpop.f32.mrb[0].mxu0
    %3408 = vmatprep.mubr.f32.mxu0 0.0
    %v3409 = vand.u32 %v2552, 4294901760
    %v3410 = vsub.f32 %v2552, %v3409
    %v3411 = vand.u32 %v3410, 4294901760
    %3412 = vmatmul.mubr.f32.gmra.mrb[0].mxu0 %v3411
    %v3413 = vpop.f32.mrb[0].mxu0
    %v3414 = vadd.f32 %v3213, %v3413
    %v3415 = vpop.f32.mrb[0].mxu0
    %3416 = vmatprep.mubr.f32.mxu0 0.0
    %v3417 = vand.u32 %v2553, 4294901760
    %v3418 = vsub.f32 %v2553, %v3417
    %v3419 = vand.u32 %v3418, 4294901760
    %3420 = vmatmul.mubr.f32.gmra.mrb[0].mxu0 %v3419
    %v3421 = vpop.f32.mrb[0].mxu0
    %v3422 = vadd.f32 %v3220, %v3421
    %v3423 = vpop.f32.mrb[0].mxu0
    %3424 = vmatprep.mubr.f32.mxu0 0.0
    %v3425 = vand.u32 %v2554, 4294901760
    %v3426 = vsub.f32 %v2554, %v3425
    %v3427 = vand.u32 %v3426, 4294901760
    %3428 = vmatmul.mubr.f32.gmra.mrb[0].mxu0 %v3427
    %v3429 = vpop.f32.mrb[0].mxu0
    %v3430 = vadd.f32 %v3227, %v3429
    %v3431 = vpop.f32.mrb[0].mxu0
    %3432 = vmatprep.mubr.f32.mxu0 0.0
    %v3433 = vand.u32 %v2555, 4294901760
    %v3434 = vsub.f32 %v2555, %v3433
    %v3435 = vand.u32 %v3434, 4294901760
    %3436 = vmatmul.mubr.f32.gmra.mrb[0].mxu0 %v3435
    %v3437 = vpop.f32.mrb[0].mxu0
    %v3438 = vadd.f32 %v3234, %v3437
    %v3439 = vpop.f32.mrb[0].mxu0
    %3440 = vmatprep.mubr.f32.mxu0 0.0
    %v3441 = vand.u32 %v2556, 4294901760
    %v3442 = vsub.f32 %v2556, %v3441
    %v3443 = vand.u32 %v3442, 4294901760
    %3444 = vmatmul.mubr.f32.gmra.mrb[0].mxu0 %v3443
    %v3445 = vpop.f32.mrb[0].mxu0
    %v3446 = vadd.f32 %v3241, %v3445
    %v3447 = vpop.f32.mrb[0].mxu0
    %3448 = vmatprep.mubr.f32.mxu0 0.0
    %v3449 = vand.u32 %v2557, 4294901760
    %v3450 = vsub.f32 %v2557, %v3449
    %v3451 = vand.u32 %v3450, 4294901760
    %3452 = vmatmul.mubr.f32.gmra.mrb[0].mxu0 %v3451
    %v3453 = vpop.f32.mrb[0].mxu0
    %v3454 = vadd.f32 %v3248, %v3453
    %v3455 = vpop.f32.mrb[0].mxu0
    %3456 = vmatprep.mubr.f32.mxu0 0.0
    %v3457 = vand.u32 %v2558, 4294901760
    %v3458 = vsub.f32 %v2558, %v3457
    %v3459 = vand.u32 %v3458, 4294901760
    %3460 = vmatmul.mubr.f32.gmra.mrb[0].mxu0 %v3459
    %v3461 = vpop.f32.mrb[0].mxu0
    %v3462 = vadd.f32 %v3255, %v3461
    %v3463 = vpop.f32.mrb[0].mxu0
    %3464 = vmatprep.mubr.f32.mxu0 0.0
    %v3465 = vand.u32 %v2559, 4294901760
    %v3466 = vsub.f32 %v2559, %v3465
    %v3467 = vand.u32 %v3466, 4294901760
    %3468 = vmatmul.mubr.f32.gmra.mrb[0].mxu0 %v3467
    %v3469 = vpop.f32.mrb[0].mxu0
    %v3470 = vadd.f32 %v3262, %v3469
    %v3471 = vpop.f32.mrb[0].mxu0
    %3472 = vmatprep.mubr.f32.mxu0 0.0
    %v3473 = vand.u32 %v2560, 4294901760
    %v3474 = vsub.f32 %v2560, %v3473
    %v3475 = vand.u32 %v3474, 4294901760
    %3476 = vmatmul.mubr.f32.gmra.mrb[0].mxu0 %v3475
    %v3477 = vpop.f32.mrb[0].mxu0
    %v3478 = vadd.f32 %v3269, %v3477
    %v3479 = vpop.f32.mrb[0].mxu0
    %3480 = vdwg.mxu0
    %3481 = vmatprep.subr.mxu0 0.0
    %v3482 = vand.u32 %v2561, 4294901760
    %v3483 = vsub.f32 %v2561, %v3482
    %v3484 = vand.u32 %v3483, 4294901760
    %3485 = vmatpush1.msra.mxu0 %v3484
    %3486 = vmatprep.subr.mxu0 0.0
    %v3487 = vand.u32 %v2562, 4294901760
    %v3488 = vsub.f32 %v2562, %v3487
    %v3489 = vand.u32 %v3488, 4294901760
    %3490 = vmatpush1.msra.mxu0 %v3489
    %3491 = vmatprep.subr.mxu0 0.0
    %v3492 = vand.u32 %v2563, 4294901760
    %v3493 = vsub.f32 %v2563, %v3492
    %v3494 = vand.u32 %v3493, 4294901760
    %3495 = vmatpush1.msra.mxu0 %v3494
    %3496 = vmatprep.subr.mxu0 0.0
    %v3497 = vand.u32 %v2564, 4294901760
    %v3498 = vsub.f32 %v2564, %v3497
    %v3499 = vand.u32 %v3498, 4294901760
    %3500 = vmatpush1.msra.mxu0 %v3499
    %3501 = vmatprep.subr.mxu0 0.0
    %v3502 = vand.u32 %v2565, 4294901760
    %v3503 = vsub.f32 %v2565, %v3502
    %v3504 = vand.u32 %v3503, 4294901760
    %3505 = vmatpush1.msra.mxu0 %v3504
    %3506 = vmatprep.subr.mxu0 0.0
    %v3507 = vand.u32 %v2566, 4294901760
    %v3508 = vsub.f32 %v2566, %v3507
    %v3509 = vand.u32 %v3508, 4294901760
    %3510 = vmatpush1.msra.mxu0 %v3509
    %3511 = vmatprep.subr.mxu0 0.0
    %v3512 = vand.u32 %v2567, 4294901760
    %v3513 = vsub.f32 %v2567, %v3512
    %v3514 = vand.u32 %v3513, 4294901760
    %3515 = vmatpush1.msra.mxu0 %v3514
    %3516 = vmatprep.subr.mxu0 0.0
    %v3517 = vand.u32 %v2568, 4294901760
    %v3518 = vsub.f32 %v2568, %v3517
    %v3519 = vand.u32 %v3518, 4294901760
    %3520 = vmatpush1.msra.mxu0 %v3519
    %3521 = vmatprep.subr.mxu0 0.0
    %v3522 = vand.u32 %v2569, 4294901760
    %v3523 = vsub.f32 %v2569, %v3522
    %v3524 = vand.u32 %v3523, 4294901760
    %3525 = vmatpush1.msra.mxu0 %v3524
    %3526 = vmatprep.subr.mxu0 0.0
    %v3527 = vand.u32 %v2570, 4294901760
    %v3528 = vsub.f32 %v2570, %v3527
    %v3529 = vand.u32 %v3528, 4294901760
    %3530 = vmatpush1.msra.mxu0 %v3529
    %3531 = vmatprep.subr.mxu0 0.0
    %v3532 = vand.u32 %v2571, 4294901760
    %v3533 = vsub.f32 %v2571, %v3532
    %v3534 = vand.u32 %v3533, 4294901760
    %3535 = vmatpush1.msra.mxu0 %v3534
    %3536 = vmatprep.subr.mxu0 0.0
    %v3537 = vand.u32 %v2572, 4294901760
    %v3538 = vsub.f32 %v2572, %v3537
    %v3539 = vand.u32 %v3538, 4294901760
    %3540 = vmatpush1.msra.mxu0 %v3539
    %3541 = vmatprep.subr.mxu0 0.0
    %v3542 = vand.u32 %v2573, 4294901760
    %v3543 = vsub.f32 %v2573, %v3542
    %v3544 = vand.u32 %v3543, 4294901760
    %3545 = vmatpush1.msra.mxu0 %v3544
    %3546 = vmatprep.subr.mxu0 0.0
    %v3547 = vand.u32 %v2574, 4294901760
    %v3548 = vsub.f32 %v2574, %v3547
    %v3549 = vand.u32 %v3548, 4294901760
    %3550 = vmatpush1.msra.mxu0 %v3549
    %3551 = vmatprep.subr.mxu0 0.0
    %v3552 = vand.u32 %v2575, 4294901760
    %v3553 = vsub.f32 %v2575, %v3552
    %v3554 = vand.u32 %v3553, 4294901760
    %3555 = vmatpush1.msra.mxu0 %v3554
    %3556 = vmatprep.subr.mxu0 0.0
    %v3557 = vand.u32 %v2576, 4294901760
    %v3558 = vsub.f32 %v2576, %v3557
    %v3559 = vand.u32 %v3558, 4294901760
    %3560 = vmatpush1.msra.mxu0 %v3559
    %3561 = vmatprep.subr.mxu0 0.0
    %3562 = vmatpush1.msra.mxu0 0.0
    %3563 = vmatprep.subr.mxu0 0.0
    %3564 = vmatpush1.msra.mxu0 0.0
    %3565 = vmatprep.subr.mxu0 0.0
    %3566 = vmatpush1.msra.mxu0 0.0
    %3567 = vmatprep.subr.mxu0 0.0
    %3568 = vmatpush1.msra.mxu0 0.0
    %3569 = vmatprep.subr.mxu0 0.0
    %3570 = vmatpush1.msra.mxu0 0.0
    %3571 = vmatprep.subr.mxu0 0.0
    %3572 = vmatpush1.msra.mxu0 0.0
    %3573 = vmatprep.subr.mxu0 0.0
    %3574 = vmatpush1.msra.mxu0 0.0
    %3575 = vmatprep.subr.mxu0 0.0
    %3576 = vmatpush1.msra.mxu0 0.0
    %3577 = vmatprep.subr.mxu0 0.0
    %3578 = vmatpush1.msra.mxu0 0.0
    %3579 = vmatprep.subr.mxu0 0.0
    %3580 = vmatpush1.msra.mxu0 0.0
    %3581 = vmatprep.subr.mxu0 0.0
    %3582 = vmatpush1.msra.mxu0 0.0
    %3583 = vmatprep.subr.mxu0 0.0
    %3584 = vmatpush1.msra.mxu0 0.0
    %3585 = vmatprep.subr.mxu0 0.0
    %3586 = vmatpush1.msra.mxu0 0.0
    %3587 = vmatprep.subr.mxu0 0.0
    %3588 = vmatpush1.msra.mxu0 0.0
    %3589 = vmatprep.subr.mxu0 0.0
    %3590 = vmatpush1.msra.mxu0 0.0
    %3591 = vmatprep.subr.mxu0 0.0
    %3592 = vmatpush1.msra.mxu0 0.0
    %3593 = vmatprep.mubr.f32.mxu0 0.0
    %v3594 = vand.u32 %v2545, 4294901760
    %3595 = vmatmul.mubr.f32.gmra.mrb[0].mxu0 %v3594
    %v3596 = vpop.f32.mrb[0].mxu0
    %v3597 = vadd.f32 %v3358, %v3596
    %v3598 = vpop.f32.mrb[0].mxu0
    %3599 = vmatprep.mubr.f32.mxu0 0.0
    %v3600 = vand.u32 %v2546, 4294901760
    %3601 = vmatmul.mubr.f32.gmra.mrb[0].mxu0 %v3600
    %v3602 = vpop.f32.mrb[0].mxu0
    %v3603 = vadd.f32 %v3366, %v3602
    %v3604 = vpop.f32.mrb[0].mxu0
    %3605 = vmatprep.mubr.f32.mxu0 0.0
    %v3606 = vand.u32 %v2547, 4294901760
    %3607 = vmatmul.mubr.f32.gmra.mrb[0].mxu0 %v3606
    %v3608 = vpop.f32.mrb[0].mxu0
    %v3609 = vadd.f32 %v3374, %v3608
    %v3610 = vpop.f32.mrb[0].mxu0
    %3611 = vmatprep.mubr.f32.mxu0 0.0
    %v3612 = vand.u32 %v2548, 4294901760
    %3613 = vmatmul.mubr.f32.gmra.mrb[0].mxu0 %v3612
    %v3614 = vpop.f32.mrb[0].mxu0
    %v3615 = vadd.f32 %v3382, %v3614
    %v3616 = vpop.f32.mrb[0].mxu0
    %3617 = vmatprep.mubr.f32.mxu0 0.0
    %v3618 = vand.u32 %v2549, 4294901760
    %3619 = vmatmul.mubr.f32.gmra.mrb[0].mxu0 %v3618
    %v3620 = vpop.f32.mrb[0].mxu0
    %v3621 = vadd.f32 %v3390, %v3620
    %v3622 = vpop.f32.mrb[0].mxu0
    %3623 = vmatprep.mubr.f32.mxu0 0.0
    %v3624 = vand.u32 %v2550, 4294901760
    %3625 = vmatmul.mubr.f32.gmra.mrb[0].mxu0 %v3624
    %v3626 = vpop.f32.mrb[0].mxu0
    %v3627 = vadd.f32 %v3398, %v3626
    %v3628 = vpop.f32.mrb[0].mxu0
    %3629 = vmatprep.mubr.f32.mxu0 0.0
    %v3630 = vand.u32 %v2551, 4294901760
    %3631 = vmatmul.mubr.f32.gmra.mrb[0].mxu0 %v3630
    %v3632 = vpop.f32.mrb[0].mxu0
    %v3633 = vadd.f32 %v3406, %v3632
    %v3634 = vpop.f32.mrb[0].mxu0
    %3635 = vmatprep.mubr.f32.mxu0 0.0
    %v3636 = vand.u32 %v2552, 4294901760
    %3637 = vmatmul.mubr.f32.gmra.mrb[0].mxu0 %v3636
    %v3638 = vpop.f32.mrb[0].mxu0
    %v3639 = vadd.f32 %v3414, %v3638
    %v3640 = vpop.f32.mrb[0].mxu0
    %3641 = vmatprep.mubr.f32.mxu0 0.0
    %v3642 = vand.u32 %v2553, 4294901760
    %3643 = vmatmul.mubr.f32.gmra.mrb[0].mxu0 %v3642
    %v3644 = vpop.f32.mrb[0].mxu0
    %v3645 = vadd.f32 %v3422, %v3644
    %v3646 = vpop.f32.mrb[0].mxu0
    %3647 = vmatprep.mubr.f32.mxu0 0.0
    %v3648 = vand.u32 %v2554, 4294901760
    %3649 = vmatmul.mubr.f32.gmra.mrb[0].mxu0 %v3648
    %v3650 = vpop.f32.mrb[0].mxu0
    %v3651 = vadd.f32 %v3430, %v3650
    %v3652 = vpop.f32.mrb[0].mxu0
    %3653 = vmatprep.mubr.f32.mxu0 0.0
    %v3654 = vand.u32 %v2555, 4294901760
    %3655 = vmatmul.mubr.f32.gmra.mrb[0].mxu0 %v3654
    %v3656 = vpop.f32.mrb[0].mxu0
    %v3657 = vadd.f32 %v3438, %v3656
    %v3658 = vpop.f32.mrb[0].mxu0
    %3659 = vmatprep.mubr.f32.mxu0 0.0
    %v3660 = vand.u32 %v2556, 4294901760
    %3661 = vmatmul.mubr.f32.gmra.mrb[0].mxu0 %v3660
    %v3662 = vpop.f32.mrb[0].mxu0
    %v3663 = vadd.f32 %v3446, %v3662
    %v3664 = vpop.f32.mrb[0].mxu0
    %3665 = vmatprep.mubr.f32.mxu0 0.0
    %v3666 = vand.u32 %v2557, 4294901760
    %3667 = vmatmul.mubr.f32.gmra.mrb[0].mxu0 %v3666
    %v3668 = vpop.f32.mrb[0].mxu0
    %v3669 = vadd.f32 %v3454, %v3668
    %v3670 = vpop.f32.mrb[0].mxu0
    %3671 = vmatprep.mubr.f32.mxu0 0.0
    %v3672 = vand.u32 %v2558, 4294901760
    %3673 = vmatmul.mubr.f32.gmra.mrb[0].mxu0 %v3672
    %v3674 = vpop.f32.mrb[0].mxu0
    %v3675 = vadd.f32 %v3462, %v3674
    %v3676 = vpop.f32.mrb[0].mxu0
    %3677 = vmatprep.mubr.f32.mxu0 0.0
    %v3678 = vand.u32 %v2559, 4294901760
    %3679 = vmatmul.mubr.f32.gmra.mrb[0].mxu0 %v3678
    %v3680 = vpop.f32.mrb[0].mxu0
    %v3681 = vadd.f32 %v3470, %v3680
    %v3682 = vpop.f32.mrb[0].mxu0
    %3683 = vmatprep.mubr.f32.mxu0 0.0
    %v3684 = vand.u32 %v2560, 4294901760
    %3685 = vmatmul.mubr.f32.gmra.mrb[0].mxu0 %v3684
    %v3686 = vpop.f32.mrb[0].mxu0
    %v3687 = vadd.f32 %v3478, %v3686
    %v3688 = vpop.f32.mrb[0].mxu0
    %3689 = vdwg.mxu0
    %3690 = vmatprep.subr.mxu0 0.0
    %v3691 = vand.u32 %v2561, 4294901760
    %3692 = vmatpush1.msra.mxu0 %v3691
    %3693 = vmatprep.subr.mxu0 0.0
    %v3694 = vand.u32 %v2562, 4294901760
    %3695 = vmatpush1.msra.mxu0 %v3694
    %3696 = vmatprep.subr.mxu0 0.0
    %v3697 = vand.u32 %v2563, 4294901760
    %3698 = vmatpush1.msra.mxu0 %v3697
    %3699 = vmatprep.subr.mxu0 0.0
    %v3700 = vand.u32 %v2564, 4294901760
    %3701 = vmatpush1.msra.mxu0 %v3700
    %3702 = vmatprep.subr.mxu0 0.0
    %v3703 = vand.u32 %v2565, 4294901760
    %3704 = vmatpush1.msra.mxu0 %v3703
    %3705 = vmatprep.subr.mxu0 0.0
    %v3706 = vand.u32 %v2566, 4294901760
    %3707 = vmatpush1.msra.mxu0 %v3706
    %3708 = vmatprep.subr.mxu0 0.0
    %v3709 = vand.u32 %v2567, 4294901760
    %3710 = vmatpush1.msra.mxu0 %v3709
    %3711 = vmatprep.subr.mxu0 0.0
    %v3712 = vand.u32 %v2568, 4294901760
    %3713 = vmatpush1.msra.mxu0 %v3712
    %3714 = vmatprep.subr.mxu0 0.0
    %v3715 = vand.u32 %v2569, 4294901760
    %3716 = vmatpush1.msra.mxu0 %v3715
    %3717 = vmatprep.subr.mxu0 0.0
    %v3718 = vand.u32 %v2570, 4294901760
    %3719 = vmatpush1.msra.mxu0 %v3718
    %3720 = vmatprep.subr.mxu0 0.0
    %v3721 = vand.u32 %v2571, 4294901760
    %3722 = vmatpush1.msra.mxu0 %v3721
    %3723 = vmatprep.subr.mxu0 0.0
    %v3724 = vand.u32 %v2572, 4294901760
    %3725 = vmatpush1.msra.mxu0 %v3724
    %3726 = vmatprep.subr.mxu0 0.0
    %v3727 = vand.u32 %v2573, 4294901760
    %3728 = vmatpush1.msra.mxu0 %v3727
    %3729 = vmatprep.subr.mxu0 0.0
    %v3730 = vand.u32 %v2574, 4294901760
    %3731 = vmatpush1.msra.mxu0 %v3730
    %3732 = vmatprep.subr.mxu0 0.0
    %v3733 = vand.u32 %v2575, 4294901760
    %3734 = vmatpush1.msra.mxu0 %v3733
    %3735 = vmatprep.subr.mxu0 0.0
    %v3736 = vand.u32 %v2576, 4294901760
    %3737 = vmatpush1.msra.mxu0 %v3736
    %3738 = vmatprep.subr.mxu0 0.0
    %3739 = vmatpush1.msra.mxu0 0.0
    %3740 = vmatprep.subr.mxu0 0.0
    %3741 = vmatpush1.msra.mxu0 0.0
    %3742 = vmatprep.subr.mxu0 0.0
    %3743 = vmatpush1.msra.mxu0 0.0
    %3744 = vmatprep.subr.mxu0 0.0
    %3745 = vmatpush1.msra.mxu0 0.0
    %3746 = vmatprep.subr.mxu0 0.0
    %3747 = vmatpush1.msra.mxu0 0.0
    %3748 = vmatprep.subr.mxu0 0.0
    %3749 = vmatpush1.msra.mxu0 0.0
    %3750 = vmatprep.subr.mxu0 0.0
    %3751 = vmatpush1.msra.mxu0 0.0
    %3752 = vmatprep.subr.mxu0 0.0
    %3753 = vmatpush1.msra.mxu0 0.0
    %3754 = vmatprep.subr.mxu0 0.0
    %3755 = vmatpush1.msra.mxu0 0.0
    %3756 = vmatprep.subr.mxu0 0.0
    %3757 = vmatpush1.msra.mxu0 0.0
    %3758 = vmatprep.subr.mxu0 0.0
    %3759 = vmatpush1.msra.mxu0 0.0
    %3760 = vmatprep.subr.mxu0 0.0
    %3761 = vmatpush1.msra.mxu0 0.0
    %3762 = vmatprep.subr.mxu0 0.0
    %3763 = vmatpush1.msra.mxu0 0.0
    %3764 = vmatprep.subr.mxu0 0.0
    %3765 = vmatpush1.msra.mxu0 0.0
    %3766 = vmatprep.subr.mxu0 0.0
    %3767 = vmatpush1.msra.mxu0 0.0
    %3768 = vmatprep.subr.mxu0 0.0
    %3769 = vmatpush1.msra.mxu0 0.0
    %3770 = vmatprep.mubr.f32.mxu0 0.0
    %v3771 = vand.u32 %v2545, 4294901760
    %3772 = vmatmul.mubr.f32.gmra.mrb[0].mxu0 %v3771
    %v3773 = vpop.f32.mrb[0].mxu0
    %v3774 = vadd.f32 %v3597, %v3773
    %v3775 = vpop.f32.mrb[0].mxu0
    %3776 = vmatprep.mubr.f32.mxu0 0.0
    %v3777 = vand.u32 %v2546, 4294901760
    %3778 = vmatmul.mubr.f32.gmra.mrb[0].mxu0 %v3777
    %v3779 = vpop.f32.mrb[0].mxu0
    %v3780 = vadd.f32 %v3603, %v3779
    %v3781 = vpop.f32.mrb[0].mxu0
    %3782 = vmatprep.mubr.f32.mxu0 0.0
    %v3783 = vand.u32 %v2547, 4294901760
    %3784 = vmatmul.mubr.f32.gmra.mrb[0].mxu0 %v3783
    %v3785 = vpop.f32.mrb[0].mxu0
    %v3786 = vadd.f32 %v3609, %v3785
    %v3787 = vpop.f32.mrb[0].mxu0
    %3788 = vmatprep.mubr.f32.mxu0 0.0
    %v3789 = vand.u32 %v2548, 4294901760
    %3790 = vmatmul.mubr.f32.gmra.mrb[0].mxu0 %v3789
    %v3791 = vpop.f32.mrb[0].mxu0
    %v3792 = vadd.f32 %v3615, %v3791
    %v3793 = vpop.f32.mrb[0].mxu0
    %3794 = vmatprep.mubr.f32.mxu0 0.0
    %v3795 = vand.u32 %v2549, 4294901760
    %3796 = vmatmul.mubr.f32.gmra.mrb[0].mxu0 %v3795
    %v3797 = vpop.f32.mrb[0].mxu0
    %v3798 = vadd.f32 %v3621, %v3797
    %v3799 = vpop.f32.mrb[0].mxu0
    %3800 = vmatprep.mubr.f32.mxu0 0.0
    %v3801 = vand.u32 %v2550, 4294901760
    %3802 = vmatmul.mubr.f32.gmra.mrb[0].mxu0 %v3801
    %v3803 = vpop.f32.mrb[0].mxu0
    %v3804 = vadd.f32 %v3627, %v3803
    %v3805 = vpop.f32.mrb[0].mxu0
    %3806 = vmatprep.mubr.f32.mxu0 0.0
    %v3807 = vand.u32 %v2551, 4294901760
    %3808 = vmatmul.mubr.f32.gmra.mrb[0].mxu0 %v3807
    %v3809 = vpop.f32.mrb[0].mxu0
    %v3810 = vadd.f32 %v3633, %v3809
    %v3811 = vpop.f32.mrb[0].mxu0
    %3812 = vmatprep.mubr.f32.mxu0 0.0
    %v3813 = vand.u32 %v2552, 4294901760
    %3814 = vmatmul.mubr.f32.gmra.mrb[0].mxu0 %v3813
    %v3815 = vpop.f32.mrb[0].mxu0
    %v3816 = vadd.f32 %v3639, %v3815
    %v3817 = vpop.f32.mrb[0].mxu0
    %3818 = vmatprep.mubr.f32.mxu0 0.0
    %v3819 = vand.u32 %v2553, 4294901760
    %3820 = vmatmul.mubr.f32.gmra.mrb[0].mxu0 %v3819
    %v3821 = vpop.f32.mrb[0].mxu0
    %v3822 = vadd.f32 %v3645, %v3821
    %v3823 = vpop.f32.mrb[0].mxu0
    %3824 = vmatprep.mubr.f32.mxu0 0.0
    %v3825 = vand.u32 %v2554, 4294901760
    %3826 = vmatmul.mubr.f32.gmra.mrb[0].mxu0 %v3825
    %v3827 = vpop.f32.mrb[0].mxu0
    %v3828 = vadd.f32 %v3651, %v3827
    %v3829 = vpop.f32.mrb[0].mxu0
    %3830 = vmatprep.mubr.f32.mxu0 0.0
    %v3831 = vand.u32 %v2555, 4294901760
    %3832 = vmatmul.mubr.f32.gmra.mrb[0].mxu0 %v3831
    %v3833 = vpop.f32.mrb[0].mxu0
    %v3834 = vadd.f32 %v3657, %v3833
    %v3835 = vpop.f32.mrb[0].mxu0
    %3836 = vmatprep.mubr.f32.mxu0 0.0
    %v3837 = vand.u32 %v2556, 4294901760
    %3838 = vmatmul.mubr.f32.gmra.mrb[0].mxu0 %v3837
    %v3839 = vpop.f32.mrb[0].mxu0
    %v3840 = vadd.f32 %v3663, %v3839
    %v3841 = vpop.f32.mrb[0].mxu0
    %3842 = vmatprep.mubr.f32.mxu0 0.0
    %v3843 = vand.u32 %v2557, 4294901760
    %3844 = vmatmul.mubr.f32.gmra.mrb[0].mxu0 %v3843
    %v3845 = vpop.f32.mrb[0].mxu0
    %v3846 = vadd.f32 %v3669, %v3845
    %v3847 = vpop.f32.mrb[0].mxu0
    %3848 = vmatprep.mubr.f32.mxu0 0.0
    %v3849 = vand.u32 %v2558, 4294901760
    %3850 = vmatmul.mubr.f32.gmra.mrb[0].mxu0 %v3849
    %v3851 = vpop.f32.mrb[0].mxu0
    %v3852 = vadd.f32 %v3675, %v3851
    %v3853 = vpop.f32.mrb[0].mxu0
    %3854 = vmatprep.mubr.f32.mxu0 0.0
    %v3855 = vand.u32 %v2559, 4294901760
    %3856 = vmatmul.mubr.f32.gmra.mrb[0].mxu0 %v3855
    %v3857 = vpop.f32.mrb[0].mxu0
    %v3858 = vadd.f32 %v3681, %v3857
    %v3859 = vpop.f32.mrb[0].mxu0
    %3860 = vmatprep.mubr.f32.mxu0 0.0
    %v3861 = vand.u32 %v2560, 4294901760
    %3862 = vmatmul.mubr.f32.gmra.mrb[0].mxu0 %v3861
    %v3863 = vpop.f32.mrb[0].mxu0
    %v3864 = vadd.f32 %v3687, %v3863
    %v3865 = vpop.f32.mrb[0].mxu0
    %3866 = vdwg.mxu0
    %3867 = vst [vmem:[#allocation5] sm:$0xff] %v3774
    %3868 = vst [vmem:[#allocation5 + $0x8] sm:$0xff] %v3780
    %3869 = vst [vmem:[#allocation5 + $0x10] sm:$0xff] %v3786
    %3870 = vst [vmem:[#allocation5 + $0x18] sm:$0xff] %v3792
    %3871 = vst [vmem:[#allocation5 + $0x20] sm:$0xff] %v3798
    %3872 = vst [vmem:[#allocation5 + $0x28] sm:$0xff] %v3804
    %3873 = vst [vmem:[#allocation5 + $0x30] sm:$0xff] %v3810
    %3874 = vst [vmem:[#allocation5 + $0x38] sm:$0xff] %v3816
    %3875 = vst [vmem:[#allocation5 + $0x40] sm:$0xff] %v3822
    %3876 = vst [vmem:[#allocation5 + $0x48] sm:$0xff] %v3828
    %3877 = vst [vmem:[#allocation5 + $0x50] sm:$0xff] %v3834
    %3878 = vst [vmem:[#allocation5 + $0x58] sm:$0xff] %v3840
    %3879 = vst [vmem:[#allocation5 + $0x60] sm:$0xff] %v3846
    %3880 = vst [vmem:[#allocation5 + $0x68] sm:$0xff] %v3852
    %3881 = vst [vmem:[#allocation5 + $0x70] sm:$0xff] %v3858
    %3882 = vst [vmem:[#allocation5 + $0x78] sm:$0xff] %v3864
    // Predicated region
    $region26: #{_mlp_rows_padded.1} parent=1 // pred_check
      _
    $region27: #{_mlp_rows_padded.1} parent=1 // pred_check_branch
      %3884 = sbr.rel (0) target = $region29
    $region28: #{_mlp_rows_padded.1} parent=1 // pred_region
      %s3886 = ssub.s32 2048, 2048
      %3887 = vsyncadd [#allocation4], %s3886
      %s3888 = sshll.u32 [#allocation5], 4
      %s3889 = int_to_ptr.vmem [resolvable:$true] %s3888
      %3894 = dma.vmem_to_hbm [thread:$0]  %s3889, 2048, %s5, [#allocation4], 128, 128, 8
    $region29: #{_mlp_rows_padded.1} parent=1 // pred_fallthru
      _
    // Predicated region
    $region30: #{_mlp_rows_padded.1} parent=1 // pred_check
      _
    $region31: #{_mlp_rows_padded.1} parent=1 // pred_check_branch
      %3896 = sbr.rel (0) target = $region33
    $region32: #{_mlp_rows_padded.1} parent=1 // pred_region
      %3897 = dma.done [#allocation4], 2048
    $region33: #{_mlp_rows_padded.1} parent=1 // pred_fallthru
      _
    %3898 = vsyncpa [#allocation3], 1
    %3899 = vsyncpa [#allocation4], 1

</llo_original>
